<compile_context>
chip_gen: v7x
topology: tpu7x:2x2x1
jax: 0.10.0
libtpu: 0.0.40
codegen_flags: <defaults>
</compile_context>

<pallas_src>
import functools

import jax
import jax.numpy as jnp
from jax.experimental import pallas as pl
from jax.experimental.pallas import tpu as pltpu


# ---------------------------------------------------------------------------
# Fused Pallas kernel: the entire forward pass for one image per grid step.
# All tensors are channel-major: (channels, flattened padded spatial).
# ---------------------------------------------------------------------------
def _fused_forward_kernel(x_ref,                        # (1, C, Lext) flat padded input
                          enc_w_ref, enc_b_ref,         # (9, ENC, C), (ENC, 1)
                          dec_we_ref, dec_wx_ref, dec_b_ref,  # stacked ab+bridge decoders
                          head_w_ref, head_b_ref,       # W_0 + fac + decoder_0_c folded
                          out_ref,                      # (1, OUT, Lc)
                          *maybe_bridge_ref,            # optional (1, IDIM, Lc)
                          H, W, idim):
  Wp = W + 2
  Lc = H * Wp                        # padded rows 1..H, all Wp columns
  enc_ch = enc_w_ref.shape[1]

  def tap(dh, dw):
    # Shifted view of the padded image for conv tap (dh, dw): static lane-dim
    # slice of the flattened input; no HBM traffic, no im2col.
    off = dh * Wp + dw
    return x_ref[0, :, off:off + Lc]                           # (C, Lc)

  # ---- encoder: 3x3 conv (stride 1, pad 1) as 9 shifted matmuls + ReLU ----
  acc = jnp.zeros((enc_ch, Lc), jnp.float32)
  for t in range(9):
    acc = acc + jnp.dot(enc_w_ref[t], tap(t // 3, t % 3),
                        preferred_element_type=jnp.float32)
  feat_en = jnp.maximum(acc + enc_b_ref[...], 0.0)             # (ENC, Lc)

  # ---- merger (FusionBlock) + both ab decoders in one stacked matmul ------
  # concat(feat_en, x) is folded into split weights; ab / ab_bridge are
  # stacked on the output-channel axis: y = [src_0 ; bridge_0].
  x_c = tap(1, 1)                                              # (C, Lc) center pixels
  y = jnp.maximum(
      jnp.dot(dec_we_ref[...], feat_en, preferred_element_type=jnp.float32)
      + jnp.dot(dec_wx_ref[...], x_c, preferred_element_type=jnp.float32)
      + dec_b_ref[...], 0.0)                                   # (2*IDIM, Lc)

  # ---- W_0 residual (+fac) and decoder_0_c head, pre-folded into head_w ---
  out = (jnp.dot(head_w_ref[...], y, preferred_element_type=jnp.float32)
         + head_b_ref[...])                                    # (OUT, Lc)
  out_ref[0] = out.astype(out_ref.dtype)

  if maybe_bridge_ref:                                         # encode_feat=True
    bridge_ref, = maybe_bridge_ref
    bridge_ref[0] = y[idim:].astype(bridge_ref.dtype)          # bridge_0


def _full_spec(shape):
  """Weight stays whole / resident across the grid (constant index map)."""
  return pl.BlockSpec(shape, lambda n: (0,) * len(shape))


# ---------------------------------------------------------------------------
# Wrapper: padding / flattening, tiny weight folds, pallas_call, un-flatten.
# ---------------------------------------------------------------------------
@functools.partial(jax.jit, static_argnames=("encode_feat", "fac"))
def bridged_inverse_net_v4_forward(folded, x_nchw, encode_feat=False, fac=1.0):
  n, c, h, w = x_nchw.shape
  hp, wp = h + 2, w + 2
  lc = h * wp
  lext = hp * wp + 2
  out_c = folded["c_w"].shape[0]
  idim = folded["w0_w"].shape[0]
  hi = jax.lax.Precision.HIGHEST

  # Spatial zero-pad for the 3x3 conv, flatten (H, W) onto the lane axis, and
  # add one extra element at each end so every conv-tap slice is in bounds.
  xf = jnp.pad(x_nchw.astype(jnp.float32),
               ((0, 0), (0, 0), (1, 1), (1, 1))).reshape(n, c, hp * wp)
  xf = jnp.pad(xf, ((0, 0), (0, 0), (1, 1)))                   # (N, C, Lext)

  # Fold W_0 + fac + decoder_0_c into one (OUT, 2*IDIM) head (tiny matrices):
  #   out = c_w @ src_0 + fac * (c_w @ w0_w) @ bridge_0 + (c_b + fac*c_w@w0_b)
  head_w = jnp.concatenate(
      [folded["c_w"],
       fac * jnp.dot(folded["c_w"], folded["w0_w"], precision=hi)], axis=1)
  head_b = folded["c_b"] + fac * jnp.dot(folded["c_w"], folded["w0_b"],
                                         precision=hi)

  weights = [folded["enc_w"], folded["enc_b"],
             folded["dec_we"], folded["dec_wx"], folded["dec_b"],
             head_w, head_b]

  out_shapes = [jax.ShapeDtypeStruct((n, out_c, lc), jnp.float32)]
  out_specs = [pl.BlockSpec((1, out_c, lc), lambda i: (i, 0, 0))]
  if encode_feat:
    out_shapes.append(jax.ShapeDtypeStruct((n, idim, lc), jnp.float32))
    out_specs.append(pl.BlockSpec((1, idim, lc), lambda i: (i, 0, 0)))

  res = pl.pallas_call(
      functools.partial(_fused_forward_kernel, H=h, W=w, idim=idim),
      out_shape=out_shapes,
      grid_spec=pltpu.PrefetchScalarGridSpec(
          num_scalar_prefetch=0,
          grid=(n,),
          in_specs=[pl.BlockSpec((1, c, lext), lambda i: (i, 0, 0))]
                   + [_full_spec(wgt.shape) for wgt in weights],
          out_specs=out_specs),
      compiler_params=pltpu.CompilerParams(
          dimension_semantics=("parallel",)),
  )(xf, *weights)

  # Lane-dense kernel output -> NCHW: pure reshape + crop of the W halo cols.
  out = res[0].reshape(n, out_c, h, wp)[:, :, :, 1:w + 1]
  ret = [out]
  if encode_feat:
    bridge = res[1].reshape(n, idim, h, wp)[:, :, :, 1:w + 1]
    return ret, [bridge]
  return ret


# ---------------------------------------------------------------------------
# Parameters: raw (PyTorch-layout) init + bias/BN folding for the kernel.
# ---------------------------------------------------------------------------
def init_params(key, in_ch=3, enc_ch=32, inter_dim=16, out_ch=1):
  """Raw, unfolded parameters for the stand-in architecture."""
  ks = jax.random.split(key, 12)

  def conv_w(k, cout, cin, ksz=1):
    fan_in = cin * ksz * ksz
    shape = (cout, cin, ksz, ksz) if ksz > 1 else (cout, cin)
    return jax.random.normal(k, shape, jnp.float32) / jnp.sqrt(fan_in)

  def bn(k, ch):
    kg, kb, km, kv = jax.random.split(k, 4)
    # NOTE: PyTorch zero-initialises W_0's BatchNorm weight/bias (so the
    # residual branch starts as a no-op).  We use non-trivial eval-mode BN
    # parameters here so the W_0 path is exercised numerically in the test.
    return dict(gamma=1.0 + 0.1 * jax.random.normal(kg, (ch,), jnp.float32),
                beta=0.1 * jax.random.normal(kb, (ch,), jnp.float32),
                mean=0.1 * jax.random.normal(km, (ch,), jnp.float32),
                var=1.0 + 0.5 * jax.random.uniform(kv, (ch,), jnp.float32))

  merged = enc_ch + in_ch            # FusionBlock: concat(feat_en, x) channels
  return {
      "enc_w": conv_w(ks[0], enc_ch, in_ch, 3),        # (ENC, C, 3, 3)
      "enc_b": 0.1 * jax.random.normal(ks[1], (enc_ch,), jnp.float32),
      "ab_w": conv_w(ks[2], inter_dim, merged),        # 1x1 conv (ID, ENC+C)
      "ab_b": 0.1 * jax.random.normal(ks[3], (inter_dim,), jnp.float32),
      "ab_bn": bn(ks[4], inter_dim),
      "abbr_w": conv_w(ks[5], inter_dim, merged),
      "abbr_b": 0.1 * jax.random.normal(ks[6], (inter_dim,), jnp.float32),
      "abbr_bn": bn(ks[7], inter_dim),
      "w0_w": conv_w(ks[8], inter_dim, inter_dim),
      "w0_b": 0.1 * jax.random.normal(ks[9], (inter_dim,), jnp.float32),
      "w0_bn": bn(ks[10], inter_dim),
      "c_w": conv_w(ks[11], out_ch, inter_dim),
      "c_b": jnp.zeros((out_ch,), jnp.float32),
  }


def _fold_conv_bn(w, b, bnp, eps=1e-5):
  s = bnp["gamma"] / jnp.sqrt(bnp["var"] + eps)
  return w * s[:, None], ((b - bnp["mean"]) * s + bnp["beta"])[:, None]


def fold_params(p, in_ch=3, enc_ch=32):
  """Fold bias + eval-mode BN; split merged weights; stack the two decoders."""
  ab_w, ab_b = _fold_conv_bn(p["ab_w"], p["ab_b"], p["ab_bn"])
  br_w, br_b = _fold_conv_bn(p["abbr_w"], p["abbr_b"], p["abbr_bn"])
  w0_w, w0_b = _fold_conv_bn(p["w0_w"], p["w0_b"], p["w0_bn"])
  return {
      # (ENC, C, 3, 3) -> one (ENC, C) matrix per conv tap, tap-major.
      "enc_w": jnp.transpose(p["enc_w"], (2, 3, 0, 1)).reshape(9, enc_ch, in_ch),
      "enc_b": p["enc_b"][:, None],
      # Stacked ab / ab_bridge decoders, split so concat(feat_en, x) never
      # has to exist in HBM or VMEM.  Row order: [src_0 ; bridge_0].
      "dec_we": jnp.concatenate([ab_w[:, :enc_ch], br_w[:, :enc_ch]], axis=0),
      "dec_wx": jnp.concatenate([ab_w[:, enc_ch:], br_w[:, enc_ch:]], axis=0),
      "dec_b": jnp.concatenate([ab_b, br_b], axis=0),
      "w0_w": w0_w, "w0_b": w0_b,
      "c_w": p["c_w"], "c_b": p["c_b"][:, None],
  }


# ---------------------------------------------------------------------------
# Plain-JAX reference of the PyTorch forward (eval mode), for validation.
# ---------------------------------------------------------------------------
def reference_forward(p, x, encode_feat=False, fac=1.0, eps=1e-5):
  n, c, h, w = x.shape
  hi = jax.lax.Precision.HIGHEST
  xp = jnp.pad(x, ((0, 0), (0, 0), (1, 1), (1, 1)))
  feat = jnp.zeros((n, p["enc_w"].shape[0], h, w), jnp.float32)
  for kh in range(3):
    for kw in range(3):
      feat = feat + jnp.einsum("oc,nchw->nohw", p["enc_w"][:, :, kh, kw],
                               xp[:, :, kh:kh + h, kw:kw + w], precision=hi)
  feat = jax.nn.relu(feat + p["enc_b"][None, :, None, None])
  merg = jnp.concatenate([feat, x], axis=1)

  def conv1x1(z, wgt, b):
    return (jnp.einsum("oc,nchw->nohw", wgt, z, precision=hi)
            + b[None, :, None, None])

  def bn(z, bnp):
    s = bnp["gamma"] / jnp.sqrt(bnp["var"] + eps)
    return ((z - bnp["mean"][None, :, None, None]) * s[None, :, None, None]
            + bnp["beta"][None, :, None, None])

  src_0 = jax.nn.relu(bn(conv1x1(merg, p["ab_w"], p["ab_b"]), p["ab_bn"]))
  bridge_0 = jax.nn.relu(bn(conv1x1(merg, p["abbr_w"], p["abbr_b"]),
                            p["abbr_bn"]))
  resid = src_0 + fac * bn(conv1x1(bridge_0, p["w0_w"], p["w0_b"]), p["w0_bn"])
  ret = [conv1x1(resid, p["c_w"], p["c_b"])]
  if encode_feat:
    return ret, [bridge_0]
  return ret


if __name__ == "__main__":
  key = jax.random.PRNGKey(0)
  pkey, xkey = jax.random.split(key)
  raw = init_params(pkey, in_ch=3, enc_ch=32, inter_dim=16, out_ch=1)
  folded = fold_params(raw, in_ch=3, enc_ch=32)
  x = jax.random.normal(xkey, (2, 3, 16, 16), jnp.float32)   # NCHW, like PyTorch

  # encode_feat=True path (returns (ret, feats), both NCHW)
  ret, feats = bridged_inverse_net_v4_forward(folded, x, encode_feat=True,
                                              fac=1.0)
  out = jax.block_until_ready(ret[0])
  bridge = jax.block_until_ready(feats[0])
  assert out.shape == (2, 1, 16, 16)
  assert bridge.shape == (2, 16, 16, 16)

  # encode_feat=False path with a non-default fac
  (out_nf,) = bridged_inverse_net_v4_forward(folded, x, encode_feat=False,
                                             fac=0.5)
  out_nf = jax.block_until_ready(out_nf)

  # numerical validation against the plain-JAX reference forward
  ref_ret, ref_feats = reference_forward(raw, x, encode_feat=True, fac=1.0)
  assert jnp.allclose(out, ref_ret[0], rtol=3e-2, atol=3e-2), \
      float(jnp.max(jnp.abs(out - ref_ret[0])))
  assert jnp.allclose(bridge, ref_feats[0], rtol=3e-2, atol=3e-2), \
      float(jnp.max(jnp.abs(bridge - ref_feats[0])))
  (ref_nf,) = reference_forward(raw, x, encode_feat=False, fac=0.5)
  assert jnp.allclose(out_nf, ref_nf, rtol=3e-2, atol=3e-2)

  print("KERNEL_OK")
</pallas_src>

<mosaic_0001>
module attributes {stable_mosaic.version = 11 : i64} {
  func.func @_fused_forward_kernel(%arg0: i32, %arg1: memref<1x3x326xf32, #tpu.memory_space<vmem>>, %arg2: memref<9x32x3xf32, #tpu.memory_space<vmem>>, %arg3: memref<32x1xf32, #tpu.memory_space<vmem>>, %arg4: memref<32x32xf32, #tpu.memory_space<vmem>>, %arg5: memref<32x3xf32, #tpu.memory_space<vmem>>, %arg6: memref<32x1xf32, #tpu.memory_space<vmem>>, %arg7: memref<1x32xf32, #tpu.memory_space<vmem>>, %arg8: memref<1x1xf32, #tpu.memory_space<vmem>>, %arg9: memref<1x1x288xf32, #tpu.memory_space<vmem>>, %arg10: memref<1x16x288xf32, #tpu.memory_space<vmem>>) attributes {dimension_semantics = [#tpu.dimension_semantics<parallel>], iteration_bounds = array<i64: 2>, scalar_prefetch = 0 : i64, scratch_operands = 0 : i64, tpu.core_type = #tpu.core_type<tc>, window_params = [{transform_indices = @transform_0, window_bounds = array<i64: 1, 3, 326>}, {pipeline_mode = #tpu.pipeline_mode<synchronous>, transform_indices = @transform_1, window_bounds = array<i64: 9, 32, 3>}, {pipeline_mode = #tpu.pipeline_mode<synchronous>, transform_indices = @transform_2, window_bounds = array<i64: 32, 1>}, {pipeline_mode = #tpu.pipeline_mode<synchronous>, transform_indices = @transform_3, window_bounds = array<i64: 32, 32>}, {pipeline_mode = #tpu.pipeline_mode<synchronous>, transform_indices = @transform_4, window_bounds = array<i64: 32, 3>}, {pipeline_mode = #tpu.pipeline_mode<synchronous>, transform_indices = @transform_5, window_bounds = array<i64: 32, 1>}, {pipeline_mode = #tpu.pipeline_mode<synchronous>, transform_indices = @transform_6, window_bounds = array<i64: 1, 32>}, {pipeline_mode = #tpu.pipeline_mode<synchronous>, transform_indices = @transform_7, window_bounds = array<i64: 1, 1>}, {transform_indices = @transform_8, window_bounds = array<i64: 1, 1, 288>}, {transform_indices = @transform_9, window_bounds = array<i64: 1, 16, 288>}]} {
    %cst = arith.constant 0.000000e+00 : f32
    %0 = vector.broadcast %cst : f32 to vector<32x288xf32>
    %c0 = arith.constant 0 : index
    %c0_0 = arith.constant 0 : index
    %c0_1 = arith.constant 0 : index
    %1 = vector.load %arg2[%c0, %c0_0, %c0_1] : memref<9x32x3xf32, #tpu.memory_space<vmem>>, vector<1x32x3xf32>
    %2 = vector.shape_cast %1 : vector<1x32x3xf32> to vector<32x3xf32>
    %c0_2 = arith.constant 0 : index
    %c0_3 = arith.constant 0 : index
    %c0_4 = arith.constant 0 : index
    %3 = vector.load %arg1[%c0_2, %c0_3, %c0_4] : memref<1x3x326xf32, #tpu.memory_space<vmem>>, vector<1x3x288xf32>
    %4 = vector.shape_cast %3 : vector<1x3x288xf32> to vector<3x288xf32>
    %cst_5 = arith.constant dense<0.000000e+00> : vector<32x288xf32>
    %5 = tpu.matmul %2, %4, %cst_5 {dimension_numbers = #tpu.dot_dimension_numbers<[1], [0], [0], [1], [0, 0, 1, 1], [], []>} : vector<32x3xf32>, vector<3x288xf32>, vector<32x288xf32> -> vector<32x288xf32>
    %6 = arith.addf %0, %5 : vector<32x288xf32>
    %c1 = arith.constant 1 : index
    %c0_6 = arith.constant 0 : index
    %c0_7 = arith.constant 0 : index
    %7 = vector.load %arg2[%c1, %c0_6, %c0_7] : memref<9x32x3xf32, #tpu.memory_space<vmem>>, vector<1x32x3xf32>
    %8 = vector.shape_cast %7 : vector<1x32x3xf32> to vector<32x3xf32>
    %c0_8 = arith.constant 0 : index
    %c0_9 = arith.constant 0 : index
    %c1_10 = arith.constant 1 : index
    %9 = vector.load %arg1[%c0_8, %c0_9, %c1_10] : memref<1x3x326xf32, #tpu.memory_space<vmem>>, vector<1x3x288xf32>
    %10 = vector.shape_cast %9 : vector<1x3x288xf32> to vector<3x288xf32>
    %cst_11 = arith.constant dense<0.000000e+00> : vector<32x288xf32>
    %11 = tpu.matmul %8, %10, %cst_11 {dimension_numbers = #tpu.dot_dimension_numbers<[1], [0], [0], [1], [0, 0, 1, 1], [], []>} : vector<32x3xf32>, vector<3x288xf32>, vector<32x288xf32> -> vector<32x288xf32>
    %12 = arith.addf %6, %11 : vector<32x288xf32>
    %c2 = arith.constant 2 : index
    %c0_12 = arith.constant 0 : index
    %c0_13 = arith.constant 0 : index
    %13 = vector.load %arg2[%c2, %c0_12, %c0_13] : memref<9x32x3xf32, #tpu.memory_space<vmem>>, vector<1x32x3xf32>
    %14 = vector.shape_cast %13 : vector<1x32x3xf32> to vector<32x3xf32>
    %c0_14 = arith.constant 0 : index
    %c0_15 = arith.constant 0 : index
    %c2_16 = arith.constant 2 : index
    %15 = vector.load %arg1[%c0_14, %c0_15, %c2_16] : memref<1x3x326xf32, #tpu.memory_space<vmem>>, vector<1x3x288xf32>
    %16 = vector.shape_cast %15 : vector<1x3x288xf32> to vector<3x288xf32>
    %cst_17 = arith.constant dense<0.000000e+00> : vector<32x288xf32>
    %17 = tpu.matmul %14, %16, %cst_17 {dimension_numbers = #tpu.dot_dimension_numbers<[1], [0], [0], [1], [0, 0, 1, 1], [], []>} : vector<32x3xf32>, vector<3x288xf32>, vector<32x288xf32> -> vector<32x288xf32>
    %18 = arith.addf %12, %17 : vector<32x288xf32>
    %c3 = arith.constant 3 : index
    %c0_18 = arith.constant 0 : index
    %c0_19 = arith.constant 0 : index
    %19 = vector.load %arg2[%c3, %c0_18, %c0_19] : memref<9x32x3xf32, #tpu.memory_space<vmem>>, vector<1x32x3xf32>
    %20 = vector.shape_cast %19 : vector<1x32x3xf32> to vector<32x3xf32>
    %c0_20 = arith.constant 0 : index
    %c0_21 = arith.constant 0 : index
    %c18 = arith.constant 18 : index
    %21 = vector.load %arg1[%c0_20, %c0_21, %c18] : memref<1x3x326xf32, #tpu.memory_space<vmem>>, vector<1x3x288xf32>
    %22 = vector.shape_cast %21 : vector<1x3x288xf32> to vector<3x288xf32>
    %cst_22 = arith.constant dense<0.000000e+00> : vector<32x288xf32>
    %23 = tpu.matmul %20, %22, %cst_22 {dimension_numbers = #tpu.dot_dimension_numbers<[1], [0], [0], [1], [0, 0, 1, 1], [], []>} : vector<32x3xf32>, vector<3x288xf32>, vector<32x288xf32> -> vector<32x288xf32>
    %24 = arith.addf %18, %23 : vector<32x288xf32>
    %c4 = arith.constant 4 : index
    %c0_23 = arith.constant 0 : index
    %c0_24 = arith.constant 0 : index
    %25 = vector.load %arg2[%c4, %c0_23, %c0_24] : memref<9x32x3xf32, #tpu.memory_space<vmem>>, vector<1x32x3xf32>
    %26 = vector.shape_cast %25 : vector<1x32x3xf32> to vector<32x3xf32>
    %c0_25 = arith.constant 0 : index
    %c0_26 = arith.constant 0 : index
    %c19 = arith.constant 19 : index
    %27 = vector.load %arg1[%c0_25, %c0_26, %c19] : memref<1x3x326xf32, #tpu.memory_space<vmem>>, vector<1x3x288xf32>
    %28 = vector.shape_cast %27 : vector<1x3x288xf32> to vector<3x288xf32>
    %cst_27 = arith.constant dense<0.000000e+00> : vector<32x288xf32>
    %29 = tpu.matmul %26, %28, %cst_27 {dimension_numbers = #tpu.dot_dimension_numbers<[1], [0], [0], [1], [0, 0, 1, 1], [], []>} : vector<32x3xf32>, vector<3x288xf32>, vector<32x288xf32> -> vector<32x288xf32>
    %30 = arith.addf %24, %29 : vector<32x288xf32>
    %c5 = arith.constant 5 : index
    %c0_28 = arith.constant 0 : index
    %c0_29 = arith.constant 0 : index
    %31 = vector.load %arg2[%c5, %c0_28, %c0_29] : memref<9x32x3xf32, #tpu.memory_space<vmem>>, vector<1x32x3xf32>
    %32 = vector.shape_cast %31 : vector<1x32x3xf32> to vector<32x3xf32>
    %c0_30 = arith.constant 0 : index
    %c0_31 = arith.constant 0 : index
    %c20 = arith.constant 20 : index
    %33 = vector.load %arg1[%c0_30, %c0_31, %c20] : memref<1x3x326xf32, #tpu.memory_space<vmem>>, vector<1x3x288xf32>
    %34 = vector.shape_cast %33 : vector<1x3x288xf32> to vector<3x288xf32>
    %cst_32 = arith.constant dense<0.000000e+00> : vector<32x288xf32>
    %35 = tpu.matmul %32, %34, %cst_32 {dimension_numbers = #tpu.dot_dimension_numbers<[1], [0], [0], [1], [0, 0, 1, 1], [], []>} : vector<32x3xf32>, vector<3x288xf32>, vector<32x288xf32> -> vector<32x288xf32>
    %36 = arith.addf %30, %35 : vector<32x288xf32>
    %c6 = arith.constant 6 : index
    %c0_33 = arith.constant 0 : index
    %c0_34 = arith.constant 0 : index
    %37 = vector.load %arg2[%c6, %c0_33, %c0_34] : memref<9x32x3xf32, #tpu.memory_space<vmem>>, vector<1x32x3xf32>
    %38 = vector.shape_cast %37 : vector<1x32x3xf32> to vector<32x3xf32>
    %c0_35 = arith.constant 0 : index
    %c0_36 = arith.constant 0 : index
    %c36 = arith.constant 36 : index
    %39 = vector.load %arg1[%c0_35, %c0_36, %c36] : memref<1x3x326xf32, #tpu.memory_space<vmem>>, vector<1x3x288xf32>
    %40 = vector.shape_cast %39 : vector<1x3x288xf32> to vector<3x288xf32>
    %cst_37 = arith.constant dense<0.000000e+00> : vector<32x288xf32>
    %41 = tpu.matmul %38, %40, %cst_37 {dimension_numbers = #tpu.dot_dimension_numbers<[1], [0], [0], [1], [0, 0, 1, 1], [], []>} : vector<32x3xf32>, vector<3x288xf32>, vector<32x288xf32> -> vector<32x288xf32>
    %42 = arith.addf %36, %41 : vector<32x288xf32>
    %c7 = arith.constant 7 : index
    %c0_38 = arith.constant 0 : index
    %c0_39 = arith.constant 0 : index
    %43 = vector.load %arg2[%c7, %c0_38, %c0_39] : memref<9x32x3xf32, #tpu.memory_space<vmem>>, vector<1x32x3xf32>
    %44 = vector.shape_cast %43 : vector<1x32x3xf32> to vector<32x3xf32>
    %c0_40 = arith.constant 0 : index
    %c0_41 = arith.constant 0 : index
    %c37 = arith.constant 37 : index
    %45 = vector.load %arg1[%c0_40, %c0_41, %c37] : memref<1x3x326xf32, #tpu.memory_space<vmem>>, vector<1x3x288xf32>
    %46 = vector.shape_cast %45 : vector<1x3x288xf32> to vector<3x288xf32>
    %cst_42 = arith.constant dense<0.000000e+00> : vector<32x288xf32>
    %47 = tpu.matmul %44, %46, %cst_42 {dimension_numbers = #tpu.dot_dimension_numbers<[1], [0], [0], [1], [0, 0, 1, 1], [], []>} : vector<32x3xf32>, vector<3x288xf32>, vector<32x288xf32> -> vector<32x288xf32>
    %48 = arith.addf %42, %47 : vector<32x288xf32>
    %c8 = arith.constant 8 : index
    %c0_43 = arith.constant 0 : index
    %c0_44 = arith.constant 0 : index
    %49 = vector.load %arg2[%c8, %c0_43, %c0_44] : memref<9x32x3xf32, #tpu.memory_space<vmem>>, vector<1x32x3xf32>
    %50 = vector.shape_cast %49 : vector<1x32x3xf32> to vector<32x3xf32>
    %c0_45 = arith.constant 0 : index
    %c0_46 = arith.constant 0 : index
    %c38 = arith.constant 38 : index
    %51 = vector.load %arg1[%c0_45, %c0_46, %c38] : memref<1x3x326xf32, #tpu.memory_space<vmem>>, vector<1x3x288xf32>
    %52 = vector.shape_cast %51 : vector<1x3x288xf32> to vector<3x288xf32>
    %cst_47 = arith.constant dense<0.000000e+00> : vector<32x288xf32>
    %53 = tpu.matmul %50, %52, %cst_47 {dimension_numbers = #tpu.dot_dimension_numbers<[1], [0], [0], [1], [0, 0, 1, 1], [], []>} : vector<32x3xf32>, vector<3x288xf32>, vector<32x288xf32> -> vector<32x288xf32>
    %54 = arith.addf %48, %53 : vector<32x288xf32>
    %c0_48 = arith.constant 0 : index
    %c0_49 = arith.constant 0 : index
    %55 = vector.load %arg3[%c0_48, %c0_49] : memref<32x1xf32, #tpu.memory_space<vmem>>, vector<32x1xf32>
    %56 = vector.broadcast %55 : vector<32x1xf32> to vector<32x288xf32>
    %57 = arith.addf %54, %56 : vector<32x288xf32>
    %cst_50 = arith.constant 0.000000e+00 : f32
    %58 = vector.broadcast %cst_50 : f32 to vector<32x288xf32>
    %59 = arith.maximumf %57, %58 : vector<32x288xf32>
    %c0_51 = arith.constant 0 : index
    %c0_52 = arith.constant 0 : index
    %c19_53 = arith.constant 19 : index
    %60 = vector.load %arg1[%c0_51, %c0_52, %c19_53] : memref<1x3x326xf32, #tpu.memory_space<vmem>>, vector<1x3x288xf32>
    %61 = vector.shape_cast %60 : vector<1x3x288xf32> to vector<3x288xf32>
    %c0_54 = arith.constant 0 : index
    %c0_55 = arith.constant 0 : index
    %62 = vector.load %arg4[%c0_54, %c0_55] : memref<32x32xf32, #tpu.memory_space<vmem>>, vector<32x32xf32>
    %cst_56 = arith.constant dense<0.000000e+00> : vector<32x288xf32>
    %63 = tpu.matmul %62, %59, %cst_56 {dimension_numbers = #tpu.dot_dimension_numbers<[1], [0], [0], [1], [0, 0, 1, 1], [], []>} : vector<32x32xf32>, vector<32x288xf32>, vector<32x288xf32> -> vector<32x288xf32>
    %c0_57 = arith.constant 0 : index
    %c0_58 = arith.constant 0 : index
    %64 = vector.load %arg5[%c0_57, %c0_58] : memref<32x3xf32, #tpu.memory_space<vmem>>, vector<32x3xf32>
    %cst_59 = arith.constant dense<0.000000e+00> : vector<32x288xf32>
    %65 = tpu.matmul %64, %61, %cst_59 {dimension_numbers = #tpu.dot_dimension_numbers<[1], [0], [0], [1], [0, 0, 1, 1], [], []>} : vector<32x3xf32>, vector<3x288xf32>, vector<32x288xf32> -> vector<32x288xf32>
    %66 = arith.addf %63, %65 : vector<32x288xf32>
    %c0_60 = arith.constant 0 : index
    %c0_61 = arith.constant 0 : index
    %67 = vector.load %arg6[%c0_60, %c0_61] : memref<32x1xf32, #tpu.memory_space<vmem>>, vector<32x1xf32>
    %68 = vector.broadcast %67 : vector<32x1xf32> to vector<32x288xf32>
    %69 = arith.addf %66, %68 : vector<32x288xf32>
    %cst_62 = arith.constant 0.000000e+00 : f32
    %70 = vector.broadcast %cst_62 : f32 to vector<32x288xf32>
    %71 = arith.maximumf %69, %70 : vector<32x288xf32>
    %c0_63 = arith.constant 0 : index
    %c0_64 = arith.constant 0 : index
    %72 = vector.load %arg7[%c0_63, %c0_64] : memref<1x32xf32, #tpu.memory_space<vmem>>, vector<1x32xf32>
    %cst_65 = arith.constant dense<0.000000e+00> : vector<1x288xf32>
    %73 = tpu.matmul %72, %71, %cst_65 {dimension_numbers = #tpu.dot_dimension_numbers<[1], [0], [0], [1], [0, 0, 1, 1], [], []>} : vector<1x32xf32>, vector<32x288xf32>, vector<1x288xf32> -> vector<1x288xf32>
    %c0_66 = arith.constant 0 : index
    %c0_67 = arith.constant 0 : index
    %74 = vector.load %arg8[%c0_66, %c0_67] : memref<1x1xf32, #tpu.memory_space<vmem>>, vector<1x1xf32>
    %75 = vector.broadcast %74 : vector<1x1xf32> to vector<1x288xf32>
    %76 = arith.addf %73, %75 : vector<1x288xf32>
    %c0_68 = arith.constant 0 : index
    %c0_69 = arith.constant 0 : index
    %c0_70 = arith.constant 0 : index
    %77 = vector.load %arg9[%c0_68, %c0_69, %c0_70] : memref<1x1x288xf32, #tpu.memory_space<vmem>>, vector<1x1x288xf32>
    %78 = vector.shape_cast %77 : vector<1x1x288xf32> to vector<1x288xf32>
    %79 = vector.shape_cast %76 : vector<1x288xf32> to vector<1x1x288xf32>
    tpu.vector_store %arg9[%c0_68, %c0_69, %c0_70], %79 {strides = array<i32>} : memref<1x1x288xf32, #tpu.memory_space<vmem>>, vector<1x1x288xf32>,
    %80 = vector.extract_strided_slice %71 {offsets = [16, 0], sizes = [16, 288], strides = [1, 1]} : vector<32x288xf32> to vector<16x288xf32>
    %c0_71 = arith.constant 0 : index
    %c0_72 = arith.constant 0 : index
    %c0_73 = arith.constant 0 : index
    %81 = vector.load %arg10[%c0_71, %c0_72, %c0_73] : memref<1x16x288xf32, #tpu.memory_space<vmem>>, vector<1x16x288xf32>
    %82 = vector.shape_cast %81 : vector<1x16x288xf32> to vector<16x288xf32>
    %83 = vector.shape_cast %80 : vector<16x288xf32> to vector<1x16x288xf32>
    tpu.vector_store %arg10[%c0_71, %c0_72, %c0_73], %83 {strides = array<i32>} : memref<1x16x288xf32, #tpu.memory_space<vmem>>, vector<1x16x288xf32>,
    return
  }
  func.func @transform_0(%arg0: i32) -> (i32, i32, i32) {
    %c0_i32 = arith.constant 0 : i32
    %c0_i32_0 = arith.constant 0 : i32
    %c0_i32_1 = arith.constant 0 : i32
    return %arg0, %c0_i32, %c0_i32_0 : i32, i32, i32
  }
  func.func @transform_1(%arg0: i32) -> (i32, i32, i32) {
    %c0_i32 = arith.constant 0 : i32
    %c0_i32_0 = arith.constant 0 : i32
    %c0_i32_1 = arith.constant 0 : i32
    %c0_i32_2 = arith.constant 0 : i32
    return %c0_i32, %c0_i32_0, %c0_i32_1 : i32, i32, i32
  }
  func.func @transform_2(%arg0: i32) -> (i32, i32) {
    %c0_i32 = arith.constant 0 : i32
    %c0_i32_0 = arith.constant 0 : i32
    %c0_i32_1 = arith.constant 0 : i32
    return %c0_i32, %c0_i32_0 : i32, i32
  }
  func.func @transform_3(%arg0: i32) -> (i32, i32) {
    %c0_i32 = arith.constant 0 : i32
    %c0_i32_0 = arith.constant 0 : i32
    %c0_i32_1 = arith.constant 0 : i32
    return %c0_i32, %c0_i32_0 : i32, i32
  }
  func.func @transform_4(%arg0: i32) -> (i32, i32) {
    %c0_i32 = arith.constant 0 : i32
    %c0_i32_0 = arith.constant 0 : i32
    %c0_i32_1 = arith.constant 0 : i32
    return %c0_i32, %c0_i32_0 : i32, i32
  }
  func.func @transform_5(%arg0: i32) -> (i32, i32) {
    %c0_i32 = arith.constant 0 : i32
    %c0_i32_0 = arith.constant 0 : i32
    %c0_i32_1 = arith.constant 0 : i32
    return %c0_i32, %c0_i32_0 : i32, i32
  }
  func.func @transform_6(%arg0: i32) -> (i32, i32) {
    %c0_i32 = arith.constant 0 : i32
    %c0_i32_0 = arith.constant 0 : i32
    %c0_i32_1 = arith.constant 0 : i32
    return %c0_i32, %c0_i32_0 : i32, i32
  }
  func.func @transform_7(%arg0: i32) -> (i32, i32) {
    %c0_i32 = arith.constant 0 : i32
    %c0_i32_0 = arith.constant 0 : i32
    %c0_i32_1 = arith.constant 0 : i32
    return %c0_i32, %c0_i32_0 : i32, i32
  }
  func.func @transform_8(%arg0: i32) -> (i32, i32, i32) {
    %c0_i32 = arith.constant 0 : i32
    %c0_i32_0 = arith.constant 0 : i32
    %c0_i32_1 = arith.constant 0 : i32
    return %arg0, %c0_i32, %c0_i32_0 : i32, i32, i32
  }
  func.func @transform_9(%arg0: i32) -> (i32, i32, i32) {
    %c0_i32 = arith.constant 0 : i32
    %c0_i32_0 = arith.constant 0 : i32
    %c0_i32_1 = arith.constant 0 : i32
    return %arg0, %c0_i32, %c0_i32_0 : i32, i32, i32
  }
}

</mosaic_0001>

<llo_original>
// kernel: bridged_inverse_net_v4_forward.1
$region0: #{bridged_inverse_net_v4_forward.1}
  #allocation0 [shape = 'u32[]', space=smem, size = 0x4, offset = 0x4, fixed_abs, tag = 'smem constant byte address 0x4 - core index']
  #allocation1 [shape = 'u32[144,128]{1,0:T(1,128)}', space=vmem, size = 0x12000, scoped, tag = 'internal scratch']
  #allocation2 [shape = 'f32[1,1]{1,0:T(1,128)S(1)}', space=vmem, size = 0x200, scoped, tag = 'scoped memory for bridged_inverse_net_v4_forward.1']
  %s0 = inlined_call_operand.vmem [shape: f32[2,3,326], index: 0, kind: input, shape index: {}]
  %s1 = inlined_call_operand.vmem [shape: f32[9,32,3], index: 1, kind: input, shape index: {}]
  %s2 = inlined_call_operand.vmem [shape: f32[32,1], index: 2, kind: input, shape index: {}]
  %s3 = inlined_call_operand.vmem [shape: f32[32,32], index: 3, kind: input, shape index: {}]
  %s4 = inlined_call_operand.vmem [shape: f32[32,3], index: 4, kind: input, shape index: {}]
  %s5 = inlined_call_operand.vmem [shape: f32[32,1], index: 5, kind: input, shape index: {}]
  %s6 = inlined_call_operand.vmem [shape: f32[1,32], index: 6, kind: input, shape index: {}]
  %s7 = inlined_call_operand.<no memory space> [shape: f32[1,1], index: 7, kind: input, shape index: {}]
  %s8 = inlined_call_operand.vmem [shape: f32[2,1,288], index: 8, kind: output, shape index: {0}]
  %s9 = inlined_call_operand.vmem [shape: f32[2,16,288], index: 9, kind: output, shape index: {1}]
  %10 = xla_tuple %s8, %s9
  %s11 = sld [smem:[#allocation0]]
  $region73: #{bridged_inverse_net_v4_forward.1} parent=0
    _
  %s13 = ssub.s32 1, %s11
  %s14 = scalar_select 0, %s13, %s11
  %v15 = vstv %s7
  %16 = vst [vmem:[#allocation2] sm:$0x1] %v15
  loop: start=0, step=1, limit=4
  $region2: #{bridged_inverse_net_v4_forward.1} parent=0 // loop_pre_header
    _
  $region3: #{bridged_inverse_net_v4_forward.1} parent=0 // loop_header
    %s18 = sphi 0, %s22
    %p19 = scmp.ge.s32.totalorder %s18, 4
    %s28 = sphi 0, %s30
    %s31 = sphi 0, %s28
    %s32 = sphi 0, %s31
    %s48 = sphi 0, %s32
    %s52 = sphi 0, %s52
    %s54 = sphi 0, %s52
    %s55 = sphi 0, %s54
    %s69 = sphi 0, %s55
    %s73 = sphi 0, %s73
    %s75 = sphi 0, %s73
    %s76 = sphi 0, %s75
    %s90 = sphi 0, %s76
    %s94 = sphi 0, %s94
    %s96 = sphi 0, %s94
    %s97 = sphi 0, %s96
    %s111 = sphi 0, %s97
    %s115 = sphi 0, %s115
    %s117 = sphi 0, %s115
    %s118 = sphi 0, %s117
    %s132 = sphi 0, %s118
    %s136 = sphi 0, %s136
    %s138 = sphi 0, %s136
    %s139 = sphi 0, %s138
    %s153 = sphi 0, %s139
    %s157 = sphi 0, %s157
    %s159 = sphi 0, %s157
    %s160 = sphi 0, %s159
    %s174 = sphi 0, %s160
    %s178 = sphi 0, %s178
    %s180 = sphi 0, %s178
    %s181 = sphi 0, %s180
    %s195 = sphi 0, %s181
    %s201 = sphi 0, %s203
    %s204 = sphi 0, %s201
    %s205 = sphi 0, %s204
    %s221 = sphi 0, %s205
    %s227 = sphi 0, %s229
    %s230 = sphi 0, %s227
    %s231 = sphi 0, %s230
    %s247 = sphi 0, %s231
  $region4: #{bridged_inverse_net_v4_forward.1} parent=0 // loop_header_branch
    %21 = sbr.rel (%p19) target = $region8
  $region5: #{bridged_inverse_net_v4_forward.1} parent=0 // loop_body
    %s23 = ssub.s32 %s18, 1
    %s24 = ssub.s32 %s18, 2
    %s25 = sadd.s32 %s18, 1
    %s26 = ssub.s32 %s18, %s25
    %p27 = scmp.eq.s32.totalorder %s26, 0
    %s29 = sadd.s32 %s28, 1
    %s30 = scalar_select %p27, %s28, %s29
    %p33 = pneg %p27
    %p34 = scmp.eq.s32.totalorder %s18, 1
    %p35 = por %p33, %p34
    %p36 = scmp.ne.s32.totalorder %s28, %s31
    %p37 = scmp.eq.s32.totalorder %s18, 0
    %p38 = por %p36, %p37
    %p39 = scmp.ne.s32.totalorder %s28, %s31
    %p40 = scmp.eq.s32.totalorder %s23, 1
    %p41 = por %p39, %p40
    %p42 = scmp.ne.s32.totalorder %s31, %s32
    %p43 = scmp.eq.s32.totalorder %s23, 0
    %p44 = por %p42, %p43
    %p45 = scmp.ne.s32.totalorder %s31, %s32
    %p46 = scmp.eq.s32.totalorder %s24, 1
    %p47 = por %p45, %p46
    %p49 = scmp.ne.s32.totalorder %s32, %s48
    %p50 = scmp.eq.s32.totalorder %s24, 0
    %p51 = por %p49, %p50
    %s53 = sadd.s32 %s52, 1
    %p56 = scmp.eq.s32.totalorder %s18, 1
    %p57 = scmp.ne.s32.totalorder %s52, %s54
    %p58 = scmp.eq.s32.totalorder %s18, 0
    %p59 = por %p57, %p58
    %p60 = scmp.ne.s32.totalorder %s52, %s54
    %p61 = scmp.eq.s32.totalorder %s23, 1
    %p62 = por %p60, %p61
    %p63 = scmp.ne.s32.totalorder %s54, %s55
    %p64 = scmp.eq.s32.totalorder %s23, 0
    %p65 = por %p63, %p64
    %p66 = scmp.ne.s32.totalorder %s54, %s55
    %p67 = scmp.eq.s32.totalorder %s24, 1
    %p68 = por %p66, %p67
    %p70 = scmp.ne.s32.totalorder %s55, %s69
    %p71 = scmp.eq.s32.totalorder %s24, 0
    %p72 = por %p70, %p71
    %s74 = sadd.s32 %s73, 1
    %p77 = scmp.eq.s32.totalorder %s18, 1
    %p78 = scmp.ne.s32.totalorder %s73, %s75
    %p79 = scmp.eq.s32.totalorder %s18, 0
    %p80 = por %p78, %p79
    %p81 = scmp.ne.s32.totalorder %s73, %s75
    %p82 = scmp.eq.s32.totalorder %s23, 1
    %p83 = por %p81, %p82
    %p84 = scmp.ne.s32.totalorder %s75, %s76
    %p85 = scmp.eq.s32.totalorder %s23, 0
    %p86 = por %p84, %p85
    %p87 = scmp.ne.s32.totalorder %s75, %s76
    %p88 = scmp.eq.s32.totalorder %s24, 1
    %p89 = por %p87, %p88
    %p91 = scmp.ne.s32.totalorder %s76, %s90
    %p92 = scmp.eq.s32.totalorder %s24, 0
    %p93 = por %p91, %p92
    %s95 = sadd.s32 %s94, 1
    %p98 = scmp.eq.s32.totalorder %s18, 1
    %p99 = scmp.ne.s32.totalorder %s94, %s96
    %p100 = scmp.eq.s32.totalorder %s18, 0
    %p101 = por %p99, %p100
    %p102 = scmp.ne.s32.totalorder %s94, %s96
    %p103 = scmp.eq.s32.totalorder %s23, 1
    %p104 = por %p102, %p103
    %p105 = scmp.ne.s32.totalorder %s96, %s97
    %p106 = scmp.eq.s32.totalorder %s23, 0
    %p107 = por %p105, %p106
    %p108 = scmp.ne.s32.totalorder %s96, %s97
    %p109 = scmp.eq.s32.totalorder %s24, 1
    %p110 = por %p108, %p109
    %p112 = scmp.ne.s32.totalorder %s97, %s111
    %p113 = scmp.eq.s32.totalorder %s24, 0
    %p114 = por %p112, %p113
    %s116 = sadd.s32 %s115, 1
    %p119 = scmp.eq.s32.totalorder %s18, 1
    %p120 = scmp.ne.s32.totalorder %s115, %s117
    %p121 = scmp.eq.s32.totalorder %s18, 0
    %p122 = por %p120, %p121
    %p123 = scmp.ne.s32.totalorder %s115, %s117
    %p124 = scmp.eq.s32.totalorder %s23, 1
    %p125 = por %p123, %p124
    %p126 = scmp.ne.s32.totalorder %s117, %s118
    %p127 = scmp.eq.s32.totalorder %s23, 0
    %p128 = por %p126, %p127
    %p129 = scmp.ne.s32.totalorder %s117, %s118
    %p130 = scmp.eq.s32.totalorder %s24, 1
    %p131 = por %p129, %p130
    %p133 = scmp.ne.s32.totalorder %s118, %s132
    %p134 = scmp.eq.s32.totalorder %s24, 0
    %p135 = por %p133, %p134
    %s137 = sadd.s32 %s136, 1
    %p140 = scmp.eq.s32.totalorder %s18, 1
    %p141 = scmp.ne.s32.totalorder %s136, %s138
    %p142 = scmp.eq.s32.totalorder %s18, 0
    %p143 = por %p141, %p142
    %p144 = scmp.ne.s32.totalorder %s136, %s138
    %p145 = scmp.eq.s32.totalorder %s23, 1
    %p146 = por %p144, %p145
    %p147 = scmp.ne.s32.totalorder %s138, %s139
    %p148 = scmp.eq.s32.totalorder %s23, 0
    %p149 = por %p147, %p148
    %p150 = scmp.ne.s32.totalorder %s138, %s139
    %p151 = scmp.eq.s32.totalorder %s24, 1
    %p152 = por %p150, %p151
    %p154 = scmp.ne.s32.totalorder %s139, %s153
    %p155 = scmp.eq.s32.totalorder %s24, 0
    %p156 = por %p154, %p155
    %s158 = sadd.s32 %s157, 1
    %p161 = scmp.eq.s32.totalorder %s18, 1
    %p162 = scmp.ne.s32.totalorder %s157, %s159
    %p163 = scmp.eq.s32.totalorder %s18, 0
    %p164 = por %p162, %p163
    %p165 = scmp.ne.s32.totalorder %s157, %s159
    %p166 = scmp.eq.s32.totalorder %s23, 1
    %p167 = por %p165, %p166
    %p168 = scmp.ne.s32.totalorder %s159, %s160
    %p169 = scmp.eq.s32.totalorder %s23, 0
    %p170 = por %p168, %p169
    %p171 = scmp.ne.s32.totalorder %s159, %s160
    %p172 = scmp.eq.s32.totalorder %s24, 1
    %p173 = por %p171, %p172
    %p175 = scmp.ne.s32.totalorder %s160, %s174
    %p176 = scmp.eq.s32.totalorder %s24, 0
    %p177 = por %p175, %p176
    %s179 = sadd.s32 %s178, 1
    %p182 = scmp.eq.s32.totalorder %s18, 1
    %p183 = scmp.ne.s32.totalorder %s178, %s180
    %p184 = scmp.eq.s32.totalorder %s18, 0
    %p185 = por %p183, %p184
    %p186 = scmp.ne.s32.totalorder %s178, %s180
    %p187 = scmp.eq.s32.totalorder %s23, 1
    %p188 = por %p186, %p187
    %p189 = scmp.ne.s32.totalorder %s180, %s181
    %p190 = scmp.eq.s32.totalorder %s23, 0
    %p191 = por %p189, %p190
    %p192 = scmp.ne.s32.totalorder %s180, %s181
    %p193 = scmp.eq.s32.totalorder %s24, 1
    %p194 = por %p192, %p193
    %p196 = scmp.ne.s32.totalorder %s181, %s195
    %p197 = scmp.eq.s32.totalorder %s24, 0
    %p198 = por %p196, %p197
    %s199 = ssub.s32 %s18, %s25
    %p200 = scmp.eq.s32.totalorder %s199, 0
    %s202 = sadd.s32 %s201, 1
    %s203 = scalar_select %p200, %s201, %s202
    %p206 = pneg %p200
    %p207 = scmp.eq.s32.totalorder %s18, 1
    %p208 = por %p206, %p207
    %p209 = scmp.ne.s32.totalorder %s201, %s204
    %p210 = scmp.eq.s32.totalorder %s18, 0
    %p211 = por %p209, %p210
    %p212 = scmp.ne.s32.totalorder %s201, %s204
    %p213 = scmp.eq.s32.totalorder %s23, 1
    %p214 = por %p212, %p213
    %p215 = scmp.ne.s32.totalorder %s204, %s205
    %p216 = scmp.eq.s32.totalorder %s23, 0
    %p217 = por %p215, %p216
    %p218 = scmp.ne.s32.totalorder %s204, %s205
    %p219 = scmp.eq.s32.totalorder %s24, 1
    %p220 = por %p218, %p219
    %p222 = scmp.ne.s32.totalorder %s205, %s221
    %p223 = scmp.eq.s32.totalorder %s24, 0
    %p224 = por %p222, %p223
    %s225 = ssub.s32 %s18, %s25
    %p226 = scmp.eq.s32.totalorder %s225, 0
    %s228 = sadd.s32 %s227, 1
    %s229 = scalar_select %p226, %s227, %s228
    %p232 = pneg %p226
    %p233 = scmp.eq.s32.totalorder %s18, 1
    %p234 = por %p232, %p233
    %p235 = scmp.ne.s32.totalorder %s227, %s230
    %p236 = scmp.eq.s32.totalorder %s18, 0
    %p237 = por %p235, %p236
    %p238 = scmp.ne.s32.totalorder %s227, %s230
    %p239 = scmp.eq.s32.totalorder %s23, 1
    %p240 = por %p238, %p239
    %p241 = scmp.ne.s32.totalorder %s230, %s231
    %p242 = scmp.eq.s32.totalorder %s23, 0
    %p243 = por %p241, %p242
    %p244 = scmp.ne.s32.totalorder %s230, %s231
    %p245 = scmp.eq.s32.totalorder %s24, 1
    %p246 = por %p244, %p245
    %p248 = scmp.ne.s32.totalorder %s231, %s247
    %p249 = scmp.eq.s32.totalorder %s24, 0
    %p250 = por %p248, %p249
    %p251 = scmp.le.s32.totalorder 1, %s18
    %p252 = scmp.lt.s32.totalorder %s18, 3
    %p253 = pnand %p251, %p252
    %p254 = pneg %p253
    // Predicated region
    $region9: #{bridged_inverse_net_v4_forward.1} parent=5 // pred_check
      _
    $region10: #{bridged_inverse_net_v4_forward.1} parent=5 // pred_check_branch
      %256 = sbr.rel (%p253) target = $region12
    $region11: #{bridged_inverse_net_v4_forward.1} parent=5 // pred_region
      %s257 = ssub.s32 %s18, 1
      // Predicated region
      $region13: #{bridged_inverse_net_v4_forward.1} parent=11 // pred_check
        %p258 = pneg %p65
      $region14: #{bridged_inverse_net_v4_forward.1} parent=11 // pred_check_branch
        %260 = sbr.rel (%p258) target = $region16
      $region15: #{bridged_inverse_net_v4_forward.1} parent=11 // pred_region
        _
      $region16: #{bridged_inverse_net_v4_forward.1} parent=11 // pred_fallthru
        _
      // Predicated region
      $region17: #{bridged_inverse_net_v4_forward.1} parent=11 // pred_check
        %p261 = pneg %p86
      $region18: #{bridged_inverse_net_v4_forward.1} parent=11 // pred_check_branch
        %263 = sbr.rel (%p261) target = $region20
      $region19: #{bridged_inverse_net_v4_forward.1} parent=11 // pred_region
        _
      $region20: #{bridged_inverse_net_v4_forward.1} parent=11 // pred_fallthru
        _
      // Predicated region
      $region21: #{bridged_inverse_net_v4_forward.1} parent=11 // pred_check
        %p264 = pneg %p107
      $region22: #{bridged_inverse_net_v4_forward.1} parent=11 // pred_check_branch
        %266 = sbr.rel (%p264) target = $region24
      $region23: #{bridged_inverse_net_v4_forward.1} parent=11 // pred_region
        _
      $region24: #{bridged_inverse_net_v4_forward.1} parent=11 // pred_fallthru
        _
      // Predicated region
      $region25: #{bridged_inverse_net_v4_forward.1} parent=11 // pred_check
        %p267 = pneg %p128
      $region26: #{bridged_inverse_net_v4_forward.1} parent=11 // pred_check_branch
        %269 = sbr.rel (%p267) target = $region28
      $region27: #{bridged_inverse_net_v4_forward.1} parent=11 // pred_region
        _
      $region28: #{bridged_inverse_net_v4_forward.1} parent=11 // pred_fallthru
        _
      // Predicated region
      $region29: #{bridged_inverse_net_v4_forward.1} parent=11 // pred_check
        %p270 = pneg %p149
      $region30: #{bridged_inverse_net_v4_forward.1} parent=11 // pred_check_branch
        %272 = sbr.rel (%p270) target = $region32
      $region31: #{bridged_inverse_net_v4_forward.1} parent=11 // pred_region
        _
      $region32: #{bridged_inverse_net_v4_forward.1} parent=11 // pred_fallthru
        _
      // Predicated region
      $region33: #{bridged_inverse_net_v4_forward.1} parent=11 // pred_check
        %p273 = pneg %p170
      $region34: #{bridged_inverse_net_v4_forward.1} parent=11 // pred_check_branch
        %275 = sbr.rel (%p273) target = $region36
      $region35: #{bridged_inverse_net_v4_forward.1} parent=11 // pred_region
        _
      $region36: #{bridged_inverse_net_v4_forward.1} parent=11 // pred_fallthru
        _
      // Predicated region
      $region37: #{bridged_inverse_net_v4_forward.1} parent=11 // pred_check
        %p276 = pneg %p191
      $region38: #{bridged_inverse_net_v4_forward.1} parent=11 // pred_check_branch
        %278 = sbr.rel (%p276) target = $region40
      $region39: #{bridged_inverse_net_v4_forward.1} parent=11 // pred_region
        _
      $region40: #{bridged_inverse_net_v4_forward.1} parent=11 // pred_fallthru
        _
    $region12: #{bridged_inverse_net_v4_forward.1} parent=5 // pred_fallthru
      _
    %p279 = scmp.lt.s32.totalorder %s18, 2
    // Predicated region
    $region41: #{bridged_inverse_net_v4_forward.1} parent=5 // pred_check
      %p280 = pneg %p279
    $region42: #{bridged_inverse_net_v4_forward.1} parent=5 // pred_check_branch
      %282 = sbr.rel (%p280) target = $region44
    $region43: #{bridged_inverse_net_v4_forward.1} parent=5 // pred_region
      // Predicated region
      $region45: #{bridged_inverse_net_v4_forward.1} parent=43 // pred_check
        %p283 = pneg %p38
      $region46: #{bridged_inverse_net_v4_forward.1} parent=43 // pred_check_branch
        %285 = sbr.rel (%p283) target = $region48
      $region47: #{bridged_inverse_net_v4_forward.1} parent=43 // pred_region
        %p286 = scmp.lt.s32.totalorder %s18, 1
        %s287 = scalar_select %p286, %s18, 1
        %s288 = smul.addr %s287, 3
        %s289 = smul.addr %s288, 4
        %s290 = scalar_lea.vmem %s0, %s289
      $region48: #{bridged_inverse_net_v4_forward.1} parent=43 // pred_fallthru
        _
    $region44: #{bridged_inverse_net_v4_forward.1} parent=5 // pred_fallthru
      _
    %p291 = scmp.le.s32.totalorder 1, %s18
    %p292 = scmp.lt.s32.totalorder %s18, 3
    %p293 = pnand %p291, %p292
    %p294 = pneg %p293
    // Predicated region
    $region49: #{bridged_inverse_net_v4_forward.1} parent=5 // pred_check
      _
    $region50: #{bridged_inverse_net_v4_forward.1} parent=5 // pred_check_branch
      %296 = sbr.rel (%p293) target = $region52
    $region51: #{bridged_inverse_net_v4_forward.1} parent=5 // pred_region
      %s297 = ssub.s32 %s18, 1
      %p298 = scmp.lt.s32.totalorder %s23, 1
      %s299 = scalar_select %p298, %s23, 1
      %s300 = smul.addr %s299, 3
      %s301 = smul.addr %s300, 4
      %s302 = scalar_lea.vmem %s0, %s301
      %p303 = pneg %p44
      %p304 = pneg %p41
      %p305 = pneg %p65
      %p306 = pneg %p62
      %p307 = pneg %p86
      %p308 = pneg %p83
      %p309 = pneg %p107
      %p310 = pneg %p104
      %p311 = pneg %p128
      %p312 = pneg %p125
      %p313 = pneg %p149
      %p314 = pneg %p146
      %p315 = pneg %p170
      %p316 = pneg %p167
      %p317 = pneg %p191
      %p318 = pneg %p188
      %p319 = pneg %p217
      %p320 = pneg %p214
      %p321 = scmp.lt.s32.totalorder %s23, 1
      %s322 = scalar_select %p321, %s23, 1
      %s323 = smul.addr %s322, 3
      %s324 = scalar_lea.vmem %s8, %s323
      %p325 = pneg %p243
      %p326 = pneg %p240
      %p327 = scmp.lt.s32.totalorder %s23, 1
      %s328 = scalar_select %p327, %s23, 1
      %s329 = smul.addr %s328, 6
      %s330 = smul.addr %s329, 8
      %s331 = scalar_lea.vmem %s9, %s330
      %p332 = scmp.lt.s32.totalorder %s23, 1
      %s333 = scalar_select %p332, %s23, 1
      %s334 = smul.addr %s333, 3
      %s335 = smul.addr %s334, 4
      %s336 = scalar_lea.vmem %s0, %s335
      %p337 = scmp.lt.s32.totalorder %s23, 1
      %s338 = scalar_select %p337, %s23, 1
      %s339 = smul.addr %s338, 3
      %s340 = scalar_lea.vmem %s8, %s339
      %p341 = scmp.lt.s32.totalorder %s23, 1
      %s342 = scalar_select %p341, %s23, 1
      %s343 = smul.addr %s342, 6
      %s344 = smul.addr %s343, 8
      %s345 = scalar_lea.vmem %s9, %s344
      %v346 = vld [vmem:[%s1] sm:$0xff]
      %v347 = vld [vmem:[%s1 + $0x8] sm:$0xff]
      %v348 = vld [vmem:[%s1 + $0x10] sm:$0xff]
      %v349 = vld [vmem:[%s1 + $0x18] sm:$0xff]
      %v350 = vld [vmem:[%s336] sm:$0x77]
      %v351 = vld [vmem:[%s336 + $0x8] sm:$0x7]
      %s352 = scalar_lea.vmem %s1, 32
      %v353 = vld [vmem:[%s352] sm:$0xff]
      %v354 = vld [vmem:[%s352 + $0x8] sm:$0xff]
      %v355 = vld [vmem:[%s352 + $0x10] sm:$0xff]
      %v356 = vld [vmem:[%s352 + $0x18] sm:$0xff]
      %v359 = vcombine.high %v350, %v350
      %360 = vrot.lane.b32.xlu0 %v350, 127
      %v361 = vpop.permute.xlu0 %360
      %362 = vrot.lane.b32.xlu0 %v359, 127
      %v363 = vpop.permute.xlu0 %362
      %364 = vrot.lane.b32.xlu0 %v351, 127
      %v365 = vpop.permute.xlu0 %364
      %vm366 = vcmask 1039360
      %v367 = vsel %vm366, %v361, %v363
      %v368 = vsel %vm366, %v363, %v365
      %vm369 = vcmask 23552
      %v371 = vsel %vm369, %v353, 0
      %v374 = vsel %vm369, %v354, 0
      %v377 = vsel %vm369, %v355, 0
      %v380 = vsel %vm369, %v356, 0
      %vm382 = vcmask 1042432
      %v383 = vsel %vm382, %v367, 0
      %v385 = vsel %vm382, %v368, 0
      %v387 = vsel %vm382, %v365, 0
      %389 = vmatprep.subr.mxu0 %v385
      %390 = vmatpush1.msra.mxu0 %v383
      %391 = vmatprep.subr.mxu0 0.0
      %392 = vmatpush1.msra.mxu0 0.0
      %393 = vmatprep.subr.mxu0 0.0
      %394 = vmatpush1.msra.mxu0 0.0
      %395 = vmatprep.subr.mxu0 0.0
      %396 = vmatpush1.msra.mxu0 0.0
      %397 = vmatprep.subr.mxu0 0.0
      %398 = vmatpush1.msra.mxu0 0.0
      %399 = vmatprep.subr.mxu0 0.0
      %400 = vmatpush1.msra.mxu0 0.0
      %401 = vmatprep.subr.mxu0 0.0
      %402 = vmatpush1.msra.mxu0 0.0
      %403 = vmatprep.subr.mxu0 0.0
      %404 = vmatpush1.msra.mxu0 0.0
      %405 = vmatprep.subr.mxu0 0.0
      %406 = vmatpush1.msra.mxu0 0.0
      %407 = vmatprep.subr.mxu0 0.0
      %408 = vmatpush1.msra.mxu0 0.0
      %409 = vmatprep.subr.mxu0 0.0
      %410 = vmatpush1.msra.mxu0 0.0
      %411 = vmatprep.subr.mxu0 0.0
      %412 = vmatpush1.msra.mxu0 0.0
      %413 = vmatprep.subr.mxu0 0.0
      %414 = vmatpush1.msra.mxu0 0.0
      %415 = vmatprep.subr.mxu0 0.0
      %416 = vmatpush1.msra.mxu0 0.0
      %417 = vmatprep.subr.mxu0 0.0
      %418 = vmatpush1.msra.mxu0 0.0
      %419 = vmatprep.subr.mxu0 0.0
      %420 = vmatpush1.msra.mxu0 0.0
      %421 = vmatprep.subr.mxu0 0.0
      %422 = vmatpush1.msra.mxu0 0.0
      %423 = vmatprep.subr.mxu0 0.0
      %424 = vmatpush1.msra.mxu0 0.0
      %425 = vmatprep.subr.mxu0 0.0
      %426 = vmatpush1.msra.mxu0 0.0
      %427 = vmatprep.subr.mxu0 0.0
      %428 = vmatpush1.msra.mxu0 0.0
      %429 = vmatprep.subr.mxu0 0.0
      %430 = vmatpush1.msra.mxu0 0.0
      %431 = vmatprep.subr.mxu0 0.0
      %432 = vmatpush1.msra.mxu0 0.0
      %433 = vmatprep.subr.mxu0 0.0
      %434 = vmatpush1.msra.mxu0 0.0
      %435 = vmatprep.subr.mxu0 0.0
      %436 = vmatpush1.msra.mxu0 0.0
      %437 = vmatprep.subr.mxu0 0.0
      %438 = vmatpush1.msra.mxu0 0.0
      %439 = vmatprep.subr.mxu0 0.0
      %440 = vmatpush1.msra.mxu0 0.0
      %441 = vmatprep.subr.mxu0 0.0
      %442 = vmatpush1.msra.mxu0 0.0
      %443 = vmatprep.subr.mxu0 0.0
      %444 = vmatpush1.msra.mxu0 0.0
      %445 = vmatprep.subr.mxu0 0.0
      %446 = vmatpush1.msra.mxu0 0.0
      %447 = vmatprep.subr.mxu0 0.0
      %448 = vmatpush1.msra.mxu0 0.0
      %449 = vmatprep.subr.mxu0 0.0
      %450 = vmatpush1.msra.mxu0 0.0
      %451 = vmatprep.subr.mxu0 0.0
      %452 = vmatpush1.msra.mxu0 0.0
      %453 = vmatprep.mubr.f32.mxu0 0.0
      %454 = vmatmul.mubr.f32.gmra.mrb[0].mxu0 %v371
      %v455 = vpop.f32.mrb[0].mxu0
      %v456 = vadd.f32 0.0, %v455
      %v457 = vpop.f32.mrb[0].mxu0
      %v458 = vadd.f32 0.0, %v457
      %459 = vmatprep.mubr.f32.mxu0 0.0
      %460 = vmatmul.mubr.f32.gmra.mrb[0].mxu0 %v374
      %v461 = vpop.f32.mrb[0].mxu0
      %v462 = vadd.f32 0.0, %v461
      %v463 = vpop.f32.mrb[0].mxu0
      %v464 = vadd.f32 0.0, %v463
      %465 = vmatprep.mubr.f32.mxu0 0.0
      %466 = vmatmul.mubr.f32.gmra.mrb[0].mxu0 %v377
      %v467 = vpop.f32.mrb[0].mxu0
      %v468 = vadd.f32 0.0, %v467
      %v469 = vpop.f32.mrb[0].mxu0
      %v470 = vadd.f32 0.0, %v469
      %471 = vmatprep.mubr.f32.mxu0 0.0
      %472 = vmatmul.mubr.f32.gmra.mrb[0].mxu0 %v380
      %v473 = vpop.f32.mrb[0].mxu0
      %v474 = vadd.f32 0.0, %v473
      %v475 = vpop.f32.mrb[0].mxu0
      %v476 = vadd.f32 0.0, %v475
      %477 = vdwg.mxu0
      %478 = vmatprep.subr.mxu0 0.0
      %479 = vmatpush1.msra.mxu0 %v387
      %480 = vmatprep.subr.mxu0 0.0
      %481 = vmatpush1.msra.mxu0 0.0
      %482 = vmatprep.subr.mxu0 0.0
      %483 = vmatpush1.msra.mxu0 0.0
      %484 = vmatprep.subr.mxu0 0.0
      %485 = vmatpush1.msra.mxu0 0.0
      %486 = vmatprep.subr.mxu0 0.0
      %487 = vmatpush1.msra.mxu0 0.0
      %488 = vmatprep.subr.mxu0 0.0
      %489 = vmatpush1.msra.mxu0 0.0
      %490 = vmatprep.subr.mxu0 0.0
      %491 = vmatpush1.msra.mxu0 0.0
      %492 = vmatprep.subr.mxu0 0.0
      %493 = vmatpush1.msra.mxu0 0.0
      %494 = vmatprep.subr.mxu0 0.0
      %495 = vmatpush1.msra.mxu0 0.0
      %496 = vmatprep.subr.mxu0 0.0
      %497 = vmatpush1.msra.mxu0 0.0
      %498 = vmatprep.subr.mxu0 0.0
      %499 = vmatpush1.msra.mxu0 0.0
      %500 = vmatprep.subr.mxu0 0.0
      %501 = vmatpush1.msra.mxu0 0.0
      %502 = vmatprep.subr.mxu0 0.0
      %503 = vmatpush1.msra.mxu0 0.0
      %504 = vmatprep.subr.mxu0 0.0
      %505 = vmatpush1.msra.mxu0 0.0
      %506 = vmatprep.subr.mxu0 0.0
      %507 = vmatpush1.msra.mxu0 0.0
      %508 = vmatprep.subr.mxu0 0.0
      %509 = vmatpush1.msra.mxu0 0.0
      %510 = vmatprep.subr.mxu0 0.0
      %511 = vmatpush1.msra.mxu0 0.0
      %512 = vmatprep.subr.mxu0 0.0
      %513 = vmatpush1.msra.mxu0 0.0
      %514 = vmatprep.subr.mxu0 0.0
      %515 = vmatpush1.msra.mxu0 0.0
      %516 = vmatprep.subr.mxu0 0.0
      %517 = vmatpush1.msra.mxu0 0.0
      %518 = vmatprep.subr.mxu0 0.0
      %519 = vmatpush1.msra.mxu0 0.0
      %520 = vmatprep.subr.mxu0 0.0
      %521 = vmatpush1.msra.mxu0 0.0
      %522 = vmatprep.subr.mxu0 0.0
      %523 = vmatpush1.msra.mxu0 0.0
      %524 = vmatprep.subr.mxu0 0.0
      %525 = vmatpush1.msra.mxu0 0.0
      %526 = vmatprep.subr.mxu0 0.0
      %527 = vmatpush1.msra.mxu0 0.0
      %528 = vmatprep.subr.mxu0 0.0
      %529 = vmatpush1.msra.mxu0 0.0
      %530 = vmatprep.subr.mxu0 0.0
      %531 = vmatpush1.msra.mxu0 0.0
      %532 = vmatprep.subr.mxu0 0.0
      %533 = vmatpush1.msra.mxu0 0.0
      %534 = vmatprep.subr.mxu0 0.0
      %535 = vmatpush1.msra.mxu0 0.0
      %536 = vmatprep.subr.mxu0 0.0
      %537 = vmatpush1.msra.mxu0 0.0
      %538 = vmatprep.subr.mxu0 0.0
      %539 = vmatpush1.msra.mxu0 0.0
      %540 = vmatprep.subr.mxu0 0.0
      %541 = vmatpush1.msra.mxu0 0.0
      %542 = vmatprep.mubr.f32.mxu0 0.0
      %543 = vmatmul.mubr.f32.gmra.mrb[0].mxu0 %v371
      %v544 = vpop.f32.mrb[0].mxu0
      %v545 = vadd.f32 0.0, %v544
      %v546 = vpop.f32.mrb[0].mxu0
      %547 = vmatprep.mubr.f32.mxu0 0.0
      %548 = vmatmul.mubr.f32.gmra.mrb[0].mxu0 %v374
      %v549 = vpop.f32.mrb[0].mxu0
      %v550 = vadd.f32 0.0, %v549
      %v551 = vpop.f32.mrb[0].mxu0
      %552 = vmatprep.mubr.f32.mxu0 0.0
      %553 = vmatmul.mubr.f32.gmra.mrb[0].mxu0 %v377
      %v554 = vpop.f32.mrb[0].mxu0
      %v555 = vadd.f32 0.0, %v554
      %v556 = vpop.f32.mrb[0].mxu0
      %557 = vmatprep.mubr.f32.mxu0 0.0
      %558 = vmatmul.mubr.f32.gmra.mrb[0].mxu0 %v380
      %v559 = vpop.f32.mrb[0].mxu0
      %v560 = vadd.f32 0.0, %v559
      %v561 = vpop.f32.mrb[0].mxu0
      %562 = vdwg.mxu0
      %v564 = vsel %vm369, %v346, 0
      %v567 = vsel %vm369, %v347, 0
      %v570 = vsel %vm369, %v348, 0
      %v573 = vsel %vm369, %v349, 0
      %v575 = vsel %vm382, %v350, 0
      %v577 = vsel %vm382, %v359, 0
      %v579 = vsel %vm382, %v351, 0
      %581 = vmatprep.subr.mxu0 %v577
      %582 = vmatpush1.msra.mxu0 %v575
      %583 = vmatprep.subr.mxu0 0.0
      %584 = vmatpush1.msra.mxu0 0.0
      %585 = vmatprep.subr.mxu0 0.0
      %586 = vmatpush1.msra.mxu0 0.0
      %587 = vmatprep.subr.mxu0 0.0
      %588 = vmatpush1.msra.mxu0 0.0
      %589 = vmatprep.subr.mxu0 0.0
      %590 = vmatpush1.msra.mxu0 0.0
      %591 = vmatprep.subr.mxu0 0.0
      %592 = vmatpush1.msra.mxu0 0.0
      %593 = vmatprep.subr.mxu0 0.0
      %594 = vmatpush1.msra.mxu0 0.0
      %595 = vmatprep.subr.mxu0 0.0
      %596 = vmatpush1.msra.mxu0 0.0
      %597 = vmatprep.subr.mxu0 0.0
      %598 = vmatpush1.msra.mxu0 0.0
      %599 = vmatprep.subr.mxu0 0.0
      %600 = vmatpush1.msra.mxu0 0.0
      %601 = vmatprep.subr.mxu0 0.0
      %602 = vmatpush1.msra.mxu0 0.0
      %603 = vmatprep.subr.mxu0 0.0
      %604 = vmatpush1.msra.mxu0 0.0
      %605 = vmatprep.subr.mxu0 0.0
      %606 = vmatpush1.msra.mxu0 0.0
      %607 = vmatprep.subr.mxu0 0.0
      %608 = vmatpush1.msra.mxu0 0.0
      %609 = vmatprep.subr.mxu0 0.0
      %610 = vmatpush1.msra.mxu0 0.0
      %611 = vmatprep.subr.mxu0 0.0
      %612 = vmatpush1.msra.mxu0 0.0
      %613 = vmatprep.subr.mxu0 0.0
      %614 = vmatpush1.msra.mxu0 0.0
      %615 = vmatprep.subr.mxu0 0.0
      %616 = vmatpush1.msra.mxu0 0.0
      %617 = vmatprep.subr.mxu0 0.0
      %618 = vmatpush1.msra.mxu0 0.0
      %619 = vmatprep.subr.mxu0 0.0
      %620 = vmatpush1.msra.mxu0 0.0
      %621 = vmatprep.subr.mxu0 0.0
      %622 = vmatpush1.msra.mxu0 0.0
      %623 = vmatprep.subr.mxu0 0.0
      %624 = vmatpush1.msra.mxu0 0.0
      %625 = vmatprep.subr.mxu0 0.0
      %626 = vmatpush1.msra.mxu0 0.0
      %627 = vmatprep.subr.mxu0 0.0
      %628 = vmatpush1.msra.mxu0 0.0
      %629 = vmatprep.subr.mxu0 0.0
      %630 = vmatpush1.msra.mxu0 0.0
      %631 = vmatprep.subr.mxu0 0.0
      %632 = vmatpush1.msra.mxu0 0.0
      %633 = vmatprep.subr.mxu0 0.0
      %634 = vmatpush1.msra.mxu0 0.0
      %635 = vmatprep.subr.mxu0 0.0
      %636 = vmatpush1.msra.mxu0 0.0
      %637 = vmatprep.subr.mxu0 0.0
      %638 = vmatpush1.msra.mxu0 0.0
      %639 = vmatprep.subr.mxu0 0.0
      %640 = vmatpush1.msra.mxu0 0.0
      %641 = vmatprep.subr.mxu0 0.0
      %642 = vmatpush1.msra.mxu0 0.0
      %643 = vmatprep.subr.mxu0 0.0
      %644 = vmatpush1.msra.mxu0 0.0
      %645 = vmatprep.mubr.f32.mxu0 0.0
      %646 = vmatmul.mubr.f32.gmra.mrb[0].mxu0 %v564
      %v647 = vpop.f32.mrb[0].mxu0
      %v648 = vadd.f32 %v456, %v647
      %v649 = vpop.f32.mrb[0].mxu0
      %v650 = vadd.f32 %v458, %v649
      %651 = vmatprep.mubr.f32.mxu0 0.0
      %652 = vmatmul.mubr.f32.gmra.mrb[0].mxu0 %v567
      %v653 = vpop.f32.mrb[0].mxu0
      %v654 = vadd.f32 %v462, %v653
      %v655 = vpop.f32.mrb[0].mxu0
      %v656 = vadd.f32 %v464, %v655
      %657 = vmatprep.mubr.f32.mxu0 0.0
      %658 = vmatmul.mubr.f32.gmra.mrb[0].mxu0 %v570
      %v659 = vpop.f32.mrb[0].mxu0
      %v660 = vadd.f32 %v468, %v659
      %v661 = vpop.f32.mrb[0].mxu0
      %v662 = vadd.f32 %v470, %v661
      %663 = vmatprep.mubr.f32.mxu0 0.0
      %664 = vmatmul.mubr.f32.gmra.mrb[0].mxu0 %v573
      %v665 = vpop.f32.mrb[0].mxu0
      %v666 = vadd.f32 %v474, %v665
      %v667 = vpop.f32.mrb[0].mxu0
      %v668 = vadd.f32 %v476, %v667
      %669 = vdwg.mxu0
      %670 = vmatprep.subr.mxu0 0.0
      %671 = vmatpush1.msra.mxu0 %v579
      %672 = vmatprep.subr.mxu0 0.0
      %673 = vmatpush1.msra.mxu0 0.0
      %674 = vmatprep.subr.mxu0 0.0
      %675 = vmatpush1.msra.mxu0 0.0
      %676 = vmatprep.subr.mxu0 0.0
      %677 = vmatpush1.msra.mxu0 0.0
      %678 = vmatprep.subr.mxu0 0.0
      %679 = vmatpush1.msra.mxu0 0.0
      %680 = vmatprep.subr.mxu0 0.0
      %681 = vmatpush1.msra.mxu0 0.0
      %682 = vmatprep.subr.mxu0 0.0
      %683 = vmatpush1.msra.mxu0 0.0
      %684 = vmatprep.subr.mxu0 0.0
      %685 = vmatpush1.msra.mxu0 0.0
      %686 = vmatprep.subr.mxu0 0.0
      %687 = vmatpush1.msra.mxu0 0.0
      %688 = vmatprep.subr.mxu0 0.0
      %689 = vmatpush1.msra.mxu0 0.0
      %690 = vmatprep.subr.mxu0 0.0
      %691 = vmatpush1.msra.mxu0 0.0
      %692 = vmatprep.subr.mxu0 0.0
      %693 = vmatpush1.msra.mxu0 0.0
      %694 = vmatprep.subr.mxu0 0.0
      %695 = vmatpush1.msra.mxu0 0.0
      %696 = vmatprep.subr.mxu0 0.0
      %697 = vmatpush1.msra.mxu0 0.0
      %698 = vmatprep.subr.mxu0 0.0
      %699 = vmatpush1.msra.mxu0 0.0
      %700 = vmatprep.subr.mxu0 0.0
      %701 = vmatpush1.msra.mxu0 0.0
      %702 = vmatprep.subr.mxu0 0.0
      %703 = vmatpush1.msra.mxu0 0.0
      %704 = vmatprep.subr.mxu0 0.0
      %705 = vmatpush1.msra.mxu0 0.0
      %706 = vmatprep.subr.mxu0 0.0
      %707 = vmatpush1.msra.mxu0 0.0
      %708 = vmatprep.subr.mxu0 0.0
      %709 = vmatpush1.msra.mxu0 0.0
      %710 = vmatprep.subr.mxu0 0.0
      %711 = vmatpush1.msra.mxu0 0.0
      %712 = vmatprep.subr.mxu0 0.0
      %713 = vmatpush1.msra.mxu0 0.0
      %714 = vmatprep.subr.mxu0 0.0
      %715 = vmatpush1.msra.mxu0 0.0
      %716 = vmatprep.subr.mxu0 0.0
      %717 = vmatpush1.msra.mxu0 0.0
      %718 = vmatprep.subr.mxu0 0.0
      %719 = vmatpush1.msra.mxu0 0.0
      %720 = vmatprep.subr.mxu0 0.0
      %721 = vmatpush1.msra.mxu0 0.0
      %722 = vmatprep.subr.mxu0 0.0
      %723 = vmatpush1.msra.mxu0 0.0
      %724 = vmatprep.subr.mxu0 0.0
      %725 = vmatpush1.msra.mxu0 0.0
      %726 = vmatprep.subr.mxu0 0.0
      %727 = vmatpush1.msra.mxu0 0.0
      %728 = vmatprep.subr.mxu0 0.0
      %729 = vmatpush1.msra.mxu0 0.0
      %730 = vmatprep.subr.mxu0 0.0
      %731 = vmatpush1.msra.mxu0 0.0
      %732 = vmatprep.subr.mxu0 0.0
      %733 = vmatpush1.msra.mxu0 0.0
      %734 = vmatprep.mubr.f32.mxu0 0.0
      %735 = vmatmul.mubr.f32.gmra.mrb[0].mxu0 %v564
      %v736 = vpop.f32.mrb[0].mxu0
      %v737 = vadd.f32 %v545, %v736
      %v738 = vpop.f32.mrb[0].mxu0
      %739 = vmatprep.mubr.f32.mxu0 0.0
      %740 = vmatmul.mubr.f32.gmra.mrb[0].mxu0 %v567
      %v741 = vpop.f32.mrb[0].mxu0
      %v742 = vadd.f32 %v550, %v741
      %v743 = vpop.f32.mrb[0].mxu0
      %744 = vmatprep.mubr.f32.mxu0 0.0
      %745 = vmatmul.mubr.f32.gmra.mrb[0].mxu0 %v570
      %v746 = vpop.f32.mrb[0].mxu0
      %v747 = vadd.f32 %v555, %v746
      %v748 = vpop.f32.mrb[0].mxu0
      %749 = vmatprep.mubr.f32.mxu0 0.0
      %750 = vmatmul.mubr.f32.gmra.mrb[0].mxu0 %v573
      %v751 = vpop.f32.mrb[0].mxu0
      %v752 = vadd.f32 %v560, %v751
      %v753 = vpop.f32.mrb[0].mxu0
      %754 = vdwg.mxu0
      %s755 = scalar_lea.vmem %s1, 64
      %v756 = vld [vmem:[%s755] sm:$0xff]
      %v757 = vld [vmem:[%s755 + $0x8] sm:$0xff]
      %v758 = vld [vmem:[%s755 + $0x10] sm:$0xff]
      %v759 = vld [vmem:[%s755 + $0x18] sm:$0xff]
      %v760 = vld [vmem:[%s336] sm:$0x77]
      %v761 = vld [vmem:[%s336 + $0x8] sm:$0x7]
      %v764 = vcombine.high %v760, %v760
      %765 = vrot.lane.b32.xlu0 %v760, 126
      %v766 = vpop.permute.xlu0 %765
      %767 = vrot.lane.b32.xlu0 %v764, 126
      %v768 = vpop.permute.xlu0 %767
      %769 = vrot.lane.b32.xlu0 %v761, 126
      %v770 = vpop.permute.xlu0 %769
      %vm771 = vcmask 1031168
      %v772 = vsel %vm771, %v766, %v768
      %v773 = vsel %vm771, %v768, %v770
      %v775 = vsel %vm369, %v756, 0
      %v778 = vsel %vm369, %v757, 0
      %v781 = vsel %vm369, %v758, 0
      %v784 = vsel %vm369, %v759, 0
      %v786 = vsel %vm382, %v772, 0
      %v788 = vsel %vm382, %v773, 0
      %v790 = vsel %vm382, %v770, 0
      %792 = vmatprep.subr.mxu0 %v788
      %793 = vmatpush1.msra.mxu0 %v786
      %794 = vmatprep.subr.mxu0 0.0
      %795 = vmatpush1.msra.mxu0 0.0
      %796 = vmatprep.subr.mxu0 0.0
      %797 = vmatpush1.msra.mxu0 0.0
      %798 = vmatprep.subr.mxu0 0.0
      %799 = vmatpush1.msra.mxu0 0.0
      %800 = vmatprep.subr.mxu0 0.0
      %801 = vmatpush1.msra.mxu0 0.0
      %802 = vmatprep.subr.mxu0 0.0
      %803 = vmatpush1.msra.mxu0 0.0
      %804 = vmatprep.subr.mxu0 0.0
      %805 = vmatpush1.msra.mxu0 0.0
      %806 = vmatprep.subr.mxu0 0.0
      %807 = vmatpush1.msra.mxu0 0.0
      %808 = vmatprep.subr.mxu0 0.0
      %809 = vmatpush1.msra.mxu0 0.0
      %810 = vmatprep.subr.mxu0 0.0
      %811 = vmatpush1.msra.mxu0 0.0
      %812 = vmatprep.subr.mxu0 0.0
      %813 = vmatpush1.msra.mxu0 0.0
      %814 = vmatprep.subr.mxu0 0.0
      %815 = vmatpush1.msra.mxu0 0.0
      %816 = vmatprep.subr.mxu0 0.0
      %817 = vmatpush1.msra.mxu0 0.0
      %818 = vmatprep.subr.mxu0 0.0
      %819 = vmatpush1.msra.mxu0 0.0
      %820 = vmatprep.subr.mxu0 0.0
      %821 = vmatpush1.msra.mxu0 0.0
      %822 = vmatprep.subr.mxu0 0.0
      %823 = vmatpush1.msra.mxu0 0.0
      %824 = vmatprep.subr.mxu0 0.0
      %825 = vmatpush1.msra.mxu0 0.0
      %826 = vmatprep.subr.mxu0 0.0
      %827 = vmatpush1.msra.mxu0 0.0
      %828 = vmatprep.subr.mxu0 0.0
      %829 = vmatpush1.msra.mxu0 0.0
      %830 = vmatprep.subr.mxu0 0.0
      %831 = vmatpush1.msra.mxu0 0.0
      %832 = vmatprep.subr.mxu0 0.0
      %833 = vmatpush1.msra.mxu0 0.0
      %834 = vmatprep.subr.mxu0 0.0
      %835 = vmatpush1.msra.mxu0 0.0
      %836 = vmatprep.subr.mxu0 0.0
      %837 = vmatpush1.msra.mxu0 0.0
      %838 = vmatprep.subr.mxu0 0.0
      %839 = vmatpush1.msra.mxu0 0.0
      %840 = vmatprep.subr.mxu0 0.0
      %841 = vmatpush1.msra.mxu0 0.0
      %842 = vmatprep.subr.mxu0 0.0
      %843 = vmatpush1.msra.mxu0 0.0
      %844 = vmatprep.subr.mxu0 0.0
      %845 = vmatpush1.msra.mxu0 0.0
      %846 = vmatprep.subr.mxu0 0.0
      %847 = vmatpush1.msra.mxu0 0.0
      %848 = vmatprep.subr.mxu0 0.0
      %849 = vmatpush1.msra.mxu0 0.0
      %850 = vmatprep.subr.mxu0 0.0
      %851 = vmatpush1.msra.mxu0 0.0
      %852 = vmatprep.subr.mxu0 0.0
      %853 = vmatpush1.msra.mxu0 0.0
      %854 = vmatprep.subr.mxu0 0.0
      %855 = vmatpush1.msra.mxu0 0.0
      %856 = vmatprep.mubr.f32.mxu0 0.0
      %857 = vmatmul.mubr.f32.gmra.mrb[0].mxu0 %v775
      %v858 = vpop.f32.mrb[0].mxu0
      %v859 = vadd.f32 0.0, %v858
      %v860 = vpop.f32.mrb[0].mxu0
      %v861 = vadd.f32 0.0, %v860
      %862 = vmatprep.mubr.f32.mxu0 0.0
      %863 = vmatmul.mubr.f32.gmra.mrb[0].mxu0 %v778
      %v864 = vpop.f32.mrb[0].mxu0
      %v865 = vadd.f32 0.0, %v864
      %v866 = vpop.f32.mrb[0].mxu0
      %v867 = vadd.f32 0.0, %v866
      %868 = vmatprep.mubr.f32.mxu0 0.0
      %869 = vmatmul.mubr.f32.gmra.mrb[0].mxu0 %v781
      %v870 = vpop.f32.mrb[0].mxu0
      %v871 = vadd.f32 0.0, %v870
      %v872 = vpop.f32.mrb[0].mxu0
      %v873 = vadd.f32 0.0, %v872
      %874 = vmatprep.mubr.f32.mxu0 0.0
      %875 = vmatmul.mubr.f32.gmra.mrb[0].mxu0 %v784
      %v876 = vpop.f32.mrb[0].mxu0
      %v877 = vadd.f32 0.0, %v876
      %v878 = vpop.f32.mrb[0].mxu0
      %v879 = vadd.f32 0.0, %v878
      %880 = vdwg.mxu0
      %881 = vmatprep.subr.mxu0 0.0
      %882 = vmatpush1.msra.mxu0 %v790
      %883 = vmatprep.subr.mxu0 0.0
      %884 = vmatpush1.msra.mxu0 0.0
      %885 = vmatprep.subr.mxu0 0.0
      %886 = vmatpush1.msra.mxu0 0.0
      %887 = vmatprep.subr.mxu0 0.0
      %888 = vmatpush1.msra.mxu0 0.0
      %889 = vmatprep.subr.mxu0 0.0
      %890 = vmatpush1.msra.mxu0 0.0
      %891 = vmatprep.subr.mxu0 0.0
      %892 = vmatpush1.msra.mxu0 0.0
      %893 = vmatprep.subr.mxu0 0.0
      %894 = vmatpush1.msra.mxu0 0.0
      %895 = vmatprep.subr.mxu0 0.0
      %896 = vmatpush1.msra.mxu0 0.0
      %897 = vmatprep.subr.mxu0 0.0
      %898 = vmatpush1.msra.mxu0 0.0
      %899 = vmatprep.subr.mxu0 0.0
      %900 = vmatpush1.msra.mxu0 0.0
      %901 = vmatprep.subr.mxu0 0.0
      %902 = vmatpush1.msra.mxu0 0.0
      %903 = vmatprep.subr.mxu0 0.0
      %904 = vmatpush1.msra.mxu0 0.0
      %905 = vmatprep.subr.mxu0 0.0
      %906 = vmatpush1.msra.mxu0 0.0
      %907 = vmatprep.subr.mxu0 0.0
      %908 = vmatpush1.msra.mxu0 0.0
      %909 = vmatprep.subr.mxu0 0.0
      %910 = vmatpush1.msra.mxu0 0.0
      %911 = vmatprep.subr.mxu0 0.0
      %912 = vmatpush1.msra.mxu0 0.0
      %913 = vmatprep.subr.mxu0 0.0
      %914 = vmatpush1.msra.mxu0 0.0
      %915 = vmatprep.subr.mxu0 0.0
      %916 = vmatpush1.msra.mxu0 0.0
      %917 = vmatprep.subr.mxu0 0.0
      %918 = vmatpush1.msra.mxu0 0.0
      %919 = vmatprep.subr.mxu0 0.0
      %920 = vmatpush1.msra.mxu0 0.0
      %921 = vmatprep.subr.mxu0 0.0
      %922 = vmatpush1.msra.mxu0 0.0
      %923 = vmatprep.subr.mxu0 0.0
      %924 = vmatpush1.msra.mxu0 0.0
      %925 = vmatprep.subr.mxu0 0.0
      %926 = vmatpush1.msra.mxu0 0.0
      %927 = vmatprep.subr.mxu0 0.0
      %928 = vmatpush1.msra.mxu0 0.0
      %929 = vmatprep.subr.mxu0 0.0
      %930 = vmatpush1.msra.mxu0 0.0
      %931 = vmatprep.subr.mxu0 0.0
      %932 = vmatpush1.msra.mxu0 0.0
      %933 = vmatprep.subr.mxu0 0.0
      %934 = vmatpush1.msra.mxu0 0.0
      %935 = vmatprep.subr.mxu0 0.0
      %936 = vmatpush1.msra.mxu0 0.0
      %937 = vmatprep.subr.mxu0 0.0
      %938 = vmatpush1.msra.mxu0 0.0
      %939 = vmatprep.subr.mxu0 0.0
      %940 = vmatpush1.msra.mxu0 0.0
      %941 = vmatprep.subr.mxu0 0.0
      %942 = vmatpush1.msra.mxu0 0.0
      %943 = vmatprep.subr.mxu0 0.0
      %944 = vmatpush1.msra.mxu0 0.0
      %945 = vmatprep.mubr.f32.mxu0 0.0
      %946 = vmatmul.mubr.f32.gmra.mrb[0].mxu0 %v775
      %v947 = vpop.f32.mrb[0].mxu0
      %v948 = vadd.f32 0.0, %v947
      %v949 = vpop.f32.mrb[0].mxu0
      %950 = vmatprep.mubr.f32.mxu0 0.0
      %951 = vmatmul.mubr.f32.gmra.mrb[0].mxu0 %v778
      %v952 = vpop.f32.mrb[0].mxu0
      %v953 = vadd.f32 0.0, %v952
      %v954 = vpop.f32.mrb[0].mxu0
      %955 = vmatprep.mubr.f32.mxu0 0.0
      %956 = vmatmul.mubr.f32.gmra.mrb[0].mxu0 %v781
      %v957 = vpop.f32.mrb[0].mxu0
      %v958 = vadd.f32 0.0, %v957
      %v959 = vpop.f32.mrb[0].mxu0
      %960 = vmatprep.mubr.f32.mxu0 0.0
      %961 = vmatmul.mubr.f32.gmra.mrb[0].mxu0 %v784
      %v962 = vpop.f32.mrb[0].mxu0
      %v963 = vadd.f32 0.0, %v962
      %v964 = vpop.f32.mrb[0].mxu0
      %965 = vdwg.mxu0
      %v966 = vadd.f32 %v648, %v859
      %v967 = vadd.f32 %v650, %v861
      %v968 = vadd.f32 %v737, %v948
      %v969 = vadd.f32 %v654, %v865
      %v970 = vadd.f32 %v656, %v867
      %v971 = vadd.f32 %v742, %v953
      %v972 = vadd.f32 %v660, %v871
      %v973 = vadd.f32 %v662, %v873
      %v974 = vadd.f32 %v747, %v958
      %v975 = vadd.f32 %v666, %v877
      %v976 = vadd.f32 %v668, %v879
      %v977 = vadd.f32 %v752, %v963
      %s978 = scalar_lea.vmem %s1, 96
      %v979 = vld [vmem:[%s978] sm:$0xff]
      %v980 = vld [vmem:[%s978 + $0x8] sm:$0xff]
      %v981 = vld [vmem:[%s978 + $0x10] sm:$0xff]
      %v982 = vld [vmem:[%s978 + $0x18] sm:$0xff]
      %v983 = vld [vmem:[%s336] sm:$0x77]
      %v984 = vld [vmem:[%s336 + $0x8] sm:$0x7]
      %v987 = vcombine.high %v983, %v983
      %988 = vrot.lane.b32.xlu0 %v983, 110
      %v989 = vpop.permute.xlu0 %988
      %990 = vrot.lane.b32.xlu0 %v987, 110
      %v991 = vpop.permute.xlu0 %990
      %992 = vrot.lane.b32.xlu0 %v984, 110
      %v993 = vpop.permute.xlu0 %992
      %vm994 = vcmask 900096
      %v995 = vsel %vm994, %v989, %v991
      %v996 = vsel %vm994, %v991, %v993
      %v998 = vsel %vm369, %v979, 0
      %v1001 = vsel %vm369, %v980, 0
      %v1004 = vsel %vm369, %v981, 0
      %v1007 = vsel %vm369, %v982, 0
      %v1009 = vsel %vm382, %v995, 0
      %v1011 = vsel %vm382, %v996, 0
      %v1013 = vsel %vm382, %v993, 0
      %1015 = vmatprep.subr.mxu0 %v1011
      %1016 = vmatpush1.msra.mxu0 %v1009
      %1017 = vmatprep.subr.mxu0 0.0
      %1018 = vmatpush1.msra.mxu0 0.0
      %1019 = vmatprep.subr.mxu0 0.0
      %1020 = vmatpush1.msra.mxu0 0.0
      %1021 = vmatprep.subr.mxu0 0.0
      %1022 = vmatpush1.msra.mxu0 0.0
      %1023 = vmatprep.subr.mxu0 0.0
      %1024 = vmatpush1.msra.mxu0 0.0
      %1025 = vmatprep.subr.mxu0 0.0
      %1026 = vmatpush1.msra.mxu0 0.0
      %1027 = vmatprep.subr.mxu0 0.0
      %1028 = vmatpush1.msra.mxu0 0.0
      %1029 = vmatprep.subr.mxu0 0.0
      %1030 = vmatpush1.msra.mxu0 0.0
      %1031 = vmatprep.subr.mxu0 0.0
      %1032 = vmatpush1.msra.mxu0 0.0
      %1033 = vmatprep.subr.mxu0 0.0
      %1034 = vmatpush1.msra.mxu0 0.0
      %1035 = vmatprep.subr.mxu0 0.0
      %1036 = vmatpush1.msra.mxu0 0.0
      %1037 = vmatprep.subr.mxu0 0.0
      %1038 = vmatpush1.msra.mxu0 0.0
      %1039 = vmatprep.subr.mxu0 0.0
      %1040 = vmatpush1.msra.mxu0 0.0
      %1041 = vmatprep.subr.mxu0 0.0
      %1042 = vmatpush1.msra.mxu0 0.0
      %1043 = vmatprep.subr.mxu0 0.0
      %1044 = vmatpush1.msra.mxu0 0.0
      %1045 = vmatprep.subr.mxu0 0.0
      %1046 = vmatpush1.msra.mxu0 0.0
      %1047 = vmatprep.subr.mxu0 0.0
      %1048 = vmatpush1.msra.mxu0 0.0
      %1049 = vmatprep.subr.mxu0 0.0
      %1050 = vmatpush1.msra.mxu0 0.0
      %1051 = vmatprep.subr.mxu0 0.0
      %1052 = vmatpush1.msra.mxu0 0.0
      %1053 = vmatprep.subr.mxu0 0.0
      %1054 = vmatpush1.msra.mxu0 0.0
      %1055 = vmatprep.subr.mxu0 0.0
      %1056 = vmatpush1.msra.mxu0 0.0
      %1057 = vmatprep.subr.mxu0 0.0
      %1058 = vmatpush1.msra.mxu0 0.0
      %1059 = vmatprep.subr.mxu0 0.0
      %1060 = vmatpush1.msra.mxu0 0.0
      %1061 = vmatprep.subr.mxu0 0.0
      %1062 = vmatpush1.msra.mxu0 0.0
      %1063 = vmatprep.subr.mxu0 0.0
      %1064 = vmatpush1.msra.mxu0 0.0
      %1065 = vmatprep.subr.mxu0 0.0
      %1066 = vmatpush1.msra.mxu0 0.0
      %1067 = vmatprep.subr.mxu0 0.0
      %1068 = vmatpush1.msra.mxu0 0.0
      %1069 = vmatprep.subr.mxu0 0.0
      %1070 = vmatpush1.msra.mxu0 0.0
      %1071 = vmatprep.subr.mxu0 0.0
      %1072 = vmatpush1.msra.mxu0 0.0
      %1073 = vmatprep.subr.mxu0 0.0
      %1074 = vmatpush1.msra.mxu0 0.0
      %1075 = vmatprep.subr.mxu0 0.0
      %1076 = vmatpush1.msra.mxu0 0.0
      %1077 = vmatprep.subr.mxu0 0.0
      %1078 = vmatpush1.msra.mxu0 0.0
      %1079 = vmatprep.mubr.f32.mxu0 0.0
      %1080 = vmatmul.mubr.f32.gmra.mrb[0].mxu0 %v998
      %v1081 = vpop.f32.mrb[0].mxu0
      %v1082 = vadd.f32 0.0, %v1081
      %v1083 = vpop.f32.mrb[0].mxu0
      %v1084 = vadd.f32 0.0, %v1083
      %1085 = vmatprep.mubr.f32.mxu0 0.0
      %1086 = vmatmul.mubr.f32.gmra.mrb[0].mxu0 %v1001
      %v1087 = vpop.f32.mrb[0].mxu0
      %v1088 = vadd.f32 0.0, %v1087
      %v1089 = vpop.f32.mrb[0].mxu0
      %v1090 = vadd.f32 0.0, %v1089
      %1091 = vmatprep.mubr.f32.mxu0 0.0
      %1092 = vmatmul.mubr.f32.gmra.mrb[0].mxu0 %v1004
      %v1093 = vpop.f32.mrb[0].mxu0
      %v1094 = vadd.f32 0.0, %v1093
      %v1095 = vpop.f32.mrb[0].mxu0
      %v1096 = vadd.f32 0.0, %v1095
      %1097 = vmatprep.mubr.f32.mxu0 0.0
      %1098 = vmatmul.mubr.f32.gmra.mrb[0].mxu0 %v1007
      %v1099 = vpop.f32.mrb[0].mxu0
      %v1100 = vadd.f32 0.0, %v1099
      %v1101 = vpop.f32.mrb[0].mxu0
      %v1102 = vadd.f32 0.0, %v1101
      %1103 = vdwg.mxu0
      %1104 = vmatprep.subr.mxu0 0.0
      %1105 = vmatpush1.msra.mxu0 %v1013
      %1106 = vmatprep.subr.mxu0 0.0
      %1107 = vmatpush1.msra.mxu0 0.0
      %1108 = vmatprep.subr.mxu0 0.0
      %1109 = vmatpush1.msra.mxu0 0.0
      %1110 = vmatprep.subr.mxu0 0.0
      %1111 = vmatpush1.msra.mxu0 0.0
      %1112 = vmatprep.subr.mxu0 0.0
      %1113 = vmatpush1.msra.mxu0 0.0
      %1114 = vmatprep.subr.mxu0 0.0
      %1115 = vmatpush1.msra.mxu0 0.0
      %1116 = vmatprep.subr.mxu0 0.0
      %1117 = vmatpush1.msra.mxu0 0.0
      %1118 = vmatprep.subr.mxu0 0.0
      %1119 = vmatpush1.msra.mxu0 0.0
      %1120 = vmatprep.subr.mxu0 0.0
      %1121 = vmatpush1.msra.mxu0 0.0
      %1122 = vmatprep.subr.mxu0 0.0
      %1123 = vmatpush1.msra.mxu0 0.0
      %1124 = vmatprep.subr.mxu0 0.0
      %1125 = vmatpush1.msra.mxu0 0.0
      %1126 = vmatprep.subr.mxu0 0.0
      %1127 = vmatpush1.msra.mxu0 0.0
      %1128 = vmatprep.subr.mxu0 0.0
      %1129 = vmatpush1.msra.mxu0 0.0
      %1130 = vmatprep.subr.mxu0 0.0
      %1131 = vmatpush1.msra.mxu0 0.0
      %1132 = vmatprep.subr.mxu0 0.0
      %1133 = vmatpush1.msra.mxu0 0.0
      %1134 = vmatprep.subr.mxu0 0.0
      %1135 = vmatpush1.msra.mxu0 0.0
      %1136 = vmatprep.subr.mxu0 0.0
      %1137 = vmatpush1.msra.mxu0 0.0
      %1138 = vmatprep.subr.mxu0 0.0
      %1139 = vmatpush1.msra.mxu0 0.0
      %1140 = vmatprep.subr.mxu0 0.0
      %1141 = vmatpush1.msra.mxu0 0.0
      %1142 = vmatprep.subr.mxu0 0.0
      %1143 = vmatpush1.msra.mxu0 0.0
      %1144 = vmatprep.subr.mxu0 0.0
      %1145 = vmatpush1.msra.mxu0 0.0
      %1146 = vmatprep.subr.mxu0 0.0
      %1147 = vmatpush1.msra.mxu0 0.0
      %1148 = vmatprep.subr.mxu0 0.0
      %1149 = vmatpush1.msra.mxu0 0.0
      %1150 = vmatprep.subr.mxu0 0.0
      %1151 = vmatpush1.msra.mxu0 0.0
      %1152 = vmatprep.subr.mxu0 0.0
      %1153 = vmatpush1.msra.mxu0 0.0
      %1154 = vmatprep.subr.mxu0 0.0
      %1155 = vmatpush1.msra.mxu0 0.0
      %1156 = vmatprep.subr.mxu0 0.0
      %1157 = vmatpush1.msra.mxu0 0.0
      %1158 = vmatprep.subr.mxu0 0.0
      %1159 = vmatpush1.msra.mxu0 0.0
      %1160 = vmatprep.subr.mxu0 0.0
      %1161 = vmatpush1.msra.mxu0 0.0
      %1162 = vmatprep.subr.mxu0 0.0
      %1163 = vmatpush1.msra.mxu0 0.0
      %1164 = vmatprep.subr.mxu0 0.0
      %1165 = vmatpush1.msra.mxu0 0.0
      %1166 = vmatprep.subr.mxu0 0.0
      %1167 = vmatpush1.msra.mxu0 0.0
      %1168 = vmatprep.mubr.f32.mxu0 0.0
      %1169 = vmatmul.mubr.f32.gmra.mrb[0].mxu0 %v998
      %v1170 = vpop.f32.mrb[0].mxu0
      %v1171 = vadd.f32 0.0, %v1170
      %v1172 = vpop.f32.mrb[0].mxu0
      %1173 = vmatprep.mubr.f32.mxu0 0.0
      %1174 = vmatmul.mubr.f32.gmra.mrb[0].mxu0 %v1001
      %v1175 = vpop.f32.mrb[0].mxu0
      %v1176 = vadd.f32 0.0, %v1175
      %v1177 = vpop.f32.mrb[0].mxu0
      %1178 = vmatprep.mubr.f32.mxu0 0.0
      %1179 = vmatmul.mubr.f32.gmra.mrb[0].mxu0 %v1004
      %v1180 = vpop.f32.mrb[0].mxu0
      %v1181 = vadd.f32 0.0, %v1180
      %v1182 = vpop.f32.mrb[0].mxu0
      %1183 = vmatprep.mubr.f32.mxu0 0.0
      %1184 = vmatmul.mubr.f32.gmra.mrb[0].mxu0 %v1007
      %v1185 = vpop.f32.mrb[0].mxu0
      %v1186 = vadd.f32 0.0, %v1185
      %v1187 = vpop.f32.mrb[0].mxu0
      %1188 = vdwg.mxu0
      %v1189 = vadd.f32 %v966, %v1082
      %v1190 = vadd.f32 %v967, %v1084
      %v1191 = vadd.f32 %v968, %v1171
      %v1192 = vadd.f32 %v969, %v1088
      %v1193 = vadd.f32 %v970, %v1090
      %v1194 = vadd.f32 %v971, %v1176
      %v1195 = vadd.f32 %v972, %v1094
      %v1196 = vadd.f32 %v973, %v1096
      %v1197 = vadd.f32 %v974, %v1181
      %v1198 = vadd.f32 %v975, %v1100
      %v1199 = vadd.f32 %v976, %v1102
      %v1200 = vadd.f32 %v977, %v1186
      %s1201 = scalar_lea.vmem %s1, 128
      %v1202 = vld [vmem:[%s1201] sm:$0xff]
      %v1203 = vld [vmem:[%s1201 + $0x8] sm:$0xff]
      %v1204 = vld [vmem:[%s1201 + $0x10] sm:$0xff]
      %v1205 = vld [vmem:[%s1201 + $0x18] sm:$0xff]
      %v1206 = vld [vmem:[%s336] sm:$0x77]
      %v1207 = vld [vmem:[%s336 + $0x8] sm:$0x7]
      %v1210 = vcombine.high %v1206, %v1206
      %1211 = vrot.lane.b32.xlu0 %v1206, 109
      %v1212 = vpop.permute.xlu0 %1211
      %1213 = vrot.lane.b32.xlu0 %v1210, 109
      %v1214 = vpop.permute.xlu0 %1213
      %1215 = vrot.lane.b32.xlu0 %v1207, 109
      %v1216 = vpop.permute.xlu0 %1215
      %vm1217 = vcmask 891904
      %v1218 = vsel %vm1217, %v1212, %v1214
      %v1219 = vsel %vm1217, %v1214, %v1216
      %v1221 = vsel %vm369, %v1202, 0
      %v1224 = vsel %vm369, %v1203, 0
      %v1227 = vsel %vm369, %v1204, 0
      %v1230 = vsel %vm369, %v1205, 0
      %v1232 = vsel %vm382, %v1218, 0
      %v1234 = vsel %vm382, %v1219, 0
      %v1236 = vsel %vm382, %v1216, 0
      %1238 = vmatprep.subr.mxu0 %v1234
      %1239 = vmatpush1.msra.mxu0 %v1232
      %1240 = vmatprep.subr.mxu0 0.0
      %1241 = vmatpush1.msra.mxu0 0.0
      %1242 = vmatprep.subr.mxu0 0.0
      %1243 = vmatpush1.msra.mxu0 0.0
      %1244 = vmatprep.subr.mxu0 0.0
      %1245 = vmatpush1.msra.mxu0 0.0
      %1246 = vmatprep.subr.mxu0 0.0
      %1247 = vmatpush1.msra.mxu0 0.0
      %1248 = vmatprep.subr.mxu0 0.0
      %1249 = vmatpush1.msra.mxu0 0.0
      %1250 = vmatprep.subr.mxu0 0.0
      %1251 = vmatpush1.msra.mxu0 0.0
      %1252 = vmatprep.subr.mxu0 0.0
      %1253 = vmatpush1.msra.mxu0 0.0
      %1254 = vmatprep.subr.mxu0 0.0
      %1255 = vmatpush1.msra.mxu0 0.0
      %1256 = vmatprep.subr.mxu0 0.0
      %1257 = vmatpush1.msra.mxu0 0.0
      %1258 = vmatprep.subr.mxu0 0.0
      %1259 = vmatpush1.msra.mxu0 0.0
      %1260 = vmatprep.subr.mxu0 0.0
      %1261 = vmatpush1.msra.mxu0 0.0
      %1262 = vmatprep.subr.mxu0 0.0
      %1263 = vmatpush1.msra.mxu0 0.0
      %1264 = vmatprep.subr.mxu0 0.0
      %1265 = vmatpush1.msra.mxu0 0.0
      %1266 = vmatprep.subr.mxu0 0.0
      %1267 = vmatpush1.msra.mxu0 0.0
      %1268 = vmatprep.subr.mxu0 0.0
      %1269 = vmatpush1.msra.mxu0 0.0
      %1270 = vmatprep.subr.mxu0 0.0
      %1271 = vmatpush1.msra.mxu0 0.0
      %1272 = vmatprep.subr.mxu0 0.0
      %1273 = vmatpush1.msra.mxu0 0.0
      %1274 = vmatprep.subr.mxu0 0.0
      %1275 = vmatpush1.msra.mxu0 0.0
      %1276 = vmatprep.subr.mxu0 0.0
      %1277 = vmatpush1.msra.mxu0 0.0
      %1278 = vmatprep.subr.mxu0 0.0
      %1279 = vmatpush1.msra.mxu0 0.0
      %1280 = vmatprep.subr.mxu0 0.0
      %1281 = vmatpush1.msra.mxu0 0.0
      %1282 = vmatprep.subr.mxu0 0.0
      %1283 = vmatpush1.msra.mxu0 0.0
      %1284 = vmatprep.subr.mxu0 0.0
      %1285 = vmatpush1.msra.mxu0 0.0
      %1286 = vmatprep.subr.mxu0 0.0
      %1287 = vmatpush1.msra.mxu0 0.0
      %1288 = vmatprep.subr.mxu0 0.0
      %1289 = vmatpush1.msra.mxu0 0.0
      %1290 = vmatprep.subr.mxu0 0.0
      %1291 = vmatpush1.msra.mxu0 0.0
      %1292 = vmatprep.subr.mxu0 0.0
      %1293 = vmatpush1.msra.mxu0 0.0
      %1294 = vmatprep.subr.mxu0 0.0
      %1295 = vmatpush1.msra.mxu0 0.0
      %1296 = vmatprep.subr.mxu0 0.0
      %1297 = vmatpush1.msra.mxu0 0.0
      %1298 = vmatprep.subr.mxu0 0.0
      %1299 = vmatpush1.msra.mxu0 0.0
      %1300 = vmatprep.subr.mxu0 0.0
      %1301 = vmatpush1.msra.mxu0 0.0
      %1302 = vmatprep.mubr.f32.mxu0 0.0
      %1303 = vmatmul.mubr.f32.gmra.mrb[0].mxu0 %v1221
      %v1304 = vpop.f32.mrb[0].mxu0
      %v1305 = vadd.f32 0.0, %v1304
      %v1306 = vpop.f32.mrb[0].mxu0
      %v1307 = vadd.f32 0.0, %v1306
      %1308 = vmatprep.mubr.f32.mxu0 0.0
      %1309 = vmatmul.mubr.f32.gmra.mrb[0].mxu0 %v1224
      %v1310 = vpop.f32.mrb[0].mxu0
      %v1311 = vadd.f32 0.0, %v1310
      %v1312 = vpop.f32.mrb[0].mxu0
      %v1313 = vadd.f32 0.0, %v1312
      %1314 = vmatprep.mubr.f32.mxu0 0.0
      %1315 = vmatmul.mubr.f32.gmra.mrb[0].mxu0 %v1227
      %v1316 = vpop.f32.mrb[0].mxu0
      %v1317 = vadd.f32 0.0, %v1316
      %v1318 = vpop.f32.mrb[0].mxu0
      %v1319 = vadd.f32 0.0, %v1318
      %1320 = vmatprep.mubr.f32.mxu0 0.0
      %1321 = vmatmul.mubr.f32.gmra.mrb[0].mxu0 %v1230
      %v1322 = vpop.f32.mrb[0].mxu0
      %v1323 = vadd.f32 0.0, %v1322
      %v1324 = vpop.f32.mrb[0].mxu0
      %v1325 = vadd.f32 0.0, %v1324
      %1326 = vdwg.mxu0
      %1327 = vmatprep.subr.mxu0 0.0
      %1328 = vmatpush1.msra.mxu0 %v1236
      %1329 = vmatprep.subr.mxu0 0.0
      %1330 = vmatpush1.msra.mxu0 0.0
      %1331 = vmatprep.subr.mxu0 0.0
      %1332 = vmatpush1.msra.mxu0 0.0
      %1333 = vmatprep.subr.mxu0 0.0
      %1334 = vmatpush1.msra.mxu0 0.0
      %1335 = vmatprep.subr.mxu0 0.0
      %1336 = vmatpush1.msra.mxu0 0.0
      %1337 = vmatprep.subr.mxu0 0.0
      %1338 = vmatpush1.msra.mxu0 0.0
      %1339 = vmatprep.subr.mxu0 0.0
      %1340 = vmatpush1.msra.mxu0 0.0
      %1341 = vmatprep.subr.mxu0 0.0
      %1342 = vmatpush1.msra.mxu0 0.0
      %1343 = vmatprep.subr.mxu0 0.0
      %1344 = vmatpush1.msra.mxu0 0.0
      %1345 = vmatprep.subr.mxu0 0.0
      %1346 = vmatpush1.msra.mxu0 0.0
      %1347 = vmatprep.subr.mxu0 0.0
      %1348 = vmatpush1.msra.mxu0 0.0
      %1349 = vmatprep.subr.mxu0 0.0
      %1350 = vmatpush1.msra.mxu0 0.0
      %1351 = vmatprep.subr.mxu0 0.0
      %1352 = vmatpush1.msra.mxu0 0.0
      %1353 = vmatprep.subr.mxu0 0.0
      %1354 = vmatpush1.msra.mxu0 0.0
      %1355 = vmatprep.subr.mxu0 0.0
      %1356 = vmatpush1.msra.mxu0 0.0
      %1357 = vmatprep.subr.mxu0 0.0
      %1358 = vmatpush1.msra.mxu0 0.0
      %1359 = vmatprep.subr.mxu0 0.0
      %1360 = vmatpush1.msra.mxu0 0.0
      %1361 = vmatprep.subr.mxu0 0.0
      %1362 = vmatpush1.msra.mxu0 0.0
      %1363 = vmatprep.subr.mxu0 0.0
      %1364 = vmatpush1.msra.mxu0 0.0
      %1365 = vmatprep.subr.mxu0 0.0
      %1366 = vmatpush1.msra.mxu0 0.0
      %1367 = vmatprep.subr.mxu0 0.0
      %1368 = vmatpush1.msra.mxu0 0.0
      %1369 = vmatprep.subr.mxu0 0.0
      %1370 = vmatpush1.msra.mxu0 0.0
      %1371 = vmatprep.subr.mxu0 0.0
      %1372 = vmatpush1.msra.mxu0 0.0
      %1373 = vmatprep.subr.mxu0 0.0
      %1374 = vmatpush1.msra.mxu0 0.0
      %1375 = vmatprep.subr.mxu0 0.0
      %1376 = vmatpush1.msra.mxu0 0.0
      %1377 = vmatprep.subr.mxu0 0.0
      %1378 = vmatpush1.msra.mxu0 0.0
      %1379 = vmatprep.subr.mxu0 0.0
      %1380 = vmatpush1.msra.mxu0 0.0
      %1381 = vmatprep.subr.mxu0 0.0
      %1382 = vmatpush1.msra.mxu0 0.0
      %1383 = vmatprep.subr.mxu0 0.0
      %1384 = vmatpush1.msra.mxu0 0.0
      %1385 = vmatprep.subr.mxu0 0.0
      %1386 = vmatpush1.msra.mxu0 0.0
      %1387 = vmatprep.subr.mxu0 0.0
      %1388 = vmatpush1.msra.mxu0 0.0
      %1389 = vmatprep.subr.mxu0 0.0
      %1390 = vmatpush1.msra.mxu0 0.0
      %1391 = vmatprep.mubr.f32.mxu0 0.0
      %1392 = vmatmul.mubr.f32.gmra.mrb[0].mxu0 %v1221
      %v1393 = vpop.f32.mrb[0].mxu0
      %v1394 = vadd.f32 0.0, %v1393
      %v1395 = vpop.f32.mrb[0].mxu0
      %1396 = vmatprep.mubr.f32.mxu0 0.0
      %1397 = vmatmul.mubr.f32.gmra.mrb[0].mxu0 %v1224
      %v1398 = vpop.f32.mrb[0].mxu0
      %v1399 = vadd.f32 0.0, %v1398
      %v1400 = vpop.f32.mrb[0].mxu0
      %1401 = vmatprep.mubr.f32.mxu0 0.0
      %1402 = vmatmul.mubr.f32.gmra.mrb[0].mxu0 %v1227
      %v1403 = vpop.f32.mrb[0].mxu0
      %v1404 = vadd.f32 0.0, %v1403
      %v1405 = vpop.f32.mrb[0].mxu0
      %1406 = vmatprep.mubr.f32.mxu0 0.0
      %1407 = vmatmul.mubr.f32.gmra.mrb[0].mxu0 %v1230
      %v1408 = vpop.f32.mrb[0].mxu0
      %v1409 = vadd.f32 0.0, %v1408
      %v1410 = vpop.f32.mrb[0].mxu0
      %1411 = vdwg.mxu0
      %v1412 = vadd.f32 %v1189, %v1305
      %v1413 = vadd.f32 %v1190, %v1307
      %v1414 = vadd.f32 %v1191, %v1394
      %v1415 = vadd.f32 %v1192, %v1311
      %v1416 = vadd.f32 %v1193, %v1313
      %v1417 = vadd.f32 %v1194, %v1399
      %v1418 = vadd.f32 %v1195, %v1317
      %v1419 = vadd.f32 %v1196, %v1319
      %v1420 = vadd.f32 %v1197, %v1404
      %v1421 = vadd.f32 %v1198, %v1323
      %v1422 = vadd.f32 %v1199, %v1325
      %v1423 = vadd.f32 %v1200, %v1409
      %s1424 = scalar_lea.vmem %s1, 160
      %v1425 = vld [vmem:[%s1424] sm:$0xff]
      %v1426 = vld [vmem:[%s1424 + $0x8] sm:$0xff]
      %v1427 = vld [vmem:[%s1424 + $0x10] sm:$0xff]
      %v1428 = vld [vmem:[%s1424 + $0x18] sm:$0xff]
      %v1429 = vld [vmem:[%s336] sm:$0x77]
      %v1430 = vld [vmem:[%s336 + $0x8] sm:$0x7]
      %v1433 = vcombine.high %v1429, %v1429
      %1434 = vrot.lane.b32.xlu0 %v1429, 108
      %v1435 = vpop.permute.xlu0 %1434
      %1436 = vrot.lane.b32.xlu0 %v1433, 108
      %v1437 = vpop.permute.xlu0 %1436
      %1438 = vrot.lane.b32.xlu0 %v1430, 108
      %v1439 = vpop.permute.xlu0 %1438
      %vm1440 = vcmask 883712
      %v1441 = vsel %vm1440, %v1435, %v1437
      %v1442 = vsel %vm1440, %v1437, %v1439
      %v1444 = vsel %vm369, %v1425, 0
      %v1447 = vsel %vm369, %v1426, 0
      %v1450 = vsel %vm369, %v1427, 0
      %v1453 = vsel %vm369, %v1428, 0
      %v1455 = vsel %vm382, %v1441, 0
      %v1457 = vsel %vm382, %v1442, 0
      %v1459 = vsel %vm382, %v1439, 0
      %1461 = vmatprep.subr.mxu0 %v1457
      %1462 = vmatpush1.msra.mxu0 %v1455
      %1463 = vmatprep.subr.mxu0 0.0
      %1464 = vmatpush1.msra.mxu0 0.0
      %1465 = vmatprep.subr.mxu0 0.0
      %1466 = vmatpush1.msra.mxu0 0.0
      %1467 = vmatprep.subr.mxu0 0.0
      %1468 = vmatpush1.msra.mxu0 0.0
      %1469 = vmatprep.subr.mxu0 0.0
      %1470 = vmatpush1.msra.mxu0 0.0
      %1471 = vmatprep.subr.mxu0 0.0
      %1472 = vmatpush1.msra.mxu0 0.0
      %1473 = vmatprep.subr.mxu0 0.0
      %1474 = vmatpush1.msra.mxu0 0.0
      %1475 = vmatprep.subr.mxu0 0.0
      %1476 = vmatpush1.msra.mxu0 0.0
      %1477 = vmatprep.subr.mxu0 0.0
      %1478 = vmatpush1.msra.mxu0 0.0
      %1479 = vmatprep.subr.mxu0 0.0
      %1480 = vmatpush1.msra.mxu0 0.0
      %1481 = vmatprep.subr.mxu0 0.0
      %1482 = vmatpush1.msra.mxu0 0.0
      %1483 = vmatprep.subr.mxu0 0.0
      %1484 = vmatpush1.msra.mxu0 0.0
      %1485 = vmatprep.subr.mxu0 0.0
      %1486 = vmatpush1.msra.mxu0 0.0
      %1487 = vmatprep.subr.mxu0 0.0
      %1488 = vmatpush1.msra.mxu0 0.0
      %1489 = vmatprep.subr.mxu0 0.0
      %1490 = vmatpush1.msra.mxu0 0.0
      %1491 = vmatprep.subr.mxu0 0.0
      %1492 = vmatpush1.msra.mxu0 0.0
      %1493 = vmatprep.subr.mxu0 0.0
      %1494 = vmatpush1.msra.mxu0 0.0
      %1495 = vmatprep.subr.mxu0 0.0
      %1496 = vmatpush1.msra.mxu0 0.0
      %1497 = vmatprep.subr.mxu0 0.0
      %1498 = vmatpush1.msra.mxu0 0.0
      %1499 = vmatprep.subr.mxu0 0.0
      %1500 = vmatpush1.msra.mxu0 0.0
      %1501 = vmatprep.subr.mxu0 0.0
      %1502 = vmatpush1.msra.mxu0 0.0
      %1503 = vmatprep.subr.mxu0 0.0
      %1504 = vmatpush1.msra.mxu0 0.0
      %1505 = vmatprep.subr.mxu0 0.0
      %1506 = vmatpush1.msra.mxu0 0.0
      %1507 = vmatprep.subr.mxu0 0.0
      %1508 = vmatpush1.msra.mxu0 0.0
      %1509 = vmatprep.subr.mxu0 0.0
      %1510 = vmatpush1.msra.mxu0 0.0
      %1511 = vmatprep.subr.mxu0 0.0
      %1512 = vmatpush1.msra.mxu0 0.0
      %1513 = vmatprep.subr.mxu0 0.0
      %1514 = vmatpush1.msra.mxu0 0.0
      %1515 = vmatprep.subr.mxu0 0.0
      %1516 = vmatpush1.msra.mxu0 0.0
      %1517 = vmatprep.subr.mxu0 0.0
      %1518 = vmatpush1.msra.mxu0 0.0
      %1519 = vmatprep.subr.mxu0 0.0
      %1520 = vmatpush1.msra.mxu0 0.0
      %1521 = vmatprep.subr.mxu0 0.0
      %1522 = vmatpush1.msra.mxu0 0.0
      %1523 = vmatprep.subr.mxu0 0.0
      %1524 = vmatpush1.msra.mxu0 0.0
      %1525 = vmatprep.mubr.f32.mxu0 0.0
      %1526 = vmatmul.mubr.f32.gmra.mrb[0].mxu0 %v1444
      %v1527 = vpop.f32.mrb[0].mxu0
      %v1528 = vadd.f32 0.0, %v1527
      %v1529 = vpop.f32.mrb[0].mxu0
      %v1530 = vadd.f32 0.0, %v1529
      %1531 = vmatprep.mubr.f32.mxu0 0.0
      %1532 = vmatmul.mubr.f32.gmra.mrb[0].mxu0 %v1447
      %v1533 = vpop.f32.mrb[0].mxu0
      %v1534 = vadd.f32 0.0, %v1533
      %v1535 = vpop.f32.mrb[0].mxu0
      %v1536 = vadd.f32 0.0, %v1535
      %1537 = vmatprep.mubr.f32.mxu0 0.0
      %1538 = vmatmul.mubr.f32.gmra.mrb[0].mxu0 %v1450
      %v1539 = vpop.f32.mrb[0].mxu0
      %v1540 = vadd.f32 0.0, %v1539
      %v1541 = vpop.f32.mrb[0].mxu0
      %v1542 = vadd.f32 0.0, %v1541
      %1543 = vmatprep.mubr.f32.mxu0 0.0
      %1544 = vmatmul.mubr.f32.gmra.mrb[0].mxu0 %v1453
      %v1545 = vpop.f32.mrb[0].mxu0
      %v1546 = vadd.f32 0.0, %v1545
      %v1547 = vpop.f32.mrb[0].mxu0
      %v1548 = vadd.f32 0.0, %v1547
      %1549 = vdwg.mxu0
      %1550 = vmatprep.subr.mxu0 0.0
      %1551 = vmatpush1.msra.mxu0 %v1459
      %1552 = vmatprep.subr.mxu0 0.0
      %1553 = vmatpush1.msra.mxu0 0.0
      %1554 = vmatprep.subr.mxu0 0.0
      %1555 = vmatpush1.msra.mxu0 0.0
      %1556 = vmatprep.subr.mxu0 0.0
      %1557 = vmatpush1.msra.mxu0 0.0
      %1558 = vmatprep.subr.mxu0 0.0
      %1559 = vmatpush1.msra.mxu0 0.0
      %1560 = vmatprep.subr.mxu0 0.0
      %1561 = vmatpush1.msra.mxu0 0.0
      %1562 = vmatprep.subr.mxu0 0.0
      %1563 = vmatpush1.msra.mxu0 0.0
      %1564 = vmatprep.subr.mxu0 0.0
      %1565 = vmatpush1.msra.mxu0 0.0
      %1566 = vmatprep.subr.mxu0 0.0
      %1567 = vmatpush1.msra.mxu0 0.0
      %1568 = vmatprep.subr.mxu0 0.0
      %1569 = vmatpush1.msra.mxu0 0.0
      %1570 = vmatprep.subr.mxu0 0.0
      %1571 = vmatpush1.msra.mxu0 0.0
      %1572 = vmatprep.subr.mxu0 0.0
      %1573 = vmatpush1.msra.mxu0 0.0
      %1574 = vmatprep.subr.mxu0 0.0
      %1575 = vmatpush1.msra.mxu0 0.0
      %1576 = vmatprep.subr.mxu0 0.0
      %1577 = vmatpush1.msra.mxu0 0.0
      %1578 = vmatprep.subr.mxu0 0.0
      %1579 = vmatpush1.msra.mxu0 0.0
      %1580 = vmatprep.subr.mxu0 0.0
      %1581 = vmatpush1.msra.mxu0 0.0
      %1582 = vmatprep.subr.mxu0 0.0
      %1583 = vmatpush1.msra.mxu0 0.0
      %1584 = vmatprep.subr.mxu0 0.0
      %1585 = vmatpush1.msra.mxu0 0.0
      %1586 = vmatprep.subr.mxu0 0.0
      %1587 = vmatpush1.msra.mxu0 0.0
      %1588 = vmatprep.subr.mxu0 0.0
      %1589 = vmatpush1.msra.mxu0 0.0
      %1590 = vmatprep.subr.mxu0 0.0
      %1591 = vmatpush1.msra.mxu0 0.0
      %1592 = vmatprep.subr.mxu0 0.0
      %1593 = vmatpush1.msra.mxu0 0.0
      %1594 = vmatprep.subr.mxu0 0.0
      %1595 = vmatpush1.msra.mxu0 0.0
      %1596 = vmatprep.subr.mxu0 0.0
      %1597 = vmatpush1.msra.mxu0 0.0
      %1598 = vmatprep.subr.mxu0 0.0
      %1599 = vmatpush1.msra.mxu0 0.0
      %1600 = vmatprep.subr.mxu0 0.0
      %1601 = vmatpush1.msra.mxu0 0.0
      %1602 = vmatprep.subr.mxu0 0.0
      %1603 = vmatpush1.msra.mxu0 0.0
      %1604 = vmatprep.subr.mxu0 0.0
      %1605 = vmatpush1.msra.mxu0 0.0
      %1606 = vmatprep.subr.mxu0 0.0
      %1607 = vmatpush1.msra.mxu0 0.0
      %1608 = vmatprep.subr.mxu0 0.0
      %1609 = vmatpush1.msra.mxu0 0.0
      %1610 = vmatprep.subr.mxu0 0.0
      %1611 = vmatpush1.msra.mxu0 0.0
      %1612 = vmatprep.subr.mxu0 0.0
      %1613 = vmatpush1.msra.mxu0 0.0
      %1614 = vmatprep.mubr.f32.mxu0 0.0
      %1615 = vmatmul.mubr.f32.gmra.mrb[0].mxu0 %v1444
      %v1616 = vpop.f32.mrb[0].mxu0
      %v1617 = vadd.f32 0.0, %v1616
      %v1618 = vpop.f32.mrb[0].mxu0
      %1619 = vmatprep.mubr.f32.mxu0 0.0
      %1620 = vmatmul.mubr.f32.gmra.mrb[0].mxu0 %v1447
      %v1621 = vpop.f32.mrb[0].mxu0
      %v1622 = vadd.f32 0.0, %v1621
      %v1623 = vpop.f32.mrb[0].mxu0
      %1624 = vmatprep.mubr.f32.mxu0 0.0
      %1625 = vmatmul.mubr.f32.gmra.mrb[0].mxu0 %v1450
      %v1626 = vpop.f32.mrb[0].mxu0
      %v1627 = vadd.f32 0.0, %v1626
      %v1628 = vpop.f32.mrb[0].mxu0
      %1629 = vmatprep.mubr.f32.mxu0 0.0
      %1630 = vmatmul.mubr.f32.gmra.mrb[0].mxu0 %v1453
      %v1631 = vpop.f32.mrb[0].mxu0
      %v1632 = vadd.f32 0.0, %v1631
      %v1633 = vpop.f32.mrb[0].mxu0
      %1634 = vdwg.mxu0
      %v1635 = vadd.f32 %v1412, %v1528
      %v1636 = vadd.f32 %v1413, %v1530
      %v1637 = vadd.f32 %v1414, %v1617
      %v1638 = vadd.f32 %v1415, %v1534
      %v1639 = vadd.f32 %v1416, %v1536
      %v1640 = vadd.f32 %v1417, %v1622
      %v1641 = vadd.f32 %v1418, %v1540
      %v1642 = vadd.f32 %v1419, %v1542
      %v1643 = vadd.f32 %v1420, %v1627
      %v1644 = vadd.f32 %v1421, %v1546
      %v1645 = vadd.f32 %v1422, %v1548
      %v1646 = vadd.f32 %v1423, %v1632
      %s1647 = scalar_lea.vmem %s1, 192
      %v1648 = vld [vmem:[%s1647] sm:$0xff]
      %v1649 = vld [vmem:[%s1647 + $0x8] sm:$0xff]
      %v1650 = vld [vmem:[%s1647 + $0x10] sm:$0xff]
      %v1651 = vld [vmem:[%s1647 + $0x18] sm:$0xff]
      %v1652 = vld [vmem:[%s336] sm:$0x77]
      %v1653 = vld [vmem:[%s336 + $0x8] sm:$0x7]
      %v1656 = vcombine.high %v1652, %v1652
      %1657 = vrot.lane.b32.xlu0 %v1652, 92
      %v1658 = vpop.permute.xlu0 %1657
      %1659 = vrot.lane.b32.xlu0 %v1656, 92
      %v1660 = vpop.permute.xlu0 %1659
      %1661 = vrot.lane.b32.xlu0 %v1653, 92
      %v1662 = vpop.permute.xlu0 %1661
      %vm1663 = vcmask 752640
      %v1664 = vsel %vm1663, %v1658, %v1660
      %v1665 = vsel %vm1663, %v1660, %v1662
      %v1667 = vsel %vm369, %v1648, 0
      %v1670 = vsel %vm369, %v1649, 0
      %v1673 = vsel %vm369, %v1650, 0
      %v1676 = vsel %vm369, %v1651, 0
      %v1678 = vsel %vm382, %v1664, 0
      %v1680 = vsel %vm382, %v1665, 0
      %v1682 = vsel %vm382, %v1662, 0
      %1684 = vmatprep.subr.mxu0 %v1680
      %1685 = vmatpush1.msra.mxu0 %v1678
      %1686 = vmatprep.subr.mxu0 0.0
      %1687 = vmatpush1.msra.mxu0 0.0
      %1688 = vmatprep.subr.mxu0 0.0
      %1689 = vmatpush1.msra.mxu0 0.0
      %1690 = vmatprep.subr.mxu0 0.0
      %1691 = vmatpush1.msra.mxu0 0.0
      %1692 = vmatprep.subr.mxu0 0.0
      %1693 = vmatpush1.msra.mxu0 0.0
      %1694 = vmatprep.subr.mxu0 0.0
      %1695 = vmatpush1.msra.mxu0 0.0
      %1696 = vmatprep.subr.mxu0 0.0
      %1697 = vmatpush1.msra.mxu0 0.0
      %1698 = vmatprep.subr.mxu0 0.0
      %1699 = vmatpush1.msra.mxu0 0.0
      %1700 = vmatprep.subr.mxu0 0.0
      %1701 = vmatpush1.msra.mxu0 0.0
      %1702 = vmatprep.subr.mxu0 0.0
      %1703 = vmatpush1.msra.mxu0 0.0
      %1704 = vmatprep.subr.mxu0 0.0
      %1705 = vmatpush1.msra.mxu0 0.0
      %1706 = vmatprep.subr.mxu0 0.0
      %1707 = vmatpush1.msra.mxu0 0.0
      %1708 = vmatprep.subr.mxu0 0.0
      %1709 = vmatpush1.msra.mxu0 0.0
      %1710 = vmatprep.subr.mxu0 0.0
      %1711 = vmatpush1.msra.mxu0 0.0
      %1712 = vmatprep.subr.mxu0 0.0
      %1713 = vmatpush1.msra.mxu0 0.0
      %1714 = vmatprep.subr.mxu0 0.0
      %1715 = vmatpush1.msra.mxu0 0.0
      %1716 = vmatprep.subr.mxu0 0.0
      %1717 = vmatpush1.msra.mxu0 0.0
      %1718 = vmatprep.subr.mxu0 0.0
      %1719 = vmatpush1.msra.mxu0 0.0
      %1720 = vmatprep.subr.mxu0 0.0
      %1721 = vmatpush1.msra.mxu0 0.0
      %1722 = vmatprep.subr.mxu0 0.0
      %1723 = vmatpush1.msra.mxu0 0.0
      %1724 = vmatprep.subr.mxu0 0.0
      %1725 = vmatpush1.msra.mxu0 0.0
      %1726 = vmatprep.subr.mxu0 0.0
      %1727 = vmatpush1.msra.mxu0 0.0
      %1728 = vmatprep.subr.mxu0 0.0
      %1729 = vmatpush1.msra.mxu0 0.0
      %1730 = vmatprep.subr.mxu0 0.0
      %1731 = vmatpush1.msra.mxu0 0.0
      %1732 = vmatprep.subr.mxu0 0.0
      %1733 = vmatpush1.msra.mxu0 0.0
      %1734 = vmatprep.subr.mxu0 0.0
      %1735 = vmatpush1.msra.mxu0 0.0
      %1736 = vmatprep.subr.mxu0 0.0
      %1737 = vmatpush1.msra.mxu0 0.0
      %1738 = vmatprep.subr.mxu0 0.0
      %1739 = vmatpush1.msra.mxu0 0.0
      %1740 = vmatprep.subr.mxu0 0.0
      %1741 = vmatpush1.msra.mxu0 0.0
      %1742 = vmatprep.subr.mxu0 0.0
      %1743 = vmatpush1.msra.mxu0 0.0
      %1744 = vmatprep.subr.mxu0 0.0
      %1745 = vmatpush1.msra.mxu0 0.0
      %1746 = vmatprep.subr.mxu0 0.0
      %1747 = vmatpush1.msra.mxu0 0.0
      %1748 = vmatprep.mubr.f32.mxu0 0.0
      %1749 = vmatmul.mubr.f32.gmra.mrb[0].mxu0 %v1667
      %v1750 = vpop.f32.mrb[0].mxu0
      %v1751 = vadd.f32 0.0, %v1750
      %v1752 = vpop.f32.mrb[0].mxu0
      %v1753 = vadd.f32 0.0, %v1752
      %1754 = vmatprep.mubr.f32.mxu0 0.0
      %1755 = vmatmul.mubr.f32.gmra.mrb[0].mxu0 %v1670
      %v1756 = vpop.f32.mrb[0].mxu0
      %v1757 = vadd.f32 0.0, %v1756
      %v1758 = vpop.f32.mrb[0].mxu0
      %v1759 = vadd.f32 0.0, %v1758
      %1760 = vmatprep.mubr.f32.mxu0 0.0
      %1761 = vmatmul.mubr.f32.gmra.mrb[0].mxu0 %v1673
      %v1762 = vpop.f32.mrb[0].mxu0
      %v1763 = vadd.f32 0.0, %v1762
      %v1764 = vpop.f32.mrb[0].mxu0
      %v1765 = vadd.f32 0.0, %v1764
      %1766 = vmatprep.mubr.f32.mxu0 0.0
      %1767 = vmatmul.mubr.f32.gmra.mrb[0].mxu0 %v1676
      %v1768 = vpop.f32.mrb[0].mxu0
      %v1769 = vadd.f32 0.0, %v1768
      %v1770 = vpop.f32.mrb[0].mxu0
      %v1771 = vadd.f32 0.0, %v1770
      %1772 = vdwg.mxu0
      %1773 = vmatprep.subr.mxu0 0.0
      %1774 = vmatpush1.msra.mxu0 %v1682
      %1775 = vmatprep.subr.mxu0 0.0
      %1776 = vmatpush1.msra.mxu0 0.0
      %1777 = vmatprep.subr.mxu0 0.0
      %1778 = vmatpush1.msra.mxu0 0.0
      %1779 = vmatprep.subr.mxu0 0.0
      %1780 = vmatpush1.msra.mxu0 0.0
      %1781 = vmatprep.subr.mxu0 0.0
      %1782 = vmatpush1.msra.mxu0 0.0
      %1783 = vmatprep.subr.mxu0 0.0
      %1784 = vmatpush1.msra.mxu0 0.0
      %1785 = vmatprep.subr.mxu0 0.0
      %1786 = vmatpush1.msra.mxu0 0.0
      %1787 = vmatprep.subr.mxu0 0.0
      %1788 = vmatpush1.msra.mxu0 0.0
      %1789 = vmatprep.subr.mxu0 0.0
      %1790 = vmatpush1.msra.mxu0 0.0
      %1791 = vmatprep.subr.mxu0 0.0
      %1792 = vmatpush1.msra.mxu0 0.0
      %1793 = vmatprep.subr.mxu0 0.0
      %1794 = vmatpush1.msra.mxu0 0.0
      %1795 = vmatprep.subr.mxu0 0.0
      %1796 = vmatpush1.msra.mxu0 0.0
      %1797 = vmatprep.subr.mxu0 0.0
      %1798 = vmatpush1.msra.mxu0 0.0
      %1799 = vmatprep.subr.mxu0 0.0
      %1800 = vmatpush1.msra.mxu0 0.0
      %1801 = vmatprep.subr.mxu0 0.0
      %1802 = vmatpush1.msra.mxu0 0.0
      %1803 = vmatprep.subr.mxu0 0.0
      %1804 = vmatpush1.msra.mxu0 0.0
      %1805 = vmatprep.subr.mxu0 0.0
      %1806 = vmatpush1.msra.mxu0 0.0
      %1807 = vmatprep.subr.mxu0 0.0
      %1808 = vmatpush1.msra.mxu0 0.0
      %1809 = vmatprep.subr.mxu0 0.0
      %1810 = vmatpush1.msra.mxu0 0.0
      %1811 = vmatprep.subr.mxu0 0.0
      %1812 = vmatpush1.msra.mxu0 0.0
      %1813 = vmatprep.subr.mxu0 0.0
      %1814 = vmatpush1.msra.mxu0 0.0
      %1815 = vmatprep.subr.mxu0 0.0
      %1816 = vmatpush1.msra.mxu0 0.0
      %1817 = vmatprep.subr.mxu0 0.0
      %1818 = vmatpush1.msra.mxu0 0.0
      %1819 = vmatprep.subr.mxu0 0.0
      %1820 = vmatpush1.msra.mxu0 0.0
      %1821 = vmatprep.subr.mxu0 0.0
      %1822 = vmatpush1.msra.mxu0 0.0
      %1823 = vmatprep.subr.mxu0 0.0
      %1824 = vmatpush1.msra.mxu0 0.0
      %1825 = vmatprep.subr.mxu0 0.0
      %1826 = vmatpush1.msra.mxu0 0.0
      %1827 = vmatprep.subr.mxu0 0.0
      %1828 = vmatpush1.msra.mxu0 0.0
      %1829 = vmatprep.subr.mxu0 0.0
      %1830 = vmatpush1.msra.mxu0 0.0
      %1831 = vmatprep.subr.mxu0 0.0
      %1832 = vmatpush1.msra.mxu0 0.0
      %1833 = vmatprep.subr.mxu0 0.0
      %1834 = vmatpush1.msra.mxu0 0.0
      %1835 = vmatprep.subr.mxu0 0.0
      %1836 = vmatpush1.msra.mxu0 0.0
      %1837 = vmatprep.mubr.f32.mxu0 0.0
      %1838 = vmatmul.mubr.f32.gmra.mrb[0].mxu0 %v1667
      %v1839 = vpop.f32.mrb[0].mxu0
      %v1840 = vadd.f32 0.0, %v1839
      %v1841 = vpop.f32.mrb[0].mxu0
      %1842 = vmatprep.mubr.f32.mxu0 0.0
      %1843 = vmatmul.mubr.f32.gmra.mrb[0].mxu0 %v1670
      %v1844 = vpop.f32.mrb[0].mxu0
      %v1845 = vadd.f32 0.0, %v1844
      %v1846 = vpop.f32.mrb[0].mxu0
      %1847 = vmatprep.mubr.f32.mxu0 0.0
      %1848 = vmatmul.mubr.f32.gmra.mrb[0].mxu0 %v1673
      %v1849 = vpop.f32.mrb[0].mxu0
      %v1850 = vadd.f32 0.0, %v1849
      %v1851 = vpop.f32.mrb[0].mxu0
      %1852 = vmatprep.mubr.f32.mxu0 0.0
      %1853 = vmatmul.mubr.f32.gmra.mrb[0].mxu0 %v1676
      %v1854 = vpop.f32.mrb[0].mxu0
      %v1855 = vadd.f32 0.0, %v1854
      %v1856 = vpop.f32.mrb[0].mxu0
      %1857 = vdwg.mxu0
      %v1858 = vadd.f32 %v1635, %v1751
      %v1859 = vadd.f32 %v1636, %v1753
      %v1860 = vadd.f32 %v1637, %v1840
      %v1861 = vadd.f32 %v1638, %v1757
      %v1862 = vadd.f32 %v1639, %v1759
      %v1863 = vadd.f32 %v1640, %v1845
      %v1864 = vadd.f32 %v1641, %v1763
      %v1865 = vadd.f32 %v1642, %v1765
      %v1866 = vadd.f32 %v1643, %v1850
      %v1867 = vadd.f32 %v1644, %v1769
      %v1868 = vadd.f32 %v1645, %v1771
      %v1869 = vadd.f32 %v1646, %v1855
      %s1870 = scalar_lea.vmem %s1, 224
      %v1871 = vld [vmem:[%s1870] sm:$0xff]
      %v1872 = vld [vmem:[%s1870 + $0x8] sm:$0xff]
      %v1873 = vld [vmem:[%s1870 + $0x10] sm:$0xff]
      %v1874 = vld [vmem:[%s1870 + $0x18] sm:$0xff]
      %v1875 = vld [vmem:[%s336] sm:$0x77]
      %v1876 = vld [vmem:[%s336 + $0x8] sm:$0x7]
      %v1879 = vcombine.high %v1875, %v1875
      %1880 = vrot.lane.b32.xlu0 %v1875, 91
      %v1881 = vpop.permute.xlu0 %1880
      %1882 = vrot.lane.b32.xlu0 %v1879, 91
      %v1883 = vpop.permute.xlu0 %1882
      %1884 = vrot.lane.b32.xlu0 %v1876, 91
      %v1885 = vpop.permute.xlu0 %1884
      %vm1886 = vcmask 744448
      %v1887 = vsel %vm1886, %v1881, %v1883
      %v1888 = vsel %vm1886, %v1883, %v1885
      %v1890 = vsel %vm369, %v1871, 0
      %v1893 = vsel %vm369, %v1872, 0
      %v1896 = vsel %vm369, %v1873, 0
      %v1899 = vsel %vm369, %v1874, 0
      %v1901 = vsel %vm382, %v1887, 0
      %v1903 = vsel %vm382, %v1888, 0
      %v1905 = vsel %vm382, %v1885, 0
      %1907 = vmatprep.subr.mxu0 %v1903
      %1908 = vmatpush1.msra.mxu0 %v1901
      %1909 = vmatprep.subr.mxu0 0.0
      %1910 = vmatpush1.msra.mxu0 0.0
      %1911 = vmatprep.subr.mxu0 0.0
      %1912 = vmatpush1.msra.mxu0 0.0
      %1913 = vmatprep.subr.mxu0 0.0
      %1914 = vmatpush1.msra.mxu0 0.0
      %1915 = vmatprep.subr.mxu0 0.0
      %1916 = vmatpush1.msra.mxu0 0.0
      %1917 = vmatprep.subr.mxu0 0.0
      %1918 = vmatpush1.msra.mxu0 0.0
      %1919 = vmatprep.subr.mxu0 0.0
      %1920 = vmatpush1.msra.mxu0 0.0
      %1921 = vmatprep.subr.mxu0 0.0
      %1922 = vmatpush1.msra.mxu0 0.0
      %1923 = vmatprep.subr.mxu0 0.0
      %1924 = vmatpush1.msra.mxu0 0.0
      %1925 = vmatprep.subr.mxu0 0.0
      %1926 = vmatpush1.msra.mxu0 0.0
      %1927 = vmatprep.subr.mxu0 0.0
      %1928 = vmatpush1.msra.mxu0 0.0
      %1929 = vmatprep.subr.mxu0 0.0
      %1930 = vmatpush1.msra.mxu0 0.0
      %1931 = vmatprep.subr.mxu0 0.0
      %1932 = vmatpush1.msra.mxu0 0.0
      %1933 = vmatprep.subr.mxu0 0.0
      %1934 = vmatpush1.msra.mxu0 0.0
      %1935 = vmatprep.subr.mxu0 0.0
      %1936 = vmatpush1.msra.mxu0 0.0
      %1937 = vmatprep.subr.mxu0 0.0
      %1938 = vmatpush1.msra.mxu0 0.0
      %1939 = vmatprep.subr.mxu0 0.0
      %1940 = vmatpush1.msra.mxu0 0.0
      %1941 = vmatprep.subr.mxu0 0.0
      %1942 = vmatpush1.msra.mxu0 0.0
      %1943 = vmatprep.subr.mxu0 0.0
      %1944 = vmatpush1.msra.mxu0 0.0
      %1945 = vmatprep.subr.mxu0 0.0
      %1946 = vmatpush1.msra.mxu0 0.0
      %1947 = vmatprep.subr.mxu0 0.0
      %1948 = vmatpush1.msra.mxu0 0.0
      %1949 = vmatprep.subr.mxu0 0.0
      %1950 = vmatpush1.msra.mxu0 0.0
      %1951 = vmatprep.subr.mxu0 0.0
      %1952 = vmatpush1.msra.mxu0 0.0
      %1953 = vmatprep.subr.mxu0 0.0
      %1954 = vmatpush1.msra.mxu0 0.0
      %1955 = vmatprep.subr.mxu0 0.0
      %1956 = vmatpush1.msra.mxu0 0.0
      %1957 = vmatprep.subr.mxu0 0.0
      %1958 = vmatpush1.msra.mxu0 0.0
      %1959 = vmatprep.subr.mxu0 0.0
      %1960 = vmatpush1.msra.mxu0 0.0
      %1961 = vmatprep.subr.mxu0 0.0
      %1962 = vmatpush1.msra.mxu0 0.0
      %1963 = vmatprep.subr.mxu0 0.0
      %1964 = vmatpush1.msra.mxu0 0.0
      %1965 = vmatprep.subr.mxu0 0.0
      %1966 = vmatpush1.msra.mxu0 0.0
      %1967 = vmatprep.subr.mxu0 0.0
      %1968 = vmatpush1.msra.mxu0 0.0
      %1969 = vmatprep.subr.mxu0 0.0
      %1970 = vmatpush1.msra.mxu0 0.0
      %1971 = vmatprep.mubr.f32.mxu0 0.0
      %1972 = vmatmul.mubr.f32.gmra.mrb[0].mxu0 %v1890
      %v1973 = vpop.f32.mrb[0].mxu0
      %v1974 = vadd.f32 0.0, %v1973
      %v1975 = vpop.f32.mrb[0].mxu0
      %v1976 = vadd.f32 0.0, %v1975
      %1977 = vmatprep.mubr.f32.mxu0 0.0
      %1978 = vmatmul.mubr.f32.gmra.mrb[0].mxu0 %v1893
      %v1979 = vpop.f32.mrb[0].mxu0
      %v1980 = vadd.f32 0.0, %v1979
      %v1981 = vpop.f32.mrb[0].mxu0
      %v1982 = vadd.f32 0.0, %v1981
      %1983 = vmatprep.mubr.f32.mxu0 0.0
      %1984 = vmatmul.mubr.f32.gmra.mrb[0].mxu0 %v1896
      %v1985 = vpop.f32.mrb[0].mxu0
      %v1986 = vadd.f32 0.0, %v1985
      %v1987 = vpop.f32.mrb[0].mxu0
      %v1988 = vadd.f32 0.0, %v1987
      %1989 = vmatprep.mubr.f32.mxu0 0.0
      %1990 = vmatmul.mubr.f32.gmra.mrb[0].mxu0 %v1899
      %v1991 = vpop.f32.mrb[0].mxu0
      %v1992 = vadd.f32 0.0, %v1991
      %v1993 = vpop.f32.mrb[0].mxu0
      %v1994 = vadd.f32 0.0, %v1993
      %1995 = vdwg.mxu0
      %1996 = vmatprep.subr.mxu0 0.0
      %1997 = vmatpush1.msra.mxu0 %v1905
      %1998 = vmatprep.subr.mxu0 0.0
      %1999 = vmatpush1.msra.mxu0 0.0
      %2000 = vmatprep.subr.mxu0 0.0
      %2001 = vmatpush1.msra.mxu0 0.0
      %2002 = vmatprep.subr.mxu0 0.0
      %2003 = vmatpush1.msra.mxu0 0.0
      %2004 = vmatprep.subr.mxu0 0.0
      %2005 = vmatpush1.msra.mxu0 0.0
      %2006 = vmatprep.subr.mxu0 0.0
      %2007 = vmatpush1.msra.mxu0 0.0
      %2008 = vmatprep.subr.mxu0 0.0
      %2009 = vmatpush1.msra.mxu0 0.0
      %2010 = vmatprep.subr.mxu0 0.0
      %2011 = vmatpush1.msra.mxu0 0.0
      %2012 = vmatprep.subr.mxu0 0.0
      %2013 = vmatpush1.msra.mxu0 0.0
      %2014 = vmatprep.subr.mxu0 0.0
      %2015 = vmatpush1.msra.mxu0 0.0
      %2016 = vmatprep.subr.mxu0 0.0
      %2017 = vmatpush1.msra.mxu0 0.0
      %2018 = vmatprep.subr.mxu0 0.0
      %2019 = vmatpush1.msra.mxu0 0.0
      %2020 = vmatprep.subr.mxu0 0.0
      %2021 = vmatpush1.msra.mxu0 0.0
      %2022 = vmatprep.subr.mxu0 0.0
      %2023 = vmatpush1.msra.mxu0 0.0
      %2024 = vmatprep.subr.mxu0 0.0
      %2025 = vmatpush1.msra.mxu0 0.0
      %2026 = vmatprep.subr.mxu0 0.0
      %2027 = vmatpush1.msra.mxu0 0.0
      %2028 = vmatprep.subr.mxu0 0.0
      %2029 = vmatpush1.msra.mxu0 0.0
      %2030 = vmatprep.subr.mxu0 0.0
      %2031 = vmatpush1.msra.mxu0 0.0
      %2032 = vmatprep.subr.mxu0 0.0
      %2033 = vmatpush1.msra.mxu0 0.0
      %2034 = vmatprep.subr.mxu0 0.0
      %2035 = vmatpush1.msra.mxu0 0.0
      %2036 = vmatprep.subr.mxu0 0.0
      %2037 = vmatpush1.msra.mxu0 0.0
      %2038 = vmatprep.subr.mxu0 0.0
      %2039 = vmatpush1.msra.mxu0 0.0
      %2040 = vmatprep.subr.mxu0 0.0
      %2041 = vmatpush1.msra.mxu0 0.0
      %2042 = vmatprep.subr.mxu0 0.0
      %2043 = vmatpush1.msra.mxu0 0.0
      %2044 = vmatprep.subr.mxu0 0.0
      %2045 = vmatpush1.msra.mxu0 0.0
      %2046 = vmatprep.subr.mxu0 0.0
      %2047 = vmatpush1.msra.mxu0 0.0
      %2048 = vmatprep.subr.mxu0 0.0
      %2049 = vmatpush1.msra.mxu0 0.0
      %2050 = vmatprep.subr.mxu0 0.0
      %2051 = vmatpush1.msra.mxu0 0.0
      %2052 = vmatprep.subr.mxu0 0.0
      %2053 = vmatpush1.msra.mxu0 0.0
      %2054 = vmatprep.subr.mxu0 0.0
      %2055 = vmatpush1.msra.mxu0 0.0
      %2056 = vmatprep.subr.mxu0 0.0
      %2057 = vmatpush1.msra.mxu0 0.0
      %2058 = vmatprep.subr.mxu0 0.0
      %2059 = vmatpush1.msra.mxu0 0.0
      %2060 = vmatprep.mubr.f32.mxu0 0.0
      %2061 = vmatmul.mubr.f32.gmra.mrb[0].mxu0 %v1890
      %v2062 = vpop.f32.mrb[0].mxu0
      %v2063 = vadd.f32 0.0, %v2062
      %v2064 = vpop.f32.mrb[0].mxu0
      %2065 = vmatprep.mubr.f32.mxu0 0.0
      %2066 = vmatmul.mubr.f32.gmra.mrb[0].mxu0 %v1893
      %v2067 = vpop.f32.mrb[0].mxu0
      %v2068 = vadd.f32 0.0, %v2067
      %v2069 = vpop.f32.mrb[0].mxu0
      %2070 = vmatprep.mubr.f32.mxu0 0.0
      %2071 = vmatmul.mubr.f32.gmra.mrb[0].mxu0 %v1896
      %v2072 = vpop.f32.mrb[0].mxu0
      %v2073 = vadd.f32 0.0, %v2072
      %v2074 = vpop.f32.mrb[0].mxu0
      %2075 = vmatprep.mubr.f32.mxu0 0.0
      %2076 = vmatmul.mubr.f32.gmra.mrb[0].mxu0 %v1899
      %v2077 = vpop.f32.mrb[0].mxu0
      %v2078 = vadd.f32 0.0, %v2077
      %v2079 = vpop.f32.mrb[0].mxu0
      %2080 = vdwg.mxu0
      %v2081 = vadd.f32 %v1858, %v1974
      %v2082 = vadd.f32 %v1859, %v1976
      %v2083 = vadd.f32 %v1860, %v2063
      %v2084 = vadd.f32 %v1861, %v1980
      %v2085 = vadd.f32 %v1862, %v1982
      %v2086 = vadd.f32 %v1863, %v2068
      %v2087 = vadd.f32 %v1864, %v1986
      %v2088 = vadd.f32 %v1865, %v1988
      %v2089 = vadd.f32 %v1866, %v2073
      %v2090 = vadd.f32 %v1867, %v1992
      %v2091 = vadd.f32 %v1868, %v1994
      %v2092 = vadd.f32 %v1869, %v2078
      %s2093 = scalar_lea.vmem %s1, 256
      %v2094 = vld [vmem:[%s2093] sm:$0xff]
      %v2095 = vld [vmem:[%s2093 + $0x8] sm:$0xff]
      %v2096 = vld [vmem:[%s2093 + $0x10] sm:$0xff]
      %v2097 = vld [vmem:[%s2093 + $0x18] sm:$0xff]
      %v2098 = vld [vmem:[%s336] sm:$0x77]
      %v2099 = vld [vmem:[%s336 + $0x8] sm:$0x7]
      %v2102 = vcombine.high %v2098, %v2098
      %2103 = vrot.lane.b32.xlu0 %v2098, 90
      %v2104 = vpop.permute.xlu0 %2103
      %2105 = vrot.lane.b32.xlu0 %v2102, 90
      %v2106 = vpop.permute.xlu0 %2105
      %2107 = vrot.lane.b32.xlu0 %v2099, 90
      %v2108 = vpop.permute.xlu0 %2107
      %vm2109 = vcmask 736256
      %v2110 = vsel %vm2109, %v2104, %v2106
      %v2111 = vsel %vm2109, %v2106, %v2108
      %v2113 = vsel %vm369, %v2094, 0
      %v2116 = vsel %vm369, %v2095, 0
      %v2119 = vsel %vm369, %v2096, 0
      %v2122 = vsel %vm369, %v2097, 0
      %v2124 = vsel %vm382, %v2110, 0
      %v2126 = vsel %vm382, %v2111, 0
      %v2128 = vsel %vm382, %v2108, 0
      %2130 = vmatprep.subr.mxu0 %v2126
      %2131 = vmatpush1.msra.mxu0 %v2124
      %2132 = vmatprep.subr.mxu0 0.0
      %2133 = vmatpush1.msra.mxu0 0.0
      %2134 = vmatprep.subr.mxu0 0.0
      %2135 = vmatpush1.msra.mxu0 0.0
      %2136 = vmatprep.subr.mxu0 0.0
      %2137 = vmatpush1.msra.mxu0 0.0
      %2138 = vmatprep.subr.mxu0 0.0
      %2139 = vmatpush1.msra.mxu0 0.0
      %2140 = vmatprep.subr.mxu0 0.0
      %2141 = vmatpush1.msra.mxu0 0.0
      %2142 = vmatprep.subr.mxu0 0.0
      %2143 = vmatpush1.msra.mxu0 0.0
      %2144 = vmatprep.subr.mxu0 0.0
      %2145 = vmatpush1.msra.mxu0 0.0
      %2146 = vmatprep.subr.mxu0 0.0
      %2147 = vmatpush1.msra.mxu0 0.0
      %2148 = vmatprep.subr.mxu0 0.0
      %2149 = vmatpush1.msra.mxu0 0.0
      %2150 = vmatprep.subr.mxu0 0.0
      %2151 = vmatpush1.msra.mxu0 0.0
      %2152 = vmatprep.subr.mxu0 0.0
      %2153 = vmatpush1.msra.mxu0 0.0
      %2154 = vmatprep.subr.mxu0 0.0
      %2155 = vmatpush1.msra.mxu0 0.0
      %2156 = vmatprep.subr.mxu0 0.0
      %2157 = vmatpush1.msra.mxu0 0.0
      %2158 = vmatprep.subr.mxu0 0.0
      %2159 = vmatpush1.msra.mxu0 0.0
      %2160 = vmatprep.subr.mxu0 0.0
      %2161 = vmatpush1.msra.mxu0 0.0
      %2162 = vmatprep.subr.mxu0 0.0
      %2163 = vmatpush1.msra.mxu0 0.0
      %2164 = vmatprep.subr.mxu0 0.0
      %2165 = vmatpush1.msra.mxu0 0.0
      %2166 = vmatprep.subr.mxu0 0.0
      %2167 = vmatpush1.msra.mxu0 0.0
      %2168 = vmatprep.subr.mxu0 0.0
      %2169 = vmatpush1.msra.mxu0 0.0
      %2170 = vmatprep.subr.mxu0 0.0
      %2171 = vmatpush1.msra.mxu0 0.0
      %2172 = vmatprep.subr.mxu0 0.0
      %2173 = vmatpush1.msra.mxu0 0.0
      %2174 = vmatprep.subr.mxu0 0.0
      %2175 = vmatpush1.msra.mxu0 0.0
      %2176 = vmatprep.subr.mxu0 0.0
      %2177 = vmatpush1.msra.mxu0 0.0
      %2178 = vmatprep.subr.mxu0 0.0
      %2179 = vmatpush1.msra.mxu0 0.0
      %2180 = vmatprep.subr.mxu0 0.0
      %2181 = vmatpush1.msra.mxu0 0.0
      %2182 = vmatprep.subr.mxu0 0.0
      %2183 = vmatpush1.msra.mxu0 0.0
      %2184 = vmatprep.subr.mxu0 0.0
      %2185 = vmatpush1.msra.mxu0 0.0
      %2186 = vmatprep.subr.mxu0 0.0
      %2187 = vmatpush1.msra.mxu0 0.0
      %2188 = vmatprep.subr.mxu0 0.0
      %2189 = vmatpush1.msra.mxu0 0.0
      %2190 = vmatprep.subr.mxu0 0.0
      %2191 = vmatpush1.msra.mxu0 0.0
      %2192 = vmatprep.subr.mxu0 0.0
      %2193 = vmatpush1.msra.mxu0 0.0
      %2194 = vmatprep.mubr.f32.mxu0 0.0
      %2195 = vmatmul.mubr.f32.gmra.mrb[0].mxu0 %v2113
      %v2196 = vpop.f32.mrb[0].mxu0
      %v2197 = vadd.f32 0.0, %v2196
      %v2198 = vpop.f32.mrb[0].mxu0
      %v2199 = vadd.f32 0.0, %v2198
      %2200 = vmatprep.mubr.f32.mxu0 0.0
      %2201 = vmatmul.mubr.f32.gmra.mrb[0].mxu0 %v2116
      %v2202 = vpop.f32.mrb[0].mxu0
      %v2203 = vadd.f32 0.0, %v2202
      %v2204 = vpop.f32.mrb[0].mxu0
      %v2205 = vadd.f32 0.0, %v2204
      %2206 = vmatprep.mubr.f32.mxu0 0.0
      %2207 = vmatmul.mubr.f32.gmra.mrb[0].mxu0 %v2119
      %v2208 = vpop.f32.mrb[0].mxu0
      %v2209 = vadd.f32 0.0, %v2208
      %v2210 = vpop.f32.mrb[0].mxu0
      %v2211 = vadd.f32 0.0, %v2210
      %2212 = vmatprep.mubr.f32.mxu0 0.0
      %2213 = vmatmul.mubr.f32.gmra.mrb[0].mxu0 %v2122
      %v2214 = vpop.f32.mrb[0].mxu0
      %v2215 = vadd.f32 0.0, %v2214
      %v2216 = vpop.f32.mrb[0].mxu0
      %v2217 = vadd.f32 0.0, %v2216
      %2218 = vdwg.mxu0
      %2219 = vmatprep.subr.mxu0 0.0
      %2220 = vmatpush1.msra.mxu0 %v2128
      %2221 = vmatprep.subr.mxu0 0.0
      %2222 = vmatpush1.msra.mxu0 0.0
      %2223 = vmatprep.subr.mxu0 0.0
      %2224 = vmatpush1.msra.mxu0 0.0
      %2225 = vmatprep.subr.mxu0 0.0
      %2226 = vmatpush1.msra.mxu0 0.0
      %2227 = vmatprep.subr.mxu0 0.0
      %2228 = vmatpush1.msra.mxu0 0.0
      %2229 = vmatprep.subr.mxu0 0.0
      %2230 = vmatpush1.msra.mxu0 0.0
      %2231 = vmatprep.subr.mxu0 0.0
      %2232 = vmatpush1.msra.mxu0 0.0
      %2233 = vmatprep.subr.mxu0 0.0
      %2234 = vmatpush1.msra.mxu0 0.0
      %2235 = vmatprep.subr.mxu0 0.0
      %2236 = vmatpush1.msra.mxu0 0.0
      %2237 = vmatprep.subr.mxu0 0.0
      %2238 = vmatpush1.msra.mxu0 0.0
      %2239 = vmatprep.subr.mxu0 0.0
      %2240 = vmatpush1.msra.mxu0 0.0
      %2241 = vmatprep.subr.mxu0 0.0
      %2242 = vmatpush1.msra.mxu0 0.0
      %2243 = vmatprep.subr.mxu0 0.0
      %2244 = vmatpush1.msra.mxu0 0.0
      %2245 = vmatprep.subr.mxu0 0.0
      %2246 = vmatpush1.msra.mxu0 0.0
      %2247 = vmatprep.subr.mxu0 0.0
      %2248 = vmatpush1.msra.mxu0 0.0
      %2249 = vmatprep.subr.mxu0 0.0
      %2250 = vmatpush1.msra.mxu0 0.0
      %2251 = vmatprep.subr.mxu0 0.0
      %2252 = vmatpush1.msra.mxu0 0.0
      %2253 = vmatprep.subr.mxu0 0.0
      %2254 = vmatpush1.msra.mxu0 0.0
      %2255 = vmatprep.subr.mxu0 0.0
      %2256 = vmatpush1.msra.mxu0 0.0
      %2257 = vmatprep.subr.mxu0 0.0
      %2258 = vmatpush1.msra.mxu0 0.0
      %2259 = vmatprep.subr.mxu0 0.0
      %2260 = vmatpush1.msra.mxu0 0.0
      %2261 = vmatprep.subr.mxu0 0.0
      %2262 = vmatpush1.msra.mxu0 0.0
      %2263 = vmatprep.subr.mxu0 0.0
      %2264 = vmatpush1.msra.mxu0 0.0
      %2265 = vmatprep.subr.mxu0 0.0
      %2266 = vmatpush1.msra.mxu0 0.0
      %2267 = vmatprep.subr.mxu0 0.0
      %2268 = vmatpush1.msra.mxu0 0.0
      %2269 = vmatprep.subr.mxu0 0.0
      %2270 = vmatpush1.msra.mxu0 0.0
      %2271 = vmatprep.subr.mxu0 0.0
      %2272 = vmatpush1.msra.mxu0 0.0
      %2273 = vmatprep.subr.mxu0 0.0
      %2274 = vmatpush1.msra.mxu0 0.0
      %2275 = vmatprep.subr.mxu0 0.0
      %2276 = vmatpush1.msra.mxu0 0.0
      %2277 = vmatprep.subr.mxu0 0.0
      %2278 = vmatpush1.msra.mxu0 0.0
      %2279 = vmatprep.subr.mxu0 0.0
      %2280 = vmatpush1.msra.mxu0 0.0
      %2281 = vmatprep.subr.mxu0 0.0
      %2282 = vmatpush1.msra.mxu0 0.0
      %2283 = vmatprep.mubr.f32.mxu0 0.0
      %2284 = vmatmul.mubr.f32.gmra.mrb[0].mxu0 %v2113
      %v2285 = vpop.f32.mrb[0].mxu0
      %v2286 = vadd.f32 0.0, %v2285
      %v2287 = vpop.f32.mrb[0].mxu0
      %2288 = vmatprep.mubr.f32.mxu0 0.0
      %2289 = vmatmul.mubr.f32.gmra.mrb[0].mxu0 %v2116
      %v2290 = vpop.f32.mrb[0].mxu0
      %v2291 = vadd.f32 0.0, %v2290
      %v2292 = vpop.f32.mrb[0].mxu0
      %2293 = vmatprep.mubr.f32.mxu0 0.0
      %2294 = vmatmul.mubr.f32.gmra.mrb[0].mxu0 %v2119
      %v2295 = vpop.f32.mrb[0].mxu0
      %v2296 = vadd.f32 0.0, %v2295
      %v2297 = vpop.f32.mrb[0].mxu0
      %2298 = vmatprep.mubr.f32.mxu0 0.0
      %2299 = vmatmul.mubr.f32.gmra.mrb[0].mxu0 %v2122
      %v2300 = vpop.f32.mrb[0].mxu0
      %v2301 = vadd.f32 0.0, %v2300
      %v2302 = vpop.f32.mrb[0].mxu0
      %2303 = vdwg.mxu0
      %v2304 = vadd.f32 %v2081, %v2197
      %v2305 = vadd.f32 %v2082, %v2199
      %v2306 = vadd.f32 %v2083, %v2286
      %v2307 = vadd.f32 %v2084, %v2203
      %v2308 = vadd.f32 %v2085, %v2205
      %v2309 = vadd.f32 %v2086, %v2291
      %v2310 = vadd.f32 %v2087, %v2209
      %v2311 = vadd.f32 %v2088, %v2211
      %v2312 = vadd.f32 %v2089, %v2296
      %v2313 = vadd.f32 %v2090, %v2215
      %v2314 = vadd.f32 %v2091, %v2217
      %v2315 = vadd.f32 %v2092, %v2301
      %v2316 = vld [vmem:[%s2] sm:$0xff]
      %v2317 = vld [vmem:[%s2 + $0x8] sm:$0xff]
      %v2318 = vld [vmem:[%s2 + $0x10] sm:$0xff]
      %v2319 = vld [vmem:[%s2 + $0x18] sm:$0xff]
      %2321 = vset.pattern.permute.xlu0 0
      %2322 = vperm.xlu0 %2321, %v2316
      %v2323 = vpop.permute.xlu0 %2322
      %2326 = vset.pattern.permute.xlu0 0
      %2327 = vperm.xlu0 %2326, %v2317
      %v2328 = vpop.permute.xlu0 %2327
      %2331 = vset.pattern.permute.xlu0 0
      %2332 = vperm.xlu0 %2331, %v2318
      %v2333 = vpop.permute.xlu0 %2332
      %2336 = vset.pattern.permute.xlu0 0
      %2337 = vperm.xlu0 %2336, %v2319
      %v2338 = vpop.permute.xlu0 %2337
      %v2340 = vadd.f32 %v2304, %v2323
      %v2341 = vadd.f32 %v2305, %v2323
      %v2342 = vadd.f32 %v2306, %v2323
      %v2343 = vadd.f32 %v2307, %v2328
      %v2344 = vadd.f32 %v2308, %v2328
      %v2345 = vadd.f32 %v2309, %v2328
      %v2346 = vadd.f32 %v2310, %v2333
      %v2347 = vadd.f32 %v2311, %v2333
      %v2348 = vadd.f32 %v2312, %v2333
      %v2349 = vadd.f32 %v2313, %v2338
      %v2350 = vadd.f32 %v2314, %v2338
      %v2351 = vadd.f32 %v2315, %v2338
      %v2352 = vmax.f32 %v2340, 0.0
      %v2353 = vmax.f32 %v2341, 0.0
      %v2354 = vmax.f32 %v2342, 0.0
      %v2355 = vmax.f32 %v2343, 0.0
      %v2356 = vmax.f32 %v2344, 0.0
      %v2357 = vmax.f32 %v2345, 0.0
      %v2358 = vmax.f32 %v2346, 0.0
      %v2359 = vmax.f32 %v2347, 0.0
      %v2360 = vmax.f32 %v2348, 0.0
      %v2361 = vmax.f32 %v2349, 0.0
      %v2362 = vmax.f32 %v2350, 0.0
      %v2363 = vmax.f32 %v2351, 0.0
      %v2364 = vld [vmem:[%s3] sm:$0xff]
      %v2365 = vld [vmem:[%s3 + $0x8] sm:$0xff]
      %v2366 = vld [vmem:[%s3 + $0x10] sm:$0xff]
      %v2367 = vld [vmem:[%s3 + $0x18] sm:$0xff]
      %v2368 = vld [vmem:[%s4] sm:$0xff]
      %v2369 = vld [vmem:[%s4 + $0x8] sm:$0xff]
      %v2370 = vld [vmem:[%s4 + $0x10] sm:$0xff]
      %v2371 = vld [vmem:[%s4 + $0x18] sm:$0xff]
      %v2373 = vsel %vm369, %v2368, 0
      %v2376 = vsel %vm369, %v2369, 0
      %v2379 = vsel %vm369, %v2370, 0
      %v2382 = vsel %vm369, %v2371, 0
      %2384 = vmatprep.subr.mxu0 %v1234
      %2385 = vmatpush1.msra.mxu0 %v1232
      %2386 = vmatprep.subr.mxu0 0.0
      %2387 = vmatpush1.msra.mxu0 0.0
      %2388 = vmatprep.subr.mxu0 0.0
      %2389 = vmatpush1.msra.mxu0 0.0
      %2390 = vmatprep.subr.mxu0 0.0
      %2391 = vmatpush1.msra.mxu0 0.0
      %2392 = vmatprep.subr.mxu0 0.0
      %2393 = vmatpush1.msra.mxu0 0.0
      %2394 = vmatprep.subr.mxu0 0.0
      %2395 = vmatpush1.msra.mxu0 0.0
      %2396 = vmatprep.subr.mxu0 0.0
      %2397 = vmatpush1.msra.mxu0 0.0
      %2398 = vmatprep.subr.mxu0 0.0
      %2399 = vmatpush1.msra.mxu0 0.0
      %2400 = vmatprep.subr.mxu0 0.0
      %2401 = vmatpush1.msra.mxu0 0.0
      %2402 = vmatprep.subr.mxu0 0.0
      %2403 = vmatpush1.msra.mxu0 0.0
      %2404 = vmatprep.subr.mxu0 0.0
      %2405 = vmatpush1.msra.mxu0 0.0
      %2406 = vmatprep.subr.mxu0 0.0
      %2407 = vmatpush1.msra.mxu0 0.0
      %2408 = vmatprep.subr.mxu0 0.0
      %2409 = vmatpush1.msra.mxu0 0.0
      %2410 = vmatprep.subr.mxu0 0.0
      %2411 = vmatpush1.msra.mxu0 0.0
      %2412 = vmatprep.subr.mxu0 0.0
      %2413 = vmatpush1.msra.mxu0 0.0
      %2414 = vmatprep.subr.mxu0 0.0
      %2415 = vmatpush1.msra.mxu0 0.0
      %2416 = vmatprep.subr.mxu0 0.0
      %2417 = vmatpush1.msra.mxu0 0.0
      %2418 = vmatprep.subr.mxu0 0.0
      %2419 = vmatpush1.msra.mxu0 0.0
      %2420 = vmatprep.subr.mxu0 0.0
      %2421 = vmatpush1.msra.mxu0 0.0
      %2422 = vmatprep.subr.mxu0 0.0
      %2423 = vmatpush1.msra.mxu0 0.0
      %2424 = vmatprep.subr.mxu0 0.0
      %2425 = vmatpush1.msra.mxu0 0.0
      %2426 = vmatprep.subr.mxu0 0.0
      %2427 = vmatpush1.msra.mxu0 0.0
      %2428 = vmatprep.subr.mxu0 0.0
      %2429 = vmatpush1.msra.mxu0 0.0
      %2430 = vmatprep.subr.mxu0 0.0
      %2431 = vmatpush1.msra.mxu0 0.0
      %2432 = vmatprep.subr.mxu0 0.0
      %2433 = vmatpush1.msra.mxu0 0.0
      %2434 = vmatprep.subr.mxu0 0.0
      %2435 = vmatpush1.msra.mxu0 0.0
      %2436 = vmatprep.subr.mxu0 0.0
      %2437 = vmatpush1.msra.mxu0 0.0
      %2438 = vmatprep.subr.mxu0 0.0
      %2439 = vmatpush1.msra.mxu0 0.0
      %2440 = vmatprep.subr.mxu0 0.0
      %2441 = vmatpush1.msra.mxu0 0.0
      %2442 = vmatprep.subr.mxu0 0.0
      %2443 = vmatpush1.msra.mxu0 0.0
      %2444 = vmatprep.subr.mxu0 0.0
      %2445 = vmatpush1.msra.mxu0 0.0
      %2446 = vmatprep.subr.mxu0 0.0
      %2447 = vmatpush1.msra.mxu0 0.0
      %2448 = vmatprep.mubr.f32.mxu0 0.0
      %2449 = vmatmul.mubr.f32.gmra.mrb[0].mxu0 %v2373
      %v2450 = vpop.f32.mrb[0].mxu0
      %v2451 = vadd.f32 0.0, %v2450
      %v2452 = vpop.f32.mrb[0].mxu0
      %v2453 = vadd.f32 0.0, %v2452
      %2454 = vmatprep.mubr.f32.mxu0 0.0
      %2455 = vmatmul.mubr.f32.gmra.mrb[0].mxu0 %v2376
      %v2456 = vpop.f32.mrb[0].mxu0
      %v2457 = vadd.f32 0.0, %v2456
      %v2458 = vpop.f32.mrb[0].mxu0
      %v2459 = vadd.f32 0.0, %v2458
      %2460 = vmatprep.mubr.f32.mxu0 0.0
      %2461 = vmatmul.mubr.f32.gmra.mrb[0].mxu0 %v2379
      %v2462 = vpop.f32.mrb[0].mxu0
      %v2463 = vadd.f32 0.0, %v2462
      %v2464 = vpop.f32.mrb[0].mxu0
      %v2465 = vadd.f32 0.0, %v2464
      %2466 = vmatprep.mubr.f32.mxu0 0.0
      %2467 = vmatmul.mubr.f32.gmra.mrb[0].mxu0 %v2382
      %v2468 = vpop.f32.mrb[0].mxu0
      %v2469 = vadd.f32 0.0, %v2468
      %v2470 = vpop.f32.mrb[0].mxu0
      %v2471 = vadd.f32 0.0, %v2470
      %2472 = vdwg.mxu0
      %2473 = vmatprep.subr.mxu0 0.0
      %2474 = vmatpush1.msra.mxu0 %v1236
      %2475 = vmatprep.subr.mxu0 0.0
      %2476 = vmatpush1.msra.mxu0 0.0
      %2477 = vmatprep.subr.mxu0 0.0
      %2478 = vmatpush1.msra.mxu0 0.0
      %2479 = vmatprep.subr.mxu0 0.0
      %2480 = vmatpush1.msra.mxu0 0.0
      %2481 = vmatprep.subr.mxu0 0.0
      %2482 = vmatpush1.msra.mxu0 0.0
      %2483 = vmatprep.subr.mxu0 0.0
      %2484 = vmatpush1.msra.mxu0 0.0
      %2485 = vmatprep.subr.mxu0 0.0
      %2486 = vmatpush1.msra.mxu0 0.0
      %2487 = vmatprep.subr.mxu0 0.0
      %2488 = vmatpush1.msra.mxu0 0.0
      %2489 = vmatprep.subr.mxu0 0.0
      %2490 = vmatpush1.msra.mxu0 0.0
      %2491 = vmatprep.subr.mxu0 0.0
      %2492 = vmatpush1.msra.mxu0 0.0
      %2493 = vmatprep.subr.mxu0 0.0
      %2494 = vmatpush1.msra.mxu0 0.0
      %2495 = vmatprep.subr.mxu0 0.0
      %2496 = vmatpush1.msra.mxu0 0.0
      %2497 = vmatprep.subr.mxu0 0.0
      %2498 = vmatpush1.msra.mxu0 0.0
      %2499 = vmatprep.subr.mxu0 0.0
      %2500 = vmatpush1.msra.mxu0 0.0
      %2501 = vmatprep.subr.mxu0 0.0
      %2502 = vmatpush1.msra.mxu0 0.0
      %2503 = vmatprep.subr.mxu0 0.0
      %2504 = vmatpush1.msra.mxu0 0.0
      %2505 = vmatprep.subr.mxu0 0.0
      %2506 = vmatpush1.msra.mxu0 0.0
      %2507 = vmatprep.subr.mxu0 0.0
      %2508 = vmatpush1.msra.mxu0 0.0
      %2509 = vmatprep.subr.mxu0 0.0
      %2510 = vmatpush1.msra.mxu0 0.0
      %2511 = vmatprep.subr.mxu0 0.0
      %2512 = vmatpush1.msra.mxu0 0.0
      %2513 = vmatprep.subr.mxu0 0.0
      %2514 = vmatpush1.msra.mxu0 0.0
      %2515 = vmatprep.subr.mxu0 0.0
      %2516 = vmatpush1.msra.mxu0 0.0
      %2517 = vmatprep.subr.mxu0 0.0
      %2518 = vmatpush1.msra.mxu0 0.0
      %2519 = vmatprep.subr.mxu0 0.0
      %2520 = vmatpush1.msra.mxu0 0.0
      %2521 = vmatprep.subr.mxu0 0.0
      %2522 = vmatpush1.msra.mxu0 0.0
      %2523 = vmatprep.subr.mxu0 0.0
      %2524 = vmatpush1.msra.mxu0 0.0
      %2525 = vmatprep.subr.mxu0 0.0
      %2526 = vmatpush1.msra.mxu0 0.0
      %2527 = vmatprep.subr.mxu0 0.0
      %2528 = vmatpush1.msra.mxu0 0.0
      %2529 = vmatprep.subr.mxu0 0.0
      %2530 = vmatpush1.msra.mxu0 0.0
      %2531 = vmatprep.subr.mxu0 0.0
      %2532 = vmatpush1.msra.mxu0 0.0
      %2533 = vmatprep.subr.mxu0 0.0
      %2534 = vmatpush1.msra.mxu0 0.0
      %2535 = vmatprep.subr.mxu0 0.0
      %2536 = vmatpush1.msra.mxu0 0.0
      %2537 = vmatprep.mubr.f32.mxu0 0.0
      %2538 = vmatmul.mubr.f32.gmra.mrb[0].mxu0 %v2373
      %v2539 = vpop.f32.mrb[0].mxu0
      %v2540 = vadd.f32 0.0, %v2539
      %v2541 = vpop.f32.mrb[0].mxu0
      %2542 = vmatprep.mubr.f32.mxu0 0.0
      %2543 = vmatmul.mubr.f32.gmra.mrb[0].mxu0 %v2376
      %v2544 = vpop.f32.mrb[0].mxu0
      %v2545 = vadd.f32 0.0, %v2544
      %v2546 = vpop.f32.mrb[0].mxu0
      %2547 = vmatprep.mubr.f32.mxu0 0.0
      %2548 = vmatmul.mubr.f32.gmra.mrb[0].mxu0 %v2379
      %v2549 = vpop.f32.mrb[0].mxu0
      %v2550 = vadd.f32 0.0, %v2549
      %v2551 = vpop.f32.mrb[0].mxu0
      %2552 = vmatprep.mubr.f32.mxu0 0.0
      %2553 = vmatmul.mubr.f32.gmra.mrb[0].mxu0 %v2382
      %v2554 = vpop.f32.mrb[0].mxu0
      %v2555 = vadd.f32 0.0, %v2554
      %v2556 = vpop.f32.mrb[0].mxu0
      %2557 = vdwg.mxu0
      %vm2558 = vcmask 261120
      %v2560 = vsel %vm2558, %v2364, 0
      %v2563 = vsel %vm2558, %v2365, 0
      %v2566 = vsel %vm2558, %v2366, 0
      %v2569 = vsel %vm2558, %v2367, 0
      %2571 = vmatprep.subr.mxu0 %v2353
      %2572 = vmatpush1.msra.mxu0 %v2352
      %2573 = vmatprep.subr.mxu0 %v2356
      %2574 = vmatpush1.msra.mxu0 %v2355
      %2575 = vmatprep.subr.mxu0 %v2359
      %2576 = vmatpush1.msra.mxu0 %v2358
      %2577 = vmatprep.subr.mxu0 %v2362
      %2578 = vmatpush1.msra.mxu0 %v2361
      %2579 = vmatprep.subr.mxu0 0.0
      %2580 = vmatpush1.msra.mxu0 0.0
      %2581 = vmatprep.subr.mxu0 0.0
      %2582 = vmatpush1.msra.mxu0 0.0
      %2583 = vmatprep.subr.mxu0 0.0
      %2584 = vmatpush1.msra.mxu0 0.0
      %2585 = vmatprep.subr.mxu0 0.0
      %2586 = vmatpush1.msra.mxu0 0.0
      %2587 = vmatprep.subr.mxu0 0.0
      %2588 = vmatpush1.msra.mxu0 0.0
      %2589 = vmatprep.subr.mxu0 0.0
      %2590 = vmatpush1.msra.mxu0 0.0
      %2591 = vmatprep.subr.mxu0 0.0
      %2592 = vmatpush1.msra.mxu0 0.0
      %2593 = vmatprep.subr.mxu0 0.0
      %2594 = vmatpush1.msra.mxu0 0.0
      %2595 = vmatprep.subr.mxu0 0.0
      %2596 = vmatpush1.msra.mxu0 0.0
      %2597 = vmatprep.subr.mxu0 0.0
      %2598 = vmatpush1.msra.mxu0 0.0
      %2599 = vmatprep.subr.mxu0 0.0
      %2600 = vmatpush1.msra.mxu0 0.0
      %2601 = vmatprep.subr.mxu0 0.0
      %2602 = vmatpush1.msra.mxu0 0.0
      %2603 = vmatprep.subr.mxu0 0.0
      %2604 = vmatpush1.msra.mxu0 0.0
      %2605 = vmatprep.subr.mxu0 0.0
      %2606 = vmatpush1.msra.mxu0 0.0
      %2607 = vmatprep.subr.mxu0 0.0
      %2608 = vmatpush1.msra.mxu0 0.0
      %2609 = vmatprep.subr.mxu0 0.0
      %2610 = vmatpush1.msra.mxu0 0.0
      %2611 = vmatprep.subr.mxu0 0.0
      %2612 = vmatpush1.msra.mxu0 0.0
      %2613 = vmatprep.subr.mxu0 0.0
      %2614 = vmatpush1.msra.mxu0 0.0
      %2615 = vmatprep.subr.mxu0 0.0
      %2616 = vmatpush1.msra.mxu0 0.0
      %2617 = vmatprep.subr.mxu0 0.0
      %2618 = vmatpush1.msra.mxu0 0.0
      %2619 = vmatprep.subr.mxu0 0.0
      %2620 = vmatpush1.msra.mxu0 0.0
      %2621 = vmatprep.subr.mxu0 0.0
      %2622 = vmatpush1.msra.mxu0 0.0
      %2623 = vmatprep.subr.mxu0 0.0
      %2624 = vmatpush1.msra.mxu0 0.0
      %2625 = vmatprep.subr.mxu0 0.0
      %2626 = vmatpush1.msra.mxu0 0.0
      %2627 = vmatprep.subr.mxu0 0.0
      %2628 = vmatpush1.msra.mxu0 0.0
      %2629 = vmatprep.subr.mxu0 0.0
      %2630 = vmatpush1.msra.mxu0 0.0
      %2631 = vmatprep.subr.mxu0 0.0
      %2632 = vmatpush1.msra.mxu0 0.0
      %2633 = vmatprep.subr.mxu0 0.0
      %2634 = vmatpush1.msra.mxu0 0.0
      %2635 = vmatprep.mubr.f32.mxu0 0.0
      %2636 = vmatmul.mubr.f32.gmra.mrb[0].mxu0 %v2560
      %v2637 = vpop.f32.mrb[0].mxu0
      %v2638 = vadd.f32 %v2451, %v2637
      %v2639 = vpop.f32.mrb[0].mxu0
      %v2640 = vadd.f32 %v2453, %v2639
      %2641 = vmatprep.mubr.f32.mxu0 0.0
      %2642 = vmatmul.mubr.f32.gmra.mrb[0].mxu0 %v2563
      %v2643 = vpop.f32.mrb[0].mxu0
      %v2644 = vadd.f32 %v2457, %v2643
      %v2645 = vpop.f32.mrb[0].mxu0
      %v2646 = vadd.f32 %v2459, %v2645
      %2647 = vmatprep.mubr.f32.mxu0 0.0
      %2648 = vmatmul.mubr.f32.gmra.mrb[0].mxu0 %v2566
      %v2649 = vpop.f32.mrb[0].mxu0
      %v2650 = vadd.f32 %v2463, %v2649
      %v2651 = vpop.f32.mrb[0].mxu0
      %v2652 = vadd.f32 %v2465, %v2651
      %2653 = vmatprep.mubr.f32.mxu0 0.0
      %2654 = vmatmul.mubr.f32.gmra.mrb[0].mxu0 %v2569
      %v2655 = vpop.f32.mrb[0].mxu0
      %v2656 = vadd.f32 %v2469, %v2655
      %v2657 = vpop.f32.mrb[0].mxu0
      %v2658 = vadd.f32 %v2471, %v2657
      %2659 = vdwg.mxu0
      %2660 = vmatprep.subr.mxu0 0.0
      %2661 = vmatpush1.msra.mxu0 %v2354
      %2662 = vmatprep.subr.mxu0 0.0
      %2663 = vmatpush1.msra.mxu0 %v2357
      %2664 = vmatprep.subr.mxu0 0.0
      %2665 = vmatpush1.msra.mxu0 %v2360
      %2666 = vmatprep.subr.mxu0 0.0
      %2667 = vmatpush1.msra.mxu0 %v2363
      %2668 = vmatprep.subr.mxu0 0.0
      %2669 = vmatpush1.msra.mxu0 0.0
      %2670 = vmatprep.subr.mxu0 0.0
      %2671 = vmatpush1.msra.mxu0 0.0
      %2672 = vmatprep.subr.mxu0 0.0
      %2673 = vmatpush1.msra.mxu0 0.0
      %2674 = vmatprep.subr.mxu0 0.0
      %2675 = vmatpush1.msra.mxu0 0.0
      %2676 = vmatprep.subr.mxu0 0.0
      %2677 = vmatpush1.msra.mxu0 0.0
      %2678 = vmatprep.subr.mxu0 0.0
      %2679 = vmatpush1.msra.mxu0 0.0
      %2680 = vmatprep.subr.mxu0 0.0
      %2681 = vmatpush1.msra.mxu0 0.0
      %2682 = vmatprep.subr.mxu0 0.0
      %2683 = vmatpush1.msra.mxu0 0.0
      %2684 = vmatprep.subr.mxu0 0.0
      %2685 = vmatpush1.msra.mxu0 0.0
      %2686 = vmatprep.subr.mxu0 0.0
      %2687 = vmatpush1.msra.mxu0 0.0
      %2688 = vmatprep.subr.mxu0 0.0
      %2689 = vmatpush1.msra.mxu0 0.0
      %2690 = vmatprep.subr.mxu0 0.0
      %2691 = vmatpush1.msra.mxu0 0.0
      %2692 = vmatprep.subr.mxu0 0.0
      %2693 = vmatpush1.msra.mxu0 0.0
      %2694 = vmatprep.subr.mxu0 0.0
      %2695 = vmatpush1.msra.mxu0 0.0
      %2696 = vmatprep.subr.mxu0 0.0
      %2697 = vmatpush1.msra.mxu0 0.0
      %2698 = vmatprep.subr.mxu0 0.0
      %2699 = vmatpush1.msra.mxu0 0.0
      %2700 = vmatprep.subr.mxu0 0.0
      %2701 = vmatpush1.msra.mxu0 0.0
      %2702 = vmatprep.subr.mxu0 0.0
      %2703 = vmatpush1.msra.mxu0 0.0
      %2704 = vmatprep.subr.mxu0 0.0
      %2705 = vmatpush1.msra.mxu0 0.0
      %2706 = vmatprep.subr.mxu0 0.0
      %2707 = vmatpush1.msra.mxu0 0.0
      %2708 = vmatprep.subr.mxu0 0.0
      %2709 = vmatpush1.msra.mxu0 0.0
      %2710 = vmatprep.subr.mxu0 0.0
      %2711 = vmatpush1.msra.mxu0 0.0
      %2712 = vmatprep.subr.mxu0 0.0
      %2713 = vmatpush1.msra.mxu0 0.0
      %2714 = vmatprep.subr.mxu0 0.0
      %2715 = vmatpush1.msra.mxu0 0.0
      %2716 = vmatprep.subr.mxu0 0.0
      %2717 = vmatpush1.msra.mxu0 0.0
      %2718 = vmatprep.subr.mxu0 0.0
      %2719 = vmatpush1.msra.mxu0 0.0
      %2720 = vmatprep.subr.mxu0 0.0
      %2721 = vmatpush1.msra.mxu0 0.0
      %2722 = vmatprep.subr.mxu0 0.0
      %2723 = vmatpush1.msra.mxu0 0.0
      %2724 = vmatprep.mubr.f32.mxu0 0.0
      %2725 = vmatmul.mubr.f32.gmra.mrb[0].mxu0 %v2560
      %v2726 = vpop.f32.mrb[0].mxu0
      %v2727 = vadd.f32 %v2540, %v2726
      %v2728 = vpop.f32.mrb[0].mxu0
      %2729 = vmatprep.mubr.f32.mxu0 0.0
      %2730 = vmatmul.mubr.f32.gmra.mrb[0].mxu0 %v2563
      %v2731 = vpop.f32.mrb[0].mxu0
      %v2732 = vadd.f32 %v2545, %v2731
      %v2733 = vpop.f32.mrb[0].mxu0
      %2734 = vmatprep.mubr.f32.mxu0 0.0
      %2735 = vmatmul.mubr.f32.gmra.mrb[0].mxu0 %v2566
      %v2736 = vpop.f32.mrb[0].mxu0
      %v2737 = vadd.f32 %v2550, %v2736
      %v2738 = vpop.f32.mrb[0].mxu0
      %2739 = vmatprep.mubr.f32.mxu0 0.0
      %2740 = vmatmul.mubr.f32.gmra.mrb[0].mxu0 %v2569
      %v2741 = vpop.f32.mrb[0].mxu0
      %v2742 = vadd.f32 %v2555, %v2741
      %v2743 = vpop.f32.mrb[0].mxu0
      %2744 = vdwg.mxu0
      %v2745 = vld [vmem:[%s5] sm:$0xff]
      %v2746 = vld [vmem:[%s5 + $0x8] sm:$0xff]
      %v2747 = vld [vmem:[%s5 + $0x10] sm:$0xff]
      %v2748 = vld [vmem:[%s5 + $0x18] sm:$0xff]
      %2750 = vset.pattern.permute.xlu0 0
      %2751 = vperm.xlu0 %2750, %v2745
      %v2752 = vpop.permute.xlu0 %2751
      %2755 = vset.pattern.permute.xlu0 0
      %2756 = vperm.xlu0 %2755, %v2746
      %v2757 = vpop.permute.xlu0 %2756
      %2760 = vset.pattern.permute.xlu0 0
      %2761 = vperm.xlu0 %2760, %v2747
      %v2762 = vpop.permute.xlu0 %2761
      %2765 = vset.pattern.permute.xlu0 0
      %2766 = vperm.xlu0 %2765, %v2748
      %v2767 = vpop.permute.xlu0 %2766
      %v2769 = vadd.f32 %v2638, %v2752
      %v2770 = vadd.f32 %v2640, %v2752
      %v2771 = vadd.f32 %v2727, %v2752
      %v2772 = vadd.f32 %v2644, %v2757
      %v2773 = vadd.f32 %v2646, %v2757
      %v2774 = vadd.f32 %v2732, %v2757
      %v2775 = vadd.f32 %v2650, %v2762
      %v2776 = vadd.f32 %v2652, %v2762
      %v2777 = vadd.f32 %v2737, %v2762
      %v2778 = vadd.f32 %v2656, %v2767
      %v2779 = vadd.f32 %v2658, %v2767
      %v2780 = vadd.f32 %v2742, %v2767
      %v2781 = vmax.f32 %v2769, 0.0
      %v2782 = vmax.f32 %v2770, 0.0
      %v2783 = vmax.f32 %v2771, 0.0
      %v2784 = vmax.f32 %v2772, 0.0
      %v2785 = vmax.f32 %v2773, 0.0
      %v2786 = vmax.f32 %v2774, 0.0
      %v2787 = vmax.f32 %v2775, 0.0
      %v2788 = vmax.f32 %v2776, 0.0
      %v2789 = vmax.f32 %v2777, 0.0
      %v2790 = vmax.f32 %v2778, 0.0
      %v2791 = vmax.f32 %v2779, 0.0
      %v2792 = vmax.f32 %v2780, 0.0
      %v2793 = vld [vmem:[%s6] sm:$0x1]
      %v2794 = vld [vmem:[#allocation2] sm:$0x1]
      %2796 = vset.pattern.permute.xlu0 0
      %2797 = vperm.xlu0 %2796, %v2794
      %v2798 = vpop.permute.xlu0 %2797
      %v2800 = vlaneseq
      %v2801 = vshrl.u32 %v2800, 7
      %v2802 = vsub.s32 0, %v2801
      %v2803 = vrot.slane %v2798, %v2802
      %v2805 = vsel %vm2558, %v2793, 0
      %2807 = vmatprep.subr.mxu0 %v2782
      %2808 = vmatpush1.msra.mxu0 %v2781
      %2809 = vmatprep.subr.mxu0 %v2785
      %2810 = vmatpush1.msra.mxu0 %v2784
      %2811 = vmatprep.subr.mxu0 %v2788
      %2812 = vmatpush1.msra.mxu0 %v2787
      %2813 = vmatprep.subr.mxu0 %v2791
      %2814 = vmatpush1.msra.mxu0 %v2790
      %2815 = vmatprep.subr.mxu0 0.0
      %2816 = vmatpush1.msra.mxu0 0.0
      %2817 = vmatprep.subr.mxu0 0.0
      %2818 = vmatpush1.msra.mxu0 0.0
      %2819 = vmatprep.subr.mxu0 0.0
      %2820 = vmatpush1.msra.mxu0 0.0
      %2821 = vmatprep.subr.mxu0 0.0
      %2822 = vmatpush1.msra.mxu0 0.0
      %2823 = vmatprep.subr.mxu0 0.0
      %2824 = vmatpush1.msra.mxu0 0.0
      %2825 = vmatprep.subr.mxu0 0.0
      %2826 = vmatpush1.msra.mxu0 0.0
      %2827 = vmatprep.subr.mxu0 0.0
      %2828 = vmatpush1.msra.mxu0 0.0
      %2829 = vmatprep.subr.mxu0 0.0
      %2830 = vmatpush1.msra.mxu0 0.0
      %2831 = vmatprep.subr.mxu0 0.0
      %2832 = vmatpush1.msra.mxu0 0.0
      %2833 = vmatprep.subr.mxu0 0.0
      %2834 = vmatpush1.msra.mxu0 0.0
      %2835 = vmatprep.subr.mxu0 0.0
      %2836 = vmatpush1.msra.mxu0 0.0
      %2837 = vmatprep.subr.mxu0 0.0
      %2838 = vmatpush1.msra.mxu0 0.0
      %2839 = vmatprep.subr.mxu0 0.0
      %2840 = vmatpush1.msra.mxu0 0.0
      %2841 = vmatprep.subr.mxu0 0.0
      %2842 = vmatpush1.msra.mxu0 0.0
      %2843 = vmatprep.subr.mxu0 0.0
      %2844 = vmatpush1.msra.mxu0 0.0
      %2845 = vmatprep.subr.mxu0 0.0
      %2846 = vmatpush1.msra.mxu0 0.0
      %2847 = vmatprep.subr.mxu0 0.0
      %2848 = vmatpush1.msra.mxu0 0.0
      %2849 = vmatprep.subr.mxu0 0.0
      %2850 = vmatpush1.msra.mxu0 0.0
      %2851 = vmatprep.subr.mxu0 0.0
      %2852 = vmatpush1.msra.mxu0 0.0
      %2853 = vmatprep.subr.mxu0 0.0
      %2854 = vmatpush1.msra.mxu0 0.0
      %2855 = vmatprep.subr.mxu0 0.0
      %2856 = vmatpush1.msra.mxu0 0.0
      %2857 = vmatprep.subr.mxu0 0.0
      %2858 = vmatpush1.msra.mxu0 0.0
      %2859 = vmatprep.subr.mxu0 0.0
      %2860 = vmatpush1.msra.mxu0 0.0
      %2861 = vmatprep.subr.mxu0 0.0
      %2862 = vmatpush1.msra.mxu0 0.0
      %2863 = vmatprep.subr.mxu0 0.0
      %2864 = vmatpush1.msra.mxu0 0.0
      %2865 = vmatprep.subr.mxu0 0.0
      %2866 = vmatpush1.msra.mxu0 0.0
      %2867 = vmatprep.subr.mxu0 0.0
      %2868 = vmatpush1.msra.mxu0 0.0
      %2869 = vmatprep.subr.mxu0 0.0
      %2870 = vmatpush1.msra.mxu0 0.0
      %2871 = vmatprep.mubr.f32.mxu0 0.0
      %2872 = vmatmul.mubr.f32.gmra.mrb[0].mxu0 %v2805
      %v2873 = vpop.f32.mrb[0].mxu0
      %v2874 = vadd.f32 %v2803, %v2873
      %v2875 = vpop.f32.mrb[0].mxu0
      %v2876 = vadd.f32 %v2803, %v2875
      %2877 = vdwg.mxu0
      %2878 = vmatprep.subr.mxu0 0.0
      %2879 = vmatpush1.msra.mxu0 %v2783
      %2880 = vmatprep.subr.mxu0 0.0
      %2881 = vmatpush1.msra.mxu0 %v2786
      %2882 = vmatprep.subr.mxu0 0.0
      %2883 = vmatpush1.msra.mxu0 %v2789
      %2884 = vmatprep.subr.mxu0 0.0
      %2885 = vmatpush1.msra.mxu0 %v2792
      %2886 = vmatprep.subr.mxu0 0.0
      %2887 = vmatpush1.msra.mxu0 0.0
      %2888 = vmatprep.subr.mxu0 0.0
      %2889 = vmatpush1.msra.mxu0 0.0
      %2890 = vmatprep.subr.mxu0 0.0
      %2891 = vmatpush1.msra.mxu0 0.0
      %2892 = vmatprep.subr.mxu0 0.0
      %2893 = vmatpush1.msra.mxu0 0.0
      %2894 = vmatprep.subr.mxu0 0.0
      %2895 = vmatpush1.msra.mxu0 0.0
      %2896 = vmatprep.subr.mxu0 0.0
      %2897 = vmatpush1.msra.mxu0 0.0
      %2898 = vmatprep.subr.mxu0 0.0
      %2899 = vmatpush1.msra.mxu0 0.0
      %2900 = vmatprep.subr.mxu0 0.0
      %2901 = vmatpush1.msra.mxu0 0.0
      %2902 = vmatprep.subr.mxu0 0.0
      %2903 = vmatpush1.msra.mxu0 0.0
      %2904 = vmatprep.subr.mxu0 0.0
      %2905 = vmatpush1.msra.mxu0 0.0
      %2906 = vmatprep.subr.mxu0 0.0
      %2907 = vmatpush1.msra.mxu0 0.0
      %2908 = vmatprep.subr.mxu0 0.0
      %2909 = vmatpush1.msra.mxu0 0.0
      %2910 = vmatprep.subr.mxu0 0.0
      %2911 = vmatpush1.msra.mxu0 0.0
      %2912 = vmatprep.subr.mxu0 0.0
      %2913 = vmatpush1.msra.mxu0 0.0
      %2914 = vmatprep.subr.mxu0 0.0
      %2915 = vmatpush1.msra.mxu0 0.0
      %2916 = vmatprep.subr.mxu0 0.0
      %2917 = vmatpush1.msra.mxu0 0.0
      %2918 = vmatprep.subr.mxu0 0.0
      %2919 = vmatpush1.msra.mxu0 0.0
      %2920 = vmatprep.subr.mxu0 0.0
      %2921 = vmatpush1.msra.mxu0 0.0
      %2922 = vmatprep.subr.mxu0 0.0
      %2923 = vmatpush1.msra.mxu0 0.0
      %2924 = vmatprep.subr.mxu0 0.0
      %2925 = vmatpush1.msra.mxu0 0.0
      %2926 = vmatprep.subr.mxu0 0.0
      %2927 = vmatpush1.msra.mxu0 0.0
      %2928 = vmatprep.subr.mxu0 0.0
      %2929 = vmatpush1.msra.mxu0 0.0
      %2930 = vmatprep.subr.mxu0 0.0
      %2931 = vmatpush1.msra.mxu0 0.0
      %2932 = vmatprep.subr.mxu0 0.0
      %2933 = vmatpush1.msra.mxu0 0.0
      %2934 = vmatprep.subr.mxu0 0.0
      %2935 = vmatpush1.msra.mxu0 0.0
      %2936 = vmatprep.subr.mxu0 0.0
      %2937 = vmatpush1.msra.mxu0 0.0
      %2938 = vmatprep.subr.mxu0 0.0
      %2939 = vmatpush1.msra.mxu0 0.0
      %2940 = vmatprep.subr.mxu0 0.0
      %2941 = vmatpush1.msra.mxu0 0.0
      %2942 = vmatprep.mubr.f32.mxu0 0.0
      %2943 = vmatmul.mubr.f32.gmra.mrb[0].mxu0 %v2805
      %v2944 = vpop.f32.mrb[0].mxu0
      %v2945 = vadd.f32 %v2803, %v2944
      %v2946 = vpop.f32.mrb[0].mxu0
      %2947 = vdwg.mxu0
      %v2951 = vcombine.low %v2874, %v2876
      %v2953 = vunpack.c.l.s4 1966171168
      %v2954 = vunpack.c.0.s8 %v2953
      %v2955 = vlaneseq
      %v2956 = vshrl.u32 %v2955, 7
      %v2957 = vsub.s32 %v2954, %v2956
      %v2958 = vrot.slane %v2951, %v2957
      %v2960 = vunpack.c.l.s4 1966171168
      %v2961 = vunpack.c.0.s8 %v2960
      %v2962 = vlaneseq
      %v2963 = vshrl.u32 %v2962, 7
      %v2964 = vsub.s32 %v2961, %v2963
      %v2965 = vrot.slane %v2945, %v2964
      %v2966 = vcombine.low %v2958, %v2965
      %v2968 = vunpack.c.l.s4 1966171168
      %v2969 = vunpack.c.0.s8 %v2968
      %v2970 = vlaneseq
      %v2971 = vshrl.u32 %v2970, 7
      %v2972 = vsub.s32 %v2969, %v2971
      %v2973 = vrot.slane %v2966, %v2972
      %v2975 = vlaneseq
      %vm2976 = vcmp.ge.s32.totalorder %v2975, 0
      %vm2977 = vcmp.lt.s32.totalorder %v2975, 288
      %vm2978 = vmand %vm2976, %vm2977
      %2979 = vst.msk [vmem:[%s340] sm:$0x7] %vm2978, %v2973
      %2980 = vst [vmem:[%s345] sm:$0xff] %v2787
      %2981 = vst [vmem:[%s345 + $0x8] sm:$0xff] %v2788
      %2982 = vst.msk [vmem:[%s345 + $0x10] sm:$0xff] %vm2558, %v2789
      %2983 = vst [vmem:[%s345 + $0x18] sm:$0xff] %v2790
      %2984 = vst [vmem:[%s345 + $0x20] sm:$0xff] %v2791
      %2985 = vst.msk [vmem:[%s345 + $0x28] sm:$0xff] %vm2558, %v2792
      %p2986 = scmp.lt.s32.totalorder %s23, 1
      %s2987 = scalar_select %p2986, %s23, 1
      %s2988 = smul.addr %s2987, 3
      %s2989 = scalar_lea.vmem %s8, %s2988
      %p2990 = scmp.lt.s32.totalorder %s23, 1
      %s2991 = scalar_select %p2990, %s23, 1
      %s2992 = smul.addr %s2991, 6
      %s2993 = smul.addr %s2992, 8
      %s2994 = scalar_lea.vmem %s9, %s2993
      // Predicated region
      $region53: #{bridged_inverse_net_v4_forward.1} parent=51 // pred_check
        %p2995 = pneg %p214
      $region54: #{bridged_inverse_net_v4_forward.1} parent=51 // pred_check_branch
        %2997 = sbr.rel (%p2995) target = $region56
      $region55: #{bridged_inverse_net_v4_forward.1} parent=51 // pred_region
        _
      $region56: #{bridged_inverse_net_v4_forward.1} parent=51 // pred_fallthru
        _
      // Predicated region
      $region57: #{bridged_inverse_net_v4_forward.1} parent=51 // pred_check
        %p2998 = pneg %p240
      $region58: #{bridged_inverse_net_v4_forward.1} parent=51 // pred_check_branch
        %3000 = sbr.rel (%p2998) target = $region60
      $region59: #{bridged_inverse_net_v4_forward.1} parent=51 // pred_region
        _
      $region60: #{bridged_inverse_net_v4_forward.1} parent=51 // pred_fallthru
        _
    $region52: #{bridged_inverse_net_v4_forward.1} parent=5 // pred_fallthru
      _
    %p3001 = scmp.le.s32.totalorder 2, %s18
    // Predicated region
    $region61: #{bridged_inverse_net_v4_forward.1} parent=5 // pred_check
      %p3002 = pneg %p3001
    $region62: #{bridged_inverse_net_v4_forward.1} parent=5 // pred_check_branch
      %3004 = sbr.rel (%p3002) target = $region64
    $region63: #{bridged_inverse_net_v4_forward.1} parent=5 // pred_region
      %s3005 = ssub.s32 %s18, 2
      // Predicated region
      $region65: #{bridged_inverse_net_v4_forward.1} parent=63 // pred_check
        %p3006 = pneg %p220
      $region66: #{bridged_inverse_net_v4_forward.1} parent=63 // pred_check_branch
        %3008 = sbr.rel (%p3006) target = $region68
      $region67: #{bridged_inverse_net_v4_forward.1} parent=63 // pred_region
        %p3009 = scmp.lt.s32.totalorder %s24, 1
        %s3010 = scalar_select %p3009, %s24, 1
        %s3011 = smul.addr %s3010, 3
        %s3012 = scalar_lea.vmem %s8, %s3011
      $region68: #{bridged_inverse_net_v4_forward.1} parent=63 // pred_fallthru
        _
      // Predicated region
      $region69: #{bridged_inverse_net_v4_forward.1} parent=63 // pred_check
        %p3013 = pneg %p246
      $region70: #{bridged_inverse_net_v4_forward.1} parent=63 // pred_check_branch
        %3015 = sbr.rel (%p3013) target = $region72
      $region71: #{bridged_inverse_net_v4_forward.1} parent=63 // pred_region
        %p3016 = scmp.lt.s32.totalorder %s24, 1
        %s3017 = scalar_select %p3016, %s24, 1
        %s3018 = smul.addr %s3017, 6
        %s3019 = smul.addr %s3018, 8
        %s3020 = scalar_lea.vmem %s9, %s3019
      $region72: #{bridged_inverse_net_v4_forward.1} parent=63 // pred_fallthru
        _
    $region64: #{bridged_inverse_net_v4_forward.1} parent=5 // pred_fallthru
      _
  $region6: #{bridged_inverse_net_v4_forward.1} parent=0 // loop_footer
    %s22 = sadd.s32 1, %s18
  $region7: #{bridged_inverse_net_v4_forward.1} parent=0 // loop_footer_branch
    %17 = sbr.rel target = $region3
  $region8: #{bridged_inverse_net_v4_forward.1} parent=0 // loop_exit
    _

</llo_original>
